<compile_context>
chip_gen: v7x
topology: tpu7x:2x2x1
jax: 0.10.0
libtpu: 0.0.40
codegen_flags: <defaults>
</compile_context>

<pallas_src>
import numpy as np
import jax
import jax.numpy as jnp
from jax.experimental import pallas as pl
from jax.experimental.pallas import tpu as pltpu

SELU_ALPHA = 1.6732632423543772848170429916717
SELU_SCALE = 1.0507009873554804934193349852946
SHIFT_SYMBOL = 1
REDUCE_SYMBOL = 2
NEG_BIG = -1e30

# schedule columns (per step, per example):
#   0 buffer-top slot, 1 stack[-1] slot, 2 stack[-2] slot,
#   3 left-child slot, 4 right-child slot, 5 destination slot (junk row if no reduce)
NCOL = 6


def _round_up(x, m):
    return ((x + m - 1) // m) * m


def _sigmoid(x):
    # numerically-stable logistic (== lax.logistic); keeps the transcendental
    # on the EUP tanh path and never produces inf for large |x|.
    return 0.5 * (jnp.tanh(0.5 * x) + 1.0)


def _log_softmax(z):
    m = jnp.max(z, axis=-1, keepdims=True)
    return z - (jnp.log(jnp.sum(jnp.exp(z - m), axis=-1, keepdims=True)) + m)


# --------------------------------------------------------------------------- #
# Host-side: simulate the thin-stack machine on the concrete transitions and
# emit a dense integer schedule + per-step reduce counts.
# --------------------------------------------------------------------------- #
def build_schedule(transitions, B, T):
    n_steps = transitions.shape[1]
    pad_slot = T - 1                      # pad_embed == enc[example 0, last token]
    # buffers[b] mirrors the reversed PyTorch buffer list; .pop() yields token 0 first
    buffers = [[b * T + t for t in range(T - 1, -1, -1)] for b in range(B)]
    stacks = [[pad_slot, pad_slot] for _ in range(B)]

    sched = np.zeros((n_steps, B, NCOL), dtype=np.int32)
    nred = np.zeros((n_steps,), dtype=np.int32)
    next_slot = B * T
    for i in range(n_steps):
        # tracker reads buffer/stack tops BEFORE this step's transitions
        for b in range(B):
            sched[i, b, 0] = buffers[b][-1]
            sched[i, b, 1] = stacks[b][-1]
            sched[i, b, 2] = stacks[b][-2]
        pending = [None] * B
        cnt = 0
        for b in range(B):
            tr = int(transitions[b, i])
            sched[i, b, 3] = pad_slot          # harmless gather source if no reduce
            sched[i, b, 4] = pad_slot
            sched[i, b, 5] = -1                # replaced with junk row below
            if tr == SHIFT_SYMBOL:
                stacks[b].append(buffers[b].pop())
            elif tr == REDUCE_SYMBOL:
                right = stacks[b].pop()
                left = stacks[b].pop()
                sched[i, b, 3] = left
                sched[i, b, 4] = right
                sched[i, b, 5] = next_slot
                pending[b] = next_slot
                next_slot += 1
                cnt += 1
            # PyTorch pads the stack to length >= 2 BEFORE pushing the reduce result
            while len(stacks[b]) < 2:
                stacks[b].append(pad_slot)
        for b in range(B):
            if pending[b] is not None:
                stacks[b].append(pending[b])
        nred[i] = cnt
    n_slots = next_slot                    # B*T buffer slots + all reduce slots
    total_reduces = n_slots - B * T
    junk_row = n_slots                     # reserved row for branch-free scatter
    sched[:, :, 5] = np.where(sched[:, :, 5] < 0, junk_row, sched[:, :, 5])
    return sched.reshape(-1), nred, total_reduces, n_slots


# --------------------------------------------------------------------------- #
# The fused kernel (grid=(1,), whole recurrence inside one kernel invocation)
# --------------------------------------------------------------------------- #
def _make_fused_kernel(B, T, H, TR, KT, KR, NPAD, BP, n_steps):
    BT = B * T

    def kernel(sched, nred, x_ref, w_in_ref, b_in_ref, w_out_ref, b_out_ref,
               w_trk_ref, b_trk_ref, w_red_ref, b_red_ref,
               out_ref,
               nodes, trk_h, trk_c, xg, rg):
        # ---------------- prologue: token encoder + persistent-state init ----
        # TODO(synk): alpha_dropout(training=True) is stochastic PyTorch RNG;
        #             eval mode (identity) is implemented, i.e. train_phase=False.
        y = jnp.dot(x_ref[...], w_in_ref[...],
                    preferred_element_type=jnp.float32) + b_in_ref[...]
        enc = SELU_SCALE * jnp.where(
            y > 0, y, SELU_ALPHA * (jnp.exp(jnp.minimum(y, 0.0)) - 1.0))
        nodes[0:BT, :] = jnp.concatenate([enc, enc], axis=1)   # leaf rows: h == c
        nodes[BT:NPAD, :] = jnp.zeros((NPAD - BT, 2 * H), jnp.float32)
        trk_h[...] = jnp.zeros_like(trk_h)
        trk_c[...] = jnp.zeros_like(trk_c)
        # zero once: K-padding columns / unused batch rows stay zero forever
        xg[...] = jnp.zeros_like(xg)
        rg[...] = jnp.zeros_like(rg)

        # ---------------- the shift/reduce recurrence ------------------------
        def step_body(step, carry):
            base = step * (B * NCOL)

            # -- tracker LSTMCell: gather into one operand, ONE fused dot --
            for b in range(B):
                off = base + b * NCOL
                xg[b:b + 1, 0:H] = nodes[pl.ds(sched[off + 0], 1), 0:H]
                xg[b:b + 1, H:2 * H] = nodes[pl.ds(sched[off + 1], 1), 0:H]
                xg[b:b + 1, 2 * H:3 * H] = nodes[pl.ds(sched[off + 2], 1), 0:H]
            xg[:, 3 * H:3 * H + TR] = trk_h[...]
            gates = jnp.dot(xg[...], w_trk_ref[...],
                            preferred_element_type=jnp.float32) + b_trk_ref[...]
            sg = _sigmoid(gates)              # one full-width pass
            tg = jnp.tanh(gates)              # one full-width pass
            c_trk = sg[:, TR:2 * TR] * trk_c[...] + sg[:, 0:TR] * tg[:, 2 * TR:3 * TR]
            h_trk = sg[:, 3 * TR:4 * TR] * jnp.tanh(c_trk)
            trk_h[...] = h_trk
            trk_c[...] = c_trk

            # -- TreeLSTM reduce (only for steps with at least one REDUCE) --
            @pl.when(nred[step] > 0)
            def _reduce():
                for b in range(B):
                    off = base + b * NCOL
                    rg[b:b + 1, 0:2 * H] = nodes[pl.ds(sched[off + 3], 1), :]      # [lh|lc]
                    rg[b:b + 1, 2 * H:4 * H] = nodes[pl.ds(sched[off + 4], 1), :]  # [rh|rc]
                rg[:, 4 * H:4 * H + TR] = h_trk
                # c-columns of rg hit zero weight rows; only lh/rh/trk contribute
                g = jnp.dot(rg[...], w_red_ref[...],
                            preferred_element_type=jnp.float32) + b_red_ref[...]
                sgr = _sigmoid(g)
                tgr = jnp.tanh(g)
                lc = rg[:, H:2 * H]
                rc = rg[:, 3 * H:4 * H]
                c_r = (tgr[:, 0:H] * sgr[:, H:2 * H]
                       + sgr[:, 2 * H:3 * H] * lc + sgr[:, 3 * H:4 * H] * rc)
                h_r = sgr[:, 4 * H:5 * H] * jnp.tanh(c_r)
                hc_r = jnp.concatenate([h_r, c_r], axis=1)
                # branch-free scatter: non-reducing rows go to the reserved junk row
                for b in range(B):
                    off = base + b * NCOL
                    nodes[pl.ds(sched[off + 5], 1), :] = hc_r[b:b + 1, :]
            return carry

        jax.lax.fori_loop(0, n_steps, step_body, 0, unroll=(n_steps <= 16))

        # ---------------- epilogue: ONE lane-dense output head ---------------
        # out0 rows 0..BT (token encodings) and out1 rows BT.. (reduce results,
        # already in emission order) come from the same projection + softmax.
        z = jnp.dot(nodes[:, 0:H], w_out_ref[...],
                    preferred_element_type=jnp.float32) + b_out_ref[...]
        out_ref[...] = _log_softmax(z)

    return kernel


# --------------------------------------------------------------------------- #
# Forward wrapper (mirrors ThinStackHybridLSTM.forward, eval mode)
# --------------------------------------------------------------------------- #
def thin_stack_forward(params, tokens, transitions_np, H, TR):
    tokens = jnp.asarray(tokens)
    transitions_np = np.asarray(transitions_np)
    B, T = tokens.shape
    n_steps = transitions_np.shape[1]
    E = params['embed'].shape[1]
    O = params['w_out'].shape[0]
    BT = B * T
    OPAD = _round_up(O, 128)
    BP = max(8, _round_up(B, 8))
    KT = _round_up(3 * H + TR, 128)       # fused tracker contraction dim (padded)
    KR = _round_up(4 * H + TR, 128)       # fused reduce contraction dim (padded)

    sched_np, nred_np, r_total, n_slots = build_schedule(transitions_np, B, T)
    NPAD = _round_up(n_slots + 1, 8)      # +1 reserved junk row for branch-free scatter

    # embedding gather stays in XLA (data-dependent HBM row gather)
    x = params['embed'][tokens].astype(jnp.float32).reshape(BT, E)

    # ---- pack / pad parameters once (all become VMEM-resident kernel inputs) ----
    w_in_t = params['w_in'].T.astype(jnp.float32)                        # (E, H)
    b_in = params['b_in'].reshape(1, H).astype(jnp.float32)
    w_out_pad = jnp.zeros((H, OPAD), jnp.float32).at[:, :O].set(params['w_out'].T)
    b_out_pad = jnp.full((1, OPAD), NEG_BIG, jnp.float32).at[:, :O].set(
        params['b_out'].reshape(1, O))
    # tracker fused weight: rows [x (3H) | h_prev (TR) | zero K-pad]  ->  (KT, 4TR)
    w_trk = jnp.zeros((KT, 4 * TR), jnp.float32)
    w_trk = (w_trk.at[0:3 * H, :].set(params['w_ih'].T)
                  .at[3 * H:3 * H + TR, :].set(params['w_hh'].T))
    b_trk = (params['b_ih'] + params['b_hh']).reshape(1, 4 * TR).astype(jnp.float32)
    # reduce fused weight: rows [lh | lc(0) | rh | rc(0) | trk | zero K-pad] -> (KR, 5H)
    w_red = jnp.zeros((KR, 5 * H), jnp.float32)
    w_red = (w_red.at[0:H, :].set(params['w_red_left'].T)
                  .at[2 * H:3 * H, :].set(params['w_red_right'].T)
                  .at[4 * H:4 * H + TR, :].set(params['w_red_track'].T))
    b_red = params['b_red_left'].reshape(1, 5 * H).astype(jnp.float32)

    sched = jnp.asarray(sched_np, dtype=jnp.int32)
    nred = jnp.asarray(nred_np, dtype=jnp.int32)

    kernel = _make_fused_kernel(B, T, H, TR, KT, KR, NPAD, BP, n_steps)

    def _c(i, s, n):                       # constant index map (resident blocks)
        return (0, 0)

    grid_spec = pltpu.PrefetchScalarGridSpec(
        num_scalar_prefetch=2,
        grid=(1,),
        in_specs=[
            pl.BlockSpec((BT, E), _c),
            pl.BlockSpec((E, H), _c),
            pl.BlockSpec((1, H), _c),
            pl.BlockSpec((H, OPAD), _c),
            pl.BlockSpec((1, OPAD), _c),
            pl.BlockSpec((KT, 4 * TR), _c),
            pl.BlockSpec((1, 4 * TR), _c),
            pl.BlockSpec((KR, 5 * H), _c),
            pl.BlockSpec((1, 5 * H), _c),
        ],
        out_specs=pl.BlockSpec((NPAD, OPAD), _c),
        scratch_shapes=[
            pltpu.VMEM((NPAD, 2 * H), jnp.float32),   # node slab [h | c]
            pltpu.VMEM((BP, TR), jnp.float32),        # tracker h
            pltpu.VMEM((BP, TR), jnp.float32),        # tracker c
            pltpu.VMEM((BP, KT), jnp.float32),        # fused tracker dot operand
            pltpu.VMEM((BP, KR), jnp.float32),        # fused reduce dot operand
        ],
    )

    out_pad = pl.pallas_call(
        kernel,
        out_shape=jax.ShapeDtypeStruct((NPAD, OPAD), jnp.float32),
        grid_spec=grid_spec,
        compiler_params=pltpu.CompilerParams(dimension_semantics=("arbitrary",)),
    )(sched, nred, x, w_in_t, b_in, w_out_pad, b_out_pad, w_trk, b_trk, w_red, b_red)

    # host-side unpadding / repacking into the module's return structure
    logp = out_pad[:, :O]
    outputs0 = logp[:BT].reshape(B, T, O).transpose(1, 0, 2)             # (T, B, O)
    outputs1 = []
    row = BT
    for cnt in nred_np.tolist():
        if cnt > 0:
            outputs1.append(logp[row:row + cnt])
            row += cnt
    return outputs0, outputs1


# --------------------------------------------------------------------------- #
# Pure-numpy reference (direct port of the PyTorch control flow) for checking
# --------------------------------------------------------------------------- #
def _np_sigmoid(x):
    return 1.0 / (1.0 + np.exp(-x))


def _np_log_softmax(z):
    m = z.max(-1, keepdims=True)
    return z - (np.log(np.exp(z - m).sum(-1, keepdims=True)) + m)


def _reference_forward(p, tokens, transitions, H, TR):
    B, T = tokens.shape
    emb = p['embed'][tokens]
    y = emb @ p['w_in'].T + p['b_in']
    enc = SELU_SCALE * np.where(y > 0, y,
                                SELU_ALPHA * (np.exp(np.minimum(y, 0.0)) - 1.0))
    out0 = _np_log_softmax(enc @ p['w_out'].T + p['b_out']).transpose(1, 0, 2)

    buffers = [[(enc[b, t].copy(), enc[b, t].copy()) for t in range(T)][::-1]
               for b in range(B)]
    pad = buffers[0][0]
    stacks = [[pad, pad] for _ in range(B)]
    trk_h = np.zeros((B, TR), np.float32)
    trk_c = np.zeros((B, TR), np.float32)
    outputs1 = []
    for i in range(transitions.shape[1]):
        xx = np.concatenate([np.stack([buffers[b][-1][0] for b in range(B)]),
                             np.stack([stacks[b][-1][0] for b in range(B)]),
                             np.stack([stacks[b][-2][0] for b in range(B)])], axis=1)
        gates = xx @ p['w_ih'].T + p['b_ih'] + trk_h @ p['w_hh'].T + p['b_hh']
        ii, ff, gg, oo = np.split(gates, 4, axis=1)
        trk_c = _np_sigmoid(ff) * trk_c + _np_sigmoid(ii) * np.tanh(gg)
        trk_h = _np_sigmoid(oo) * np.tanh(trk_c)
        lefts, rights, tracks = [], [], []
        for b in range(B):
            tr = int(transitions[b, i])
            if tr == SHIFT_SYMBOL:
                stacks[b].append(buffers[b].pop())
            elif tr == REDUCE_SYMBOL:
                rights.append(stacks[b].pop())
                lefts.append(stacks[b].pop())
                tracks.append(trk_h[b])
            while len(stacks[b]) < 2:
                stacks[b].append(pad)
        if rights:
            lh = np.stack([v[0] for v in lefts])
            lc = np.stack([v[1] for v in lefts])
            rh = np.stack([v[0] for v in rights])
            rc = np.stack([v[1] for v in rights])
            th = np.stack(tracks)
            g = (lh @ p['w_red_left'].T + p['b_red_left']
                 + rh @ p['w_red_right'].T + th @ p['w_red_track'].T)
            a, i_, f1, f2, o_ = np.split(g, 5, axis=1)
            c = np.tanh(a) * _np_sigmoid(i_) + _np_sigmoid(f1) * lc + _np_sigmoid(f2) * rc
            h = _np_sigmoid(o_) * np.tanh(c)
            k = 0
            for b in range(B):
                if int(transitions[b, i]) == REDUCE_SYMBOL:
                    stacks[b].append((h[k], c[k]))
                    k += 1
            outputs1.append(_np_log_softmax(h @ p['w_out'].T + p['b_out']))
    return out0, outputs1


# --------------------------------------------------------------------------- #
# Driver
# --------------------------------------------------------------------------- #
if __name__ == "__main__":
    B, T, E, H, TR, O, V = 2, 8, 16, 32, 16, 5, 20

    key = jax.random.PRNGKey(0)
    ks = jax.random.split(key, 14)
    params = {
        'embed':       jax.random.normal(ks[0], (V, E), jnp.float32) * 0.5,
        'w_in':        jax.random.normal(ks[1], (H, E), jnp.float32) * 0.2,
        'b_in':        jax.random.normal(ks[2], (H,), jnp.float32) * 0.1,
        'w_out':       jax.random.normal(ks[3], (O, H), jnp.float32) * 0.2,
        'b_out':       jax.random.normal(ks[4], (O,), jnp.float32) * 0.1,
        'w_red_left':  jax.random.normal(ks[5], (5 * H, H), jnp.float32) * 0.1,
        'b_red_left':  jax.random.normal(ks[6], (5 * H,), jnp.float32) * 0.1,
        'w_red_right': jax.random.normal(ks[7], (5 * H, H), jnp.float32) * 0.1,
        'w_red_track': jax.random.normal(ks[8], (5 * H, TR), jnp.float32) * 0.1,
        'w_ih':        jax.random.normal(ks[9], (4 * TR, 3 * H), jnp.float32) * 0.1,
        'w_hh':        jax.random.normal(ks[10], (4 * TR, TR), jnp.float32) * 0.1,
        'b_ih':        jax.random.normal(ks[11], (4 * TR,), jnp.float32) * 0.1,
        'b_hh':        jax.random.normal(ks[12], (4 * TR,), jnp.float32) * 0.1,
    }

    tokens = jax.random.randint(ks[13], (B, T), 0, V, dtype=jnp.int32)
    # shift/reduce programs (1 = SHIFT, 2 = REDUCE), shape (B, n_steps)
    transitions = np.array([[1, 1, 2, 1, 2, 1, 2],
                            [1, 1, 1, 2, 2, 1, 2]], dtype=np.int32)

    outputs0, outputs1 = thin_stack_forward(params, tokens, transitions, H=H, TR=TR)
    jax.block_until_ready(outputs0)
    for o in outputs1:
        jax.block_until_ready(o)

    # correctness check against a direct numpy port of the PyTorch loop
    params_np = {k: np.asarray(v, dtype=np.float32) for k, v in params.items()}
    ref0, ref1 = _reference_forward(params_np, np.asarray(tokens), transitions, H, TR)
    np.testing.assert_allclose(np.asarray(outputs0), ref0, rtol=2e-4, atol=2e-4)
    assert len(outputs1) == len(ref1)
    for a, b in zip(outputs1, ref1):
        np.testing.assert_allclose(np.asarray(a), b, rtol=2e-4, atol=2e-4)

    print("KERNEL_OK")
</pallas_src>

<mosaic_0001>
module attributes {stable_mosaic.version = 11 : i64} {
  func.func @kernel(%arg0: i32, %arg1: memref<84xi32, #tpu.memory_space<smem>>, %arg2: memref<7xi32, #tpu.memory_space<smem>>, %arg3: memref<16x16xf32, #tpu.memory_space<vmem>>, %arg4: memref<16x32xf32, #tpu.memory_space<vmem>>, %arg5: memref<1x32xf32, #tpu.memory_space<vmem>>, %arg6: memref<32x128xf32, #tpu.memory_space<vmem>>, %arg7: memref<1x128xf32, #tpu.memory_space<vmem>>, %arg8: memref<128x64xf32, #tpu.memory_space<vmem>>, %arg9: memref<1x64xf32, #tpu.memory_space<vmem>>, %arg10: memref<256x160xf32, #tpu.memory_space<vmem>>, %arg11: memref<1x160xf32, #tpu.memory_space<vmem>>, %arg12: memref<24x128xf32, #tpu.memory_space<vmem>>, %arg13: memref<24x64xf32, #tpu.memory_space<vmem>>, %arg14: memref<8x16xf32, #tpu.memory_space<vmem>>, %arg15: memref<8x16xf32, #tpu.memory_space<vmem>>, %arg16: memref<8x128xf32, #tpu.memory_space<vmem>>, %arg17: memref<8x256xf32, #tpu.memory_space<vmem>>) attributes {dimension_semantics = [#tpu.dimension_semantics<arbitrary>], iteration_bounds = array<i64: 1>, scalar_prefetch = 2 : i64, scratch_operands = 5 : i64, tpu.core_type = #tpu.core_type<tc>, window_params = [{pipeline_mode = #tpu.pipeline_mode<synchronous>, transform_indices = @transform_0, window_bounds = array<i64: 16, 16>}, {pipeline_mode = #tpu.pipeline_mode<synchronous>, transform_indices = @transform_1, window_bounds = array<i64: 16, 32>}, {pipeline_mode = #tpu.pipeline_mode<synchronous>, transform_indices = @transform_2, window_bounds = array<i64: 1, 32>}, {pipeline_mode = #tpu.pipeline_mode<synchronous>, transform_indices = @transform_3, window_bounds = array<i64: 32, 128>}, {pipeline_mode = #tpu.pipeline_mode<synchronous>, transform_indices = @transform_4, window_bounds = array<i64: 1, 128>}, {pipeline_mode = #tpu.pipeline_mode<synchronous>, transform_indices = @transform_5, window_bounds = array<i64: 128, 64>}, {pipeline_mode = #tpu.pipeline_mode<synchronous>, transform_indices = @transform_6, window_bounds = array<i64: 1, 64>}, {pipeline_mode = #tpu.pipeline_mode<synchronous>, transform_indices = @transform_7, window_bounds = array<i64: 256, 160>}, {pipeline_mode = #tpu.pipeline_mode<synchronous>, transform_indices = @transform_8, window_bounds = array<i64: 1, 160>}, {pipeline_mode = #tpu.pipeline_mode<synchronous>, transform_indices = @transform_9, window_bounds = array<i64: 24, 128>}]} {
    %c0 = arith.constant 0 : index
    %c0_0 = arith.constant 0 : index
    %0 = vector.load %arg3[%c0, %c0_0] : memref<16x16xf32, #tpu.memory_space<vmem>>, vector<16x16xf32>
    %c0_1 = arith.constant 0 : index
    %c0_2 = arith.constant 0 : index
    %1 = vector.load %arg4[%c0_1, %c0_2] : memref<16x32xf32, #tpu.memory_space<vmem>>, vector<16x32xf32>
    %cst = arith.constant dense<0.000000e+00> : vector<16x32xf32>
    %2 = tpu.matmul %0, %1, %cst {dimension_numbers = #tpu.dot_dimension_numbers<[1], [0], [0], [1], [0, 0, 1, 1], [], []>} : vector<16x16xf32>, vector<16x32xf32>, vector<16x32xf32> -> vector<16x32xf32>
    %c0_3 = arith.constant 0 : index
    %c0_4 = arith.constant 0 : index
    %3 = vector.load %arg5[%c0_3, %c0_4] : memref<1x32xf32, #tpu.memory_space<vmem>>, vector<1x32xf32>
    %4 = vector.broadcast %3 : vector<1x32xf32> to vector<16x32xf32>
    %5 = arith.addf %2, %4 : vector<16x32xf32>
    %cst_5 = arith.constant 0.000000e+00 : f32
    %6 = vector.broadcast %cst_5 : f32 to vector<16x32xf32>
    %7 = arith.cmpf ogt, %5, %6 : vector<16x32xf32>
    %cst_6 = arith.constant 0.000000e+00 : f32
    %8 = vector.broadcast %cst_6 : f32 to vector<16x32xf32>
    %9 = arith.minimumf %5, %8 : vector<16x32xf32>
    %10 = math.exp %9 : vector<16x32xf32>
    %cst_7 = arith.constant 1.000000e+00 : f32
    %11 = vector.broadcast %cst_7 : f32 to vector<16x32xf32>
    %12 = arith.subf %10, %11 : vector<16x32xf32>
    %cst_8 = arith.constant 1.67326319 : f32
    %13 = vector.broadcast %cst_8 : f32 to vector<16x32xf32>
    %14 = arith.mulf %13, %12 : vector<16x32xf32>
    %15 = arith.select %7, %5, %14 : vector<16x32xi1>, vector<16x32xf32>
    %cst_9 = arith.constant 1.05070102 : f32
    %16 = vector.broadcast %cst_9 : f32 to vector<16x32xf32>
    %17 = arith.mulf %16, %15 : vector<16x32xf32>
    %18 = tpu.concatenate %17, %17 in 1 : vector<16x32xf32>, vector<16x32xf32> -> vector<16x64xf32>
    %c0_10 = arith.constant 0 : index
    %c0_11 = arith.constant 0 : index
    %19 = vector.load %arg13[%c0_10, %c0_11] : memref<24x64xf32, #tpu.memory_space<vmem>>, vector<16x64xf32>
    tpu.vector_store %arg13[%c0_10, %c0_11], %18 {strides = array<i32>} : memref<24x64xf32, #tpu.memory_space<vmem>>, vector<16x64xf32>,
    %cst_12 = arith.constant 0.000000e+00 : f32
    %20 = vector.broadcast %cst_12 : f32 to vector<8x64xf32>
    %c16 = arith.constant 16 : index
    %c0_13 = arith.constant 0 : index
    %21 = vector.load %arg13[%c16, %c0_13] : memref<24x64xf32, #tpu.memory_space<vmem>>, vector<8x64xf32>
    tpu.vector_store %arg13[%c16, %c0_13], %20 {strides = array<i32>} : memref<24x64xf32, #tpu.memory_space<vmem>>, vector<8x64xf32>,
    %cst_14 = arith.constant 0.000000e+00 : f32
    %22 = vector.broadcast %cst_14 : f32 to vector<8x16xf32>
    %c0_15 = arith.constant 0 : index
    %c0_16 = arith.constant 0 : index
    %23 = vector.load %arg14[%c0_15, %c0_16] : memref<8x16xf32, #tpu.memory_space<vmem>>, vector<8x16xf32>
    tpu.vector_store %arg14[%c0_15, %c0_16], %22 {strides = array<i32>} : memref<8x16xf32, #tpu.memory_space<vmem>>, vector<8x16xf32>,
    %cst_17 = arith.constant 0.000000e+00 : f32
    %24 = vector.broadcast %cst_17 : f32 to vector<8x16xf32>
    %c0_18 = arith.constant 0 : index
    %c0_19 = arith.constant 0 : index
    %25 = vector.load %arg15[%c0_18, %c0_19] : memref<8x16xf32, #tpu.memory_space<vmem>>, vector<8x16xf32>
    tpu.vector_store %arg15[%c0_18, %c0_19], %24 {strides = array<i32>} : memref<8x16xf32, #tpu.memory_space<vmem>>, vector<8x16xf32>,
    %cst_20 = arith.constant 0.000000e+00 : f32
    %26 = vector.broadcast %cst_20 : f32 to vector<8x128xf32>
    %c0_21 = arith.constant 0 : index
    %c0_22 = arith.constant 0 : index
    %27 = vector.load %arg16[%c0_21, %c0_22] : memref<8x128xf32, #tpu.memory_space<vmem>>, vector<8x128xf32>
    tpu.vector_store %arg16[%c0_21, %c0_22], %26 {strides = array<i32>} : memref<8x128xf32, #tpu.memory_space<vmem>>, vector<8x128xf32>,
    %cst_23 = arith.constant 0.000000e+00 : f32
    %28 = vector.broadcast %cst_23 : f32 to vector<8x256xf32>
    %c0_24 = arith.constant 0 : index
    %c0_25 = arith.constant 0 : index
    %29 = vector.load %arg17[%c0_24, %c0_25] : memref<8x256xf32, #tpu.memory_space<vmem>>, vector<8x256xf32>
    tpu.vector_store %arg17[%c0_24, %c0_25], %28 {strides = array<i32>} : memref<8x256xf32, #tpu.memory_space<vmem>>, vector<8x256xf32>,
    %c0_i32 = arith.constant 0 : i32
    %c12_i32 = arith.constant 12 : i32
    %30 = arith.muli %c0_i32, %c12_i32 : i32
    %c0_i32_26 = arith.constant 0 : i32
    %31 = arith.addi %30, %c0_i32_26 : i32
    %c0_i32_27 = arith.constant 0 : i32
    %32 = arith.addi %31, %c0_i32_27 : i32
    %33 = arith.index_cast %32 : i32 to index
    %34 = memref.load %arg1[%33] : memref<84xi32, #tpu.memory_space<smem>>
    %35 = arith.index_cast %34 : i32 to index
    %c0_28 = arith.constant 0 : index
    %36 = vector.load %arg13[%35, %c0_28] : memref<24x64xf32, #tpu.memory_space<vmem>>, vector<1x32xf32>
    %c0_29 = arith.constant 0 : index
    %c0_30 = arith.constant 0 : index
    %37 = vector.load %arg16[%c0_29, %c0_30] : memref<8x128xf32, #tpu.memory_space<vmem>>, vector<1x32xf32>
    tpu.vector_store %arg16[%c0_29, %c0_30], %36 {strides = array<i32>} : memref<8x128xf32, #tpu.memory_space<vmem>>, vector<1x32xf32>,
    %c1_i32 = arith.constant 1 : i32
    %38 = arith.addi %31, %c1_i32 : i32
    %39 = arith.index_cast %38 : i32 to index
    %40 = memref.load %arg1[%39] : memref<84xi32, #tpu.memory_space<smem>>
    %41 = arith.index_cast %40 : i32 to index
    %c0_31 = arith.constant 0 : index
    %42 = vector.load %arg13[%41, %c0_31] : memref<24x64xf32, #tpu.memory_space<vmem>>, vector<1x32xf32>
    %c0_32 = arith.constant 0 : index
    %c32 = arith.constant 32 : index
    %43 = vector.load %arg16[%c0_32, %c32] : memref<8x128xf32, #tpu.memory_space<vmem>>, vector<1x32xf32>
    tpu.vector_store %arg16[%c0_32, %c32], %42 {strides = array<i32>} : memref<8x128xf32, #tpu.memory_space<vmem>>, vector<1x32xf32>,
    %c2_i32 = arith.constant 2 : i32
    %44 = arith.addi %31, %c2_i32 : i32
    %45 = arith.index_cast %44 : i32 to index
    %46 = memref.load %arg1[%45] : memref<84xi32, #tpu.memory_space<smem>>
    %47 = arith.index_cast %46 : i32 to index
    %c0_33 = arith.constant 0 : index
    %48 = vector.load %arg13[%47, %c0_33] : memref<24x64xf32, #tpu.memory_space<vmem>>, vector<1x32xf32>
    %c0_34 = arith.constant 0 : index
    %c64 = arith.constant 64 : index
    %49 = vector.load %arg16[%c0_34, %c64] : memref<8x128xf32, #tpu.memory_space<vmem>>, vector<1x32xf32>
    tpu.vector_store %arg16[%c0_34, %c64], %48 {strides = array<i32>} : memref<8x128xf32, #tpu.memory_space<vmem>>, vector<1x32xf32>,
    %c6_i32 = arith.constant 6 : i32
    %50 = arith.addi %30, %c6_i32 : i32
    %c0_i32_35 = arith.constant 0 : i32
    %51 = arith.addi %50, %c0_i32_35 : i32
    %52 = arith.index_cast %51 : i32 to index
    %53 = memref.load %arg1[%52] : memref<84xi32, #tpu.memory_space<smem>>
    %54 = arith.index_cast %53 : i32 to index
    %c0_36 = arith.constant 0 : index
    %55 = vector.load %arg13[%54, %c0_36] : memref<24x64xf32, #tpu.memory_space<vmem>>, vector<1x32xf32>
    %c1 = arith.constant 1 : index
    %c0_37 = arith.constant 0 : index
    %56 = vector.load %arg16[%c1, %c0_37] : memref<8x128xf32, #tpu.memory_space<vmem>>, vector<1x32xf32>
    tpu.vector_store %arg16[%c1, %c0_37], %55 {strides = array<i32>} : memref<8x128xf32, #tpu.memory_space<vmem>>, vector<1x32xf32>,
    %c1_i32_38 = arith.constant 1 : i32
    %57 = arith.addi %50, %c1_i32_38 : i32
    %58 = arith.index_cast %57 : i32 to index
    %59 = memref.load %arg1[%58] : memref<84xi32, #tpu.memory_space<smem>>
    %60 = arith.index_cast %59 : i32 to index
    %c0_39 = arith.constant 0 : index
    %61 = vector.load %arg13[%60, %c0_39] : memref<24x64xf32, #tpu.memory_space<vmem>>, vector<1x32xf32>
    %c1_40 = arith.constant 1 : index
    %c32_41 = arith.constant 32 : index
    %62 = vector.load %arg16[%c1_40, %c32_41] : memref<8x128xf32, #tpu.memory_space<vmem>>, vector<1x32xf32>
    tpu.vector_store %arg16[%c1_40, %c32_41], %61 {strides = array<i32>} : memref<8x128xf32, #tpu.memory_space<vmem>>, vector<1x32xf32>,
    %c2_i32_42 = arith.constant 2 : i32
    %63 = arith.addi %50, %c2_i32_42 : i32
    %64 = arith.index_cast %63 : i32 to index
    %65 = memref.load %arg1[%64] : memref<84xi32, #tpu.memory_space<smem>>
    %66 = arith.index_cast %65 : i32 to index
    %c0_43 = arith.constant 0 : index
    %67 = vector.load %arg13[%66, %c0_43] : memref<24x64xf32, #tpu.memory_space<vmem>>, vector<1x32xf32>
    %c1_44 = arith.constant 1 : index
    %c64_45 = arith.constant 64 : index
    %68 = vector.load %arg16[%c1_44, %c64_45] : memref<8x128xf32, #tpu.memory_space<vmem>>, vector<1x32xf32>
    tpu.vector_store %arg16[%c1_44, %c64_45], %67 {strides = array<i32>} : memref<8x128xf32, #tpu.memory_space<vmem>>, vector<1x32xf32>,
    %c0_46 = arith.constant 0 : index
    %c0_47 = arith.constant 0 : index
    %69 = vector.load %arg14[%c0_46, %c0_47] : memref<8x16xf32, #tpu.memory_space<vmem>>, vector<8x16xf32>
    %c0_48 = arith.constant 0 : index
    %c96 = arith.constant 96 : index
    %70 = vector.load %arg16[%c0_48, %c96] : memref<8x128xf32, #tpu.memory_space<vmem>>, vector<8x16xf32>
    tpu.vector_store %arg16[%c0_48, %c96], %69 {strides = array<i32>} : memref<8x128xf32, #tpu.memory_space<vmem>>, vector<8x16xf32>,
    %c0_49 = arith.constant 0 : index
    %c0_50 = arith.constant 0 : index
    %71 = vector.load %arg16[%c0_49, %c0_50] : memref<8x128xf32, #tpu.memory_space<vmem>>, vector<8x128xf32>
    %c0_51 = arith.constant 0 : index
    %c0_52 = arith.constant 0 : index
    %72 = vector.load %arg8[%c0_51, %c0_52] : memref<128x64xf32, #tpu.memory_space<vmem>>, vector<128x64xf32>
    %cst_53 = arith.constant dense<0.000000e+00> : vector<8x64xf32>
    %73 = tpu.matmul %71, %72, %cst_53 {dimension_numbers = #tpu.dot_dimension_numbers<[1], [0], [0], [1], [0, 0, 1, 1], [], []>} : vector<8x128xf32>, vector<128x64xf32>, vector<8x64xf32> -> vector<8x64xf32>
    %c0_54 = arith.constant 0 : index
    %c0_55 = arith.constant 0 : index
    %74 = vector.load %arg9[%c0_54, %c0_55] : memref<1x64xf32, #tpu.memory_space<vmem>>, vector<1x64xf32>
    %75 = vector.broadcast %74 : vector<1x64xf32> to vector<8x64xf32>
    %76 = arith.addf %73, %75 : vector<8x64xf32>
    %cst_56 = arith.constant 5.000000e-01 : f32
    %77 = vector.broadcast %cst_56 : f32 to vector<8x64xf32>
    %78 = arith.mulf %77, %76 : vector<8x64xf32>
    %79 = math.tanh %78 : vector<8x64xf32>
    %cst_57 = arith.constant 1.000000e+00 : f32
    %80 = vector.broadcast %cst_57 : f32 to vector<8x64xf32>
    %81 = arith.addf %79, %80 : vector<8x64xf32>
    %cst_58 = arith.constant 5.000000e-01 : f32
    %82 = vector.broadcast %cst_58 : f32 to vector<8x64xf32>
    %83 = arith.mulf %82, %81 : vector<8x64xf32>
    %84 = math.tanh %76 : vector<8x64xf32>
    %85 = vector.extract_strided_slice %83 {offsets = [0, 16], sizes = [8, 16], strides = [1, 1]} : vector<8x64xf32> to vector<8x16xf32>
    %c0_59 = arith.constant 0 : index
    %c0_60 = arith.constant 0 : index
    %86 = vector.load %arg15[%c0_59, %c0_60] : memref<8x16xf32, #tpu.memory_space<vmem>>, vector<8x16xf32>
    %87 = arith.mulf %85, %86 : vector<8x16xf32>
    %88 = vector.extract_strided_slice %83 {offsets = [0, 0], sizes = [8, 16], strides = [1, 1]} : vector<8x64xf32> to vector<8x16xf32>
    %89 = vector.extract_strided_slice %84 {offsets = [0, 32], sizes = [8, 16], strides = [1, 1]} : vector<8x64xf32> to vector<8x16xf32>
    %90 = arith.mulf %88, %89 : vector<8x16xf32>
    %91 = arith.addf %87, %90 : vector<8x16xf32>
    %92 = vector.extract_strided_slice %83 {offsets = [0, 48], sizes = [8, 16], strides = [1, 1]} : vector<8x64xf32> to vector<8x16xf32>
    %93 = math.tanh %91 : vector<8x16xf32>
    %94 = arith.mulf %92, %93 : vector<8x16xf32>
    %c0_61 = arith.constant 0 : index
    %c0_62 = arith.constant 0 : index
    %95 = vector.load %arg14[%c0_61, %c0_62] : memref<8x16xf32, #tpu.memory_space<vmem>>, vector<8x16xf32>
    tpu.vector_store %arg14[%c0_61, %c0_62], %94 {strides = array<i32>} : memref<8x16xf32, #tpu.memory_space<vmem>>, vector<8x16xf32>,
    %c0_63 = arith.constant 0 : index
    %c0_64 = arith.constant 0 : index
    %96 = vector.load %arg15[%c0_63, %c0_64] : memref<8x16xf32, #tpu.memory_space<vmem>>, vector<8x16xf32>
    tpu.vector_store %arg15[%c0_63, %c0_64], %91 {strides = array<i32>} : memref<8x16xf32, #tpu.memory_space<vmem>>, vector<8x16xf32>,
    %97 = arith.index_cast %c0_i32 : i32 to index
    %98 = memref.load %arg2[%97] : memref<7xi32, #tpu.memory_space<smem>>
    %c0_i32_65 = arith.constant 0 : i32
    %99 = arith.cmpi sgt, %98, %c0_i32_65 : i32
    %100 = arith.extui %99 : i1 to i32
    %c0_i32_66 = arith.constant 0 : i32
    %101 = arith.cmpi ne, %100, %c0_i32_66 : i32
    scf.if %101 {
      %c0_i32_375 = arith.constant 0 : i32
      %552 = arith.addi %30, %c0_i32_375 : i32
      %c3_i32_376 = arith.constant 3 : i32
      %553 = arith.addi %552, %c3_i32_376 : i32
      %554 = arith.index_cast %553 : i32 to index
      %555 = memref.load %arg1[%554] : memref<84xi32, #tpu.memory_space<smem>>
      %556 = arith.index_cast %555 : i32 to index
      %c0_377 = arith.constant 0 : index
      %557 = vector.load %arg13[%556, %c0_377] : memref<24x64xf32, #tpu.memory_space<vmem>>, vector<1x64xf32>
      %c0_378 = arith.constant 0 : index
      %c0_379 = arith.constant 0 : index
      %558 = vector.load %arg17[%c0_378, %c0_379] : memref<8x256xf32, #tpu.memory_space<vmem>>, vector<1x64xf32>
      tpu.vector_store %arg17[%c0_378, %c0_379], %557 {strides = array<i32>} : memref<8x256xf32, #tpu.memory_space<vmem>>, vector<1x64xf32>,
      %c4_i32_380 = arith.constant 4 : i32
      %559 = arith.addi %552, %c4_i32_380 : i32
      %560 = arith.index_cast %559 : i32 to index
      %561 = memref.load %arg1[%560] : memref<84xi32, #tpu.memory_space<smem>>
      %562 = arith.index_cast %561 : i32 to index
      %c0_381 = arith.constant 0 : index
      %563 = vector.load %arg13[%562, %c0_381] : memref<24x64xf32, #tpu.memory_space<vmem>>, vector<1x64xf32>
      %c0_382 = arith.constant 0 : index
      %c64_383 = arith.constant 64 : index
      %564 = vector.load %arg17[%c0_382, %c64_383] : memref<8x256xf32, #tpu.memory_space<vmem>>, vector<1x64xf32>
      tpu.vector_store %arg17[%c0_382, %c64_383], %563 {strides = array<i32>} : memref<8x256xf32, #tpu.memory_space<vmem>>, vector<1x64xf32>,
      %c6_i32_384 = arith.constant 6 : i32
      %565 = arith.addi %30, %c6_i32_384 : i32
      %c3_i32_385 = arith.constant 3 : i32
      %566 = arith.addi %565, %c3_i32_385 : i32
      %567 = arith.index_cast %566 : i32 to index
      %568 = memref.load %arg1[%567] : memref<84xi32, #tpu.memory_space<smem>>
      %569 = arith.index_cast %568 : i32 to index
      %c0_386 = arith.constant 0 : index
      %570 = vector.load %arg13[%569, %c0_386] : memref<24x64xf32, #tpu.memory_space<vmem>>, vector<1x64xf32>
      %c1_387 = arith.constant 1 : index
      %c0_388 = arith.constant 0 : index
      %571 = vector.load %arg17[%c1_387, %c0_388] : memref<8x256xf32, #tpu.memory_space<vmem>>, vector<1x64xf32>
      tpu.vector_store %arg17[%c1_387, %c0_388], %570 {strides = array<i32>} : memref<8x256xf32, #tpu.memory_space<vmem>>, vector<1x64xf32>,
      %c4_i32_389 = arith.constant 4 : i32
      %572 = arith.addi %565, %c4_i32_389 : i32
      %573 = arith.index_cast %572 : i32 to index
      %574 = memref.load %arg1[%573] : memref<84xi32, #tpu.memory_space<smem>>
      %575 = arith.index_cast %574 : i32 to index
      %c0_390 = arith.constant 0 : index
      %576 = vector.load %arg13[%575, %c0_390] : memref<24x64xf32, #tpu.memory_space<vmem>>, vector<1x64xf32>
      %c1_391 = arith.constant 1 : index
      %c64_392 = arith.constant 64 : index
      %577 = vector.load %arg17[%c1_391, %c64_392] : memref<8x256xf32, #tpu.memory_space<vmem>>, vector<1x64xf32>
      tpu.vector_store %arg17[%c1_391, %c64_392], %576 {strides = array<i32>} : memref<8x256xf32, #tpu.memory_space<vmem>>, vector<1x64xf32>,
      %c0_393 = arith.constant 0 : index
      %c128 = arith.constant 128 : index
      %578 = vector.load %arg17[%c0_393, %c128] : memref<8x256xf32, #tpu.memory_space<vmem>>, vector<8x16xf32>
      tpu.vector_store %arg17[%c0_393, %c128], %94 {strides = array<i32>} : memref<8x256xf32, #tpu.memory_space<vmem>>, vector<8x16xf32>,
      %c0_394 = arith.constant 0 : index
      %c0_395 = arith.constant 0 : index
      %579 = vector.load %arg17[%c0_394, %c0_395] : memref<8x256xf32, #tpu.memory_space<vmem>>, vector<8x256xf32>
      %c0_396 = arith.constant 0 : index
      %c0_397 = arith.constant 0 : index
      %580 = vector.load %arg10[%c0_396, %c0_397] : memref<256x160xf32, #tpu.memory_space<vmem>>, vector<256x160xf32>
      %cst_398 = arith.constant dense<0.000000e+00> : vector<8x160xf32>
      %581 = tpu.matmul %579, %580, %cst_398 {dimension_numbers = #tpu.dot_dimension_numbers<[1], [0], [0], [1], [0, 0, 1, 1], [], []>} : vector<8x256xf32>, vector<256x160xf32>, vector<8x160xf32> -> vector<8x160xf32>
      %c0_399 = arith.constant 0 : index
      %c0_400 = arith.constant 0 : index
      %582 = vector.load %arg11[%c0_399, %c0_400] : memref<1x160xf32, #tpu.memory_space<vmem>>, vector<1x160xf32>
      %583 = vector.broadcast %582 : vector<1x160xf32> to vector<8x160xf32>
      %584 = arith.addf %581, %583 : vector<8x160xf32>
      %cst_401 = arith.constant 5.000000e-01 : f32
      %585 = vector.broadcast %cst_401 : f32 to vector<8x160xf32>
      %586 = arith.mulf %585, %584 : vector<8x160xf32>
      %587 = math.tanh %586 : vector<8x160xf32>
      %cst_402 = arith.constant 1.000000e+00 : f32
      %588 = vector.broadcast %cst_402 : f32 to vector<8x160xf32>
      %589 = arith.addf %587, %588 : vector<8x160xf32>
      %cst_403 = arith.constant 5.000000e-01 : f32
      %590 = vector.broadcast %cst_403 : f32 to vector<8x160xf32>
      %591 = arith.mulf %590, %589 : vector<8x160xf32>
      %592 = math.tanh %584 : vector<8x160xf32>
      %c0_404 = arith.constant 0 : index
      %c32_405 = arith.constant 32 : index
      %593 = vector.load %arg17[%c0_404, %c32_405] : memref<8x256xf32, #tpu.memory_space<vmem>>, vector<8x32xf32>
      %c0_406 = arith.constant 0 : index
      %c96_407 = arith.constant 96 : index
      %594 = vector.load %arg17[%c0_406, %c96_407] : memref<8x256xf32, #tpu.memory_space<vmem>>, vector<8x32xf32>
      %595 = vector.extract_strided_slice %592 {offsets = [0, 0], sizes = [8, 32], strides = [1, 1]} : vector<8x160xf32> to vector<8x32xf32>
      %596 = vector.extract_strided_slice %591 {offsets = [0, 32], sizes = [8, 32], strides = [1, 1]} : vector<8x160xf32> to vector<8x32xf32>
      %597 = arith.mulf %595, %596 : vector<8x32xf32>
      %598 = vector.extract_strided_slice %591 {offsets = [0, 64], sizes = [8, 32], strides = [1, 1]} : vector<8x160xf32> to vector<8x32xf32>
      %599 = arith.mulf %598, %593 : vector<8x32xf32>
      %600 = arith.addf %597, %599 : vector<8x32xf32>
      %601 = vector.extract_strided_slice %591 {offsets = [0, 96], sizes = [8, 32], strides = [1, 1]} : vector<8x160xf32> to vector<8x32xf32>
      %602 = arith.mulf %601, %594 : vector<8x32xf32>
      %603 = arith.addf %600, %602 : vector<8x32xf32>
      %604 = vector.extract_strided_slice %591 {offsets = [0, 128], sizes = [8, 32], strides = [1, 1]} : vector<8x160xf32> to vector<8x32xf32>
      %605 = math.tanh %603 : vector<8x32xf32>
      %606 = arith.mulf %604, %605 : vector<8x32xf32>
      %607 = tpu.concatenate %606, %603 in 1 : vector<8x32xf32>, vector<8x32xf32> -> vector<8x64xf32>
      %c0_i32_408 = arith.constant 0 : i32
      %608 = arith.addi %30, %c0_i32_408 : i32
      %609 = vector.extract_strided_slice %607 {offsets = [0, 0], sizes = [1, 64], strides = [1, 1]} : vector<8x64xf32> to vector<1x64xf32>
      %c5_i32_409 = arith.constant 5 : i32
      %610 = arith.addi %608, %c5_i32_409 : i32
      %611 = arith.index_cast %610 : i32 to index
      %612 = memref.load %arg1[%611] : memref<84xi32, #tpu.memory_space<smem>>
      %613 = arith.index_cast %612 : i32 to index
      %c0_410 = arith.constant 0 : index
      %614 = vector.load %arg13[%613, %c0_410] : memref<24x64xf32, #tpu.memory_space<vmem>>, vector<1x64xf32>
      tpu.vector_store %arg13[%613, %c0_410], %609 {strides = array<i32>} : memref<24x64xf32, #tpu.memory_space<vmem>>, vector<1x64xf32>,
      %c6_i32_411 = arith.constant 6 : i32
      %615 = arith.addi %30, %c6_i32_411 : i32
      %616 = vector.extract_strided_slice %607 {offsets = [1, 0], sizes = [1, 64], strides = [1, 1]} : vector<8x64xf32> to vector<1x64xf32>
      %c5_i32_412 = arith.constant 5 : i32
      %617 = arith.addi %615, %c5_i32_412 : i32
      %618 = arith.index_cast %617 : i32 to index
      %619 = memref.load %arg1[%618] : memref<84xi32, #tpu.memory_space<smem>>
      %620 = arith.index_cast %619 : i32 to index
      %c0_413 = arith.constant 0 : index
      %621 = vector.load %arg13[%620, %c0_413] : memref<24x64xf32, #tpu.memory_space<vmem>>, vector<1x64xf32>
      tpu.vector_store %arg13[%620, %c0_413], %616 {strides = array<i32>} : memref<24x64xf32, #tpu.memory_space<vmem>>, vector<1x64xf32>,
    } else {
    }
    %c1_i32_67 = arith.constant 1 : i32
    %c12_i32_68 = arith.constant 12 : i32
    %102 = arith.muli %c1_i32_67, %c12_i32_68 : i32
    %c0_i32_69 = arith.constant 0 : i32
    %103 = arith.addi %102, %c0_i32_69 : i32
    %c0_i32_70 = arith.constant 0 : i32
    %104 = arith.addi %103, %c0_i32_70 : i32
    %105 = arith.index_cast %104 : i32 to index
    %106 = memref.load %arg1[%105] : memref<84xi32, #tpu.memory_space<smem>>
    %107 = arith.index_cast %106 : i32 to index
    %c0_71 = arith.constant 0 : index
    %108 = vector.load %arg13[%107, %c0_71] : memref<24x64xf32, #tpu.memory_space<vmem>>, vector<1x32xf32>
    %c0_72 = arith.constant 0 : index
    %c0_73 = arith.constant 0 : index
    %109 = vector.load %arg16[%c0_72, %c0_73] : memref<8x128xf32, #tpu.memory_space<vmem>>, vector<1x32xf32>
    tpu.vector_store %arg16[%c0_72, %c0_73], %108 {strides = array<i32>} : memref<8x128xf32, #tpu.memory_space<vmem>>, vector<1x32xf32>,
    %c1_i32_74 = arith.constant 1 : i32
    %110 = arith.addi %103, %c1_i32_74 : i32
    %111 = arith.index_cast %110 : i32 to index
    %112 = memref.load %arg1[%111] : memref<84xi32, #tpu.memory_space<smem>>
    %113 = arith.index_cast %112 : i32 to index
    %c0_75 = arith.constant 0 : index
    %114 = vector.load %arg13[%113, %c0_75] : memref<24x64xf32, #tpu.memory_space<vmem>>, vector<1x32xf32>
    %c0_76 = arith.constant 0 : index
    %c32_77 = arith.constant 32 : index
    %115 = vector.load %arg16[%c0_76, %c32_77] : memref<8x128xf32, #tpu.memory_space<vmem>>, vector<1x32xf32>
    tpu.vector_store %arg16[%c0_76, %c32_77], %114 {strides = array<i32>} : memref<8x128xf32, #tpu.memory_space<vmem>>, vector<1x32xf32>,
    %c2_i32_78 = arith.constant 2 : i32
    %116 = arith.addi %103, %c2_i32_78 : i32
    %117 = arith.index_cast %116 : i32 to index
    %118 = memref.load %arg1[%117] : memref<84xi32, #tpu.memory_space<smem>>
    %119 = arith.index_cast %118 : i32 to index
    %c0_79 = arith.constant 0 : index
    %120 = vector.load %arg13[%119, %c0_79] : memref<24x64xf32, #tpu.memory_space<vmem>>, vector<1x32xf32>
    %c0_80 = arith.constant 0 : index
    %c64_81 = arith.constant 64 : index
    %121 = vector.load %arg16[%c0_80, %c64_81] : memref<8x128xf32, #tpu.memory_space<vmem>>, vector<1x32xf32>
    tpu.vector_store %arg16[%c0_80, %c64_81], %120 {strides = array<i32>} : memref<8x128xf32, #tpu.memory_space<vmem>>, vector<1x32xf32>,
    %c6_i32_82 = arith.constant 6 : i32
    %122 = arith.addi %102, %c6_i32_82 : i32
    %c0_i32_83 = arith.constant 0 : i32
    %123 = arith.addi %122, %c0_i32_83 : i32
    %124 = arith.index_cast %123 : i32 to index
    %125 = memref.load %arg1[%124] : memref<84xi32, #tpu.memory_space<smem>>
    %126 = arith.index_cast %125 : i32 to index
    %c0_84 = arith.constant 0 : index
    %127 = vector.load %arg13[%126, %c0_84] : memref<24x64xf32, #tpu.memory_space<vmem>>, vector<1x32xf32>
    %c1_85 = arith.constant 1 : index
    %c0_86 = arith.constant 0 : index
    %128 = vector.load %arg16[%c1_85, %c0_86] : memref<8x128xf32, #tpu.memory_space<vmem>>, vector<1x32xf32>
    tpu.vector_store %arg16[%c1_85, %c0_86], %127 {strides = array<i32>} : memref<8x128xf32, #tpu.memory_space<vmem>>, vector<1x32xf32>,
    %c1_i32_87 = arith.constant 1 : i32
    %129 = arith.addi %122, %c1_i32_87 : i32
    %130 = arith.index_cast %129 : i32 to index
    %131 = memref.load %arg1[%130] : memref<84xi32, #tpu.memory_space<smem>>
    %132 = arith.index_cast %131 : i32 to index
    %c0_88 = arith.constant 0 : index
    %133 = vector.load %arg13[%132, %c0_88] : memref<24x64xf32, #tpu.memory_space<vmem>>, vector<1x32xf32>
    %c1_89 = arith.constant 1 : index
    %c32_90 = arith.constant 32 : index
    %134 = vector.load %arg16[%c1_89, %c32_90] : memref<8x128xf32, #tpu.memory_space<vmem>>, vector<1x32xf32>
    tpu.vector_store %arg16[%c1_89, %c32_90], %133 {strides = array<i32>} : memref<8x128xf32, #tpu.memory_space<vmem>>, vector<1x32xf32>,
    %c2_i32_91 = arith.constant 2 : i32
    %135 = arith.addi %122, %c2_i32_91 : i32
    %136 = arith.index_cast %135 : i32 to index
    %137 = memref.load %arg1[%136] : memref<84xi32, #tpu.memory_space<smem>>
    %138 = arith.index_cast %137 : i32 to index
    %c0_92 = arith.constant 0 : index
    %139 = vector.load %arg13[%138, %c0_92] : memref<24x64xf32, #tpu.memory_space<vmem>>, vector<1x32xf32>
    %c1_93 = arith.constant 1 : index
    %c64_94 = arith.constant 64 : index
    %140 = vector.load %arg16[%c1_93, %c64_94] : memref<8x128xf32, #tpu.memory_space<vmem>>, vector<1x32xf32>
    tpu.vector_store %arg16[%c1_93, %c64_94], %139 {strides = array<i32>} : memref<8x128xf32, #tpu.memory_space<vmem>>, vector<1x32xf32>,
    %c0_95 = arith.constant 0 : index
    %c0_96 = arith.constant 0 : index
    %141 = vector.load %arg14[%c0_95, %c0_96] : memref<8x16xf32, #tpu.memory_space<vmem>>, vector<8x16xf32>
    %c0_97 = arith.constant 0 : index
    %c96_98 = arith.constant 96 : index
    %142 = vector.load %arg16[%c0_97, %c96_98] : memref<8x128xf32, #tpu.memory_space<vmem>>, vector<8x16xf32>
    tpu.vector_store %arg16[%c0_97, %c96_98], %141 {strides = array<i32>} : memref<8x128xf32, #tpu.memory_space<vmem>>, vector<8x16xf32>,
    %c0_99 = arith.constant 0 : index
    %c0_100 = arith.constant 0 : index
    %143 = vector.load %arg16[%c0_99, %c0_100] : memref<8x128xf32, #tpu.memory_space<vmem>>, vector<8x128xf32>
    %c0_101 = arith.constant 0 : index
    %c0_102 = arith.constant 0 : index
    %144 = vector.load %arg8[%c0_101, %c0_102] : memref<128x64xf32, #tpu.memory_space<vmem>>, vector<128x64xf32>
    %cst_103 = arith.constant dense<0.000000e+00> : vector<8x64xf32>
    %145 = tpu.matmul %143, %144, %cst_103 {dimension_numbers = #tpu.dot_dimension_numbers<[1], [0], [0], [1], [0, 0, 1, 1], [], []>} : vector<8x128xf32>, vector<128x64xf32>, vector<8x64xf32> -> vector<8x64xf32>
    %c0_104 = arith.constant 0 : index
    %c0_105 = arith.constant 0 : index
    %146 = vector.load %arg9[%c0_104, %c0_105] : memref<1x64xf32, #tpu.memory_space<vmem>>, vector<1x64xf32>
    %147 = vector.broadcast %146 : vector<1x64xf32> to vector<8x64xf32>
    %148 = arith.addf %145, %147 : vector<8x64xf32>
    %cst_106 = arith.constant 5.000000e-01 : f32
    %149 = vector.broadcast %cst_106 : f32 to vector<8x64xf32>
    %150 = arith.mulf %149, %148 : vector<8x64xf32>
    %151 = math.tanh %150 : vector<8x64xf32>
    %cst_107 = arith.constant 1.000000e+00 : f32
    %152 = vector.broadcast %cst_107 : f32 to vector<8x64xf32>
    %153 = arith.addf %151, %152 : vector<8x64xf32>
    %cst_108 = arith.constant 5.000000e-01 : f32
    %154 = vector.broadcast %cst_108 : f32 to vector<8x64xf32>
    %155 = arith.mulf %154, %153 : vector<8x64xf32>
    %156 = math.tanh %148 : vector<8x64xf32>
    %157 = vector.extract_strided_slice %155 {offsets = [0, 16], sizes = [8, 16], strides = [1, 1]} : vector<8x64xf32> to vector<8x16xf32>
    %c0_109 = arith.constant 0 : index
    %c0_110 = arith.constant 0 : index
    %158 = vector.load %arg15[%c0_109, %c0_110] : memref<8x16xf32, #tpu.memory_space<vmem>>, vector<8x16xf32>
    %159 = arith.mulf %157, %158 : vector<8x16xf32>
    %160 = vector.extract_strided_slice %155 {offsets = [0, 0], sizes = [8, 16], strides = [1, 1]} : vector<8x64xf32> to vector<8x16xf32>
    %161 = vector.extract_strided_slice %156 {offsets = [0, 32], sizes = [8, 16], strides = [1, 1]} : vector<8x64xf32> to vector<8x16xf32>
    %162 = arith.mulf %160, %161 : vector<8x16xf32>
    %163 = arith.addf %159, %162 : vector<8x16xf32>
    %164 = vector.extract_strided_slice %155 {offsets = [0, 48], sizes = [8, 16], strides = [1, 1]} : vector<8x64xf32> to vector<8x16xf32>
    %165 = math.tanh %163 : vector<8x16xf32>
    %166 = arith.mulf %164, %165 : vector<8x16xf32>
    %c0_111 = arith.constant 0 : index
    %c0_112 = arith.constant 0 : index
    %167 = vector.load %arg14[%c0_111, %c0_112] : memref<8x16xf32, #tpu.memory_space<vmem>>, vector<8x16xf32>
    tpu.vector_store %arg14[%c0_111, %c0_112], %166 {strides = array<i32>} : memref<8x16xf32, #tpu.memory_space<vmem>>, vector<8x16xf32>,
    %c0_113 = arith.constant 0 : index
    %c0_114 = arith.constant 0 : index
    %168 = vector.load %arg15[%c0_113, %c0_114] : memref<8x16xf32, #tpu.memory_space<vmem>>, vector<8x16xf32>
    tpu.vector_store %arg15[%c0_113, %c0_114], %163 {strides = array<i32>} : memref<8x16xf32, #tpu.memory_space<vmem>>, vector<8x16xf32>,
    %169 = arith.index_cast %c1_i32_67 : i32 to index
    %170 = memref.load %arg2[%169] : memref<7xi32, #tpu.memory_space<smem>>
    %c0_i32_115 = arith.constant 0 : i32
    %171 = arith.cmpi sgt, %170, %c0_i32_115 : i32
    %172 = arith.extui %171 : i1 to i32
    %c0_i32_116 = arith.constant 0 : i32
    %173 = arith.cmpi ne, %172, %c0_i32_116 : i32
    scf.if %173 {
      %c0_i32_375 = arith.constant 0 : i32
      %552 = arith.addi %102, %c0_i32_375 : i32
      %c3_i32_376 = arith.constant 3 : i32
      %553 = arith.addi %552, %c3_i32_376 : i32
      %554 = arith.index_cast %553 : i32 to index
      %555 = memref.load %arg1[%554] : memref<84xi32, #tpu.memory_space<smem>>
      %556 = arith.index_cast %555 : i32 to index
      %c0_377 = arith.constant 0 : index
      %557 = vector.load %arg13[%556, %c0_377] : memref<24x64xf32, #tpu.memory_space<vmem>>, vector<1x64xf32>
      %c0_378 = arith.constant 0 : index
      %c0_379 = arith.constant 0 : index
      %558 = vector.load %arg17[%c0_378, %c0_379] : memref<8x256xf32, #tpu.memory_space<vmem>>, vector<1x64xf32>
      tpu.vector_store %arg17[%c0_378, %c0_379], %557 {strides = array<i32>} : memref<8x256xf32, #tpu.memory_space<vmem>>, vector<1x64xf32>,
      %c4_i32_380 = arith.constant 4 : i32
      %559 = arith.addi %552, %c4_i32_380 : i32
      %560 = arith.index_cast %559 : i32 to index
      %561 = memref.load %arg1[%560] : memref<84xi32, #tpu.memory_space<smem>>
      %562 = arith.index_cast %561 : i32 to index
      %c0_381 = arith.constant 0 : index
      %563 = vector.load %arg13[%562, %c0_381] : memref<24x64xf32, #tpu.memory_space<vmem>>, vector<1x64xf32>
      %c0_382 = arith.constant 0 : index
      %c64_383 = arith.constant 64 : index
      %564 = vector.load %arg17[%c0_382, %c64_383] : memref<8x256xf32, #tpu.memory_space<vmem>>, vector<1x64xf32>
      tpu.vector_store %arg17[%c0_382, %c64_383], %563 {strides = array<i32>} : memref<8x256xf32, #tpu.memory_space<vmem>>, vector<1x64xf32>,
      %c6_i32_384 = arith.constant 6 : i32
      %565 = arith.addi %102, %c6_i32_384 : i32
      %c3_i32_385 = arith.constant 3 : i32
      %566 = arith.addi %565, %c3_i32_385 : i32
      %567 = arith.index_cast %566 : i32 to index
      %568 = memref.load %arg1[%567] : memref<84xi32, #tpu.memory_space<smem>>
      %569 = arith.index_cast %568 : i32 to index
      %c0_386 = arith.constant 0 : index
      %570 = vector.load %arg13[%569, %c0_386] : memref<24x64xf32, #tpu.memory_space<vmem>>, vector<1x64xf32>
      %c1_387 = arith.constant 1 : index
      %c0_388 = arith.constant 0 : index
      %571 = vector.load %arg17[%c1_387, %c0_388] : memref<8x256xf32, #tpu.memory_space<vmem>>, vector<1x64xf32>
      tpu.vector_store %arg17[%c1_387, %c0_388], %570 {strides = array<i32>} : memref<8x256xf32, #tpu.memory_space<vmem>>, vector<1x64xf32>,
      %c4_i32_389 = arith.constant 4 : i32
      %572 = arith.addi %565, %c4_i32_389 : i32
      %573 = arith.index_cast %572 : i32 to index
      %574 = memref.load %arg1[%573] : memref<84xi32, #tpu.memory_space<smem>>
      %575 = arith.index_cast %574 : i32 to index
      %c0_390 = arith.constant 0 : index
      %576 = vector.load %arg13[%575, %c0_390] : memref<24x64xf32, #tpu.memory_space<vmem>>, vector<1x64xf32>
      %c1_391 = arith.constant 1 : index
      %c64_392 = arith.constant 64 : index
      %577 = vector.load %arg17[%c1_391, %c64_392] : memref<8x256xf32, #tpu.memory_space<vmem>>, vector<1x64xf32>
      tpu.vector_store %arg17[%c1_391, %c64_392], %576 {strides = array<i32>} : memref<8x256xf32, #tpu.memory_space<vmem>>, vector<1x64xf32>,
      %c0_393 = arith.constant 0 : index
      %c128 = arith.constant 128 : index
      %578 = vector.load %arg17[%c0_393, %c128] : memref<8x256xf32, #tpu.memory_space<vmem>>, vector<8x16xf32>
      tpu.vector_store %arg17[%c0_393, %c128], %166 {strides = array<i32>} : memref<8x256xf32, #tpu.memory_space<vmem>>, vector<8x16xf32>,
      %c0_394 = arith.constant 0 : index
      %c0_395 = arith.constant 0 : index
      %579 = vector.load %arg17[%c0_394, %c0_395] : memref<8x256xf32, #tpu.memory_space<vmem>>, vector<8x256xf32>
      %c0_396 = arith.constant 0 : index
      %c0_397 = arith.constant 0 : index
      %580 = vector.load %arg10[%c0_396, %c0_397] : memref<256x160xf32, #tpu.memory_space<vmem>>, vector<256x160xf32>
      %cst_398 = arith.constant dense<0.000000e+00> : vector<8x160xf32>
      %581 = tpu.matmul %579, %580, %cst_398 {dimension_numbers = #tpu.dot_dimension_numbers<[1], [0], [0], [1], [0, 0, 1, 1], [], []>} : vector<8x256xf32>, vector<256x160xf32>, vector<8x160xf32> -> vector<8x160xf32>
      %c0_399 = arith.constant 0 : index
      %c0_400 = arith.constant 0 : index
      %582 = vector.load %arg11[%c0_399, %c0_400] : memref<1x160xf32, #tpu.memory_space<vmem>>, vector<1x160xf32>
      %583 = vector.broadcast %582 : vector<1x160xf32> to vector<8x160xf32>
      %584 = arith.addf %581, %583 : vector<8x160xf32>
      %cst_401 = arith.constant 5.000000e-01 : f32
      %585 = vector.broadcast %cst_401 : f32 to vector<8x160xf32>
      %586 = arith.mulf %585, %584 : vector<8x160xf32>
      %587 = math.tanh %586 : vector<8x160xf32>
      %cst_402 = arith.constant 1.000000e+00 : f32
      %588 = vector.broadcast %cst_402 : f32 to vector<8x160xf32>
      %589 = arith.addf %587, %588 : vector<8x160xf32>
      %cst_403 = arith.constant 5.000000e-01 : f32
      %590 = vector.broadcast %cst_403 : f32 to vector<8x160xf32>
      %591 = arith.mulf %590, %589 : vector<8x160xf32>
      %592 = math.tanh %584 : vector<8x160xf32>
      %c0_404 = arith.constant 0 : index
      %c32_405 = arith.constant 32 : index
      %593 = vector.load %arg17[%c0_404, %c32_405] : memref<8x256xf32, #tpu.memory_space<vmem>>, vector<8x32xf32>
      %c0_406 = arith.constant 0 : index
      %c96_407 = arith.constant 96 : index
      %594 = vector.load %arg17[%c0_406, %c96_407] : memref<8x256xf32, #tpu.memory_space<vmem>>, vector<8x32xf32>
      %595 = vector.extract_strided_slice %592 {offsets = [0, 0], sizes = [8, 32], strides = [1, 1]} : vector<8x160xf32> to vector<8x32xf32>
      %596 = vector.extract_strided_slice %591 {offsets = [0, 32], sizes = [8, 32], strides = [1, 1]} : vector<8x160xf32> to vector<8x32xf32>
      %597 = arith.mulf %595, %596 : vector<8x32xf32>
      %598 = vector.extract_strided_slice %591 {offsets = [0, 64], sizes = [8, 32], strides = [1, 1]} : vector<8x160xf32> to vector<8x32xf32>
      %599 = arith.mulf %598, %593 : vector<8x32xf32>
      %600 = arith.addf %597, %599 : vector<8x32xf32>
      %601 = vector.extract_strided_slice %591 {offsets = [0, 96], sizes = [8, 32], strides = [1, 1]} : vector<8x160xf32> to vector<8x32xf32>
      %602 = arith.mulf %601, %594 : vector<8x32xf32>
      %603 = arith.addf %600, %602 : vector<8x32xf32>
      %604 = vector.extract_strided_slice %591 {offsets = [0, 128], sizes = [8, 32], strides = [1, 1]} : vector<8x160xf32> to vector<8x32xf32>
      %605 = math.tanh %603 : vector<8x32xf32>
      %606 = arith.mulf %604, %605 : vector<8x32xf32>
      %607 = tpu.concatenate %606, %603 in 1 : vector<8x32xf32>, vector<8x32xf32> -> vector<8x64xf32>
      %c0_i32_408 = arith.constant 0 : i32
      %608 = arith.addi %102, %c0_i32_408 : i32
      %609 = vector.extract_strided_slice %607 {offsets = [0, 0], sizes = [1, 64], strides = [1, 1]} : vector<8x64xf32> to vector<1x64xf32>
      %c5_i32_409 = arith.constant 5 : i32
      %610 = arith.addi %608, %c5_i32_409 : i32
      %611 = arith.index_cast %610 : i32 to index
      %612 = memref.load %arg1[%611] : memref<84xi32, #tpu.memory_space<smem>>
      %613 = arith.index_cast %612 : i32 to index
      %c0_410 = arith.constant 0 : index
      %614 = vector.load %arg13[%613, %c0_410] : memref<24x64xf32, #tpu.memory_space<vmem>>, vector<1x64xf32>
      tpu.vector_store %arg13[%613, %c0_410], %609 {strides = array<i32>} : memref<24x64xf32, #tpu.memory_space<vmem>>, vector<1x64xf32>,
      %c6_i32_411 = arith.constant 6 : i32
      %615 = arith.addi %102, %c6_i32_411 : i32
      %616 = vector.extract_strided_slice %607 {offsets = [1, 0], sizes = [1, 64], strides = [1, 1]} : vector<8x64xf32> to vector<1x64xf32>
      %c5_i32_412 = arith.constant 5 : i32
      %617 = arith.addi %615, %c5_i32_412 : i32
      %618 = arith.index_cast %617 : i32 to index
      %619 = memref.load %arg1[%618] : memref<84xi32, #tpu.memory_space<smem>>
      %620 = arith.index_cast %619 : i32 to index
      %c0_413 = arith.constant 0 : index
      %621 = vector.load %arg13[%620, %c0_413] : memref<24x64xf32, #tpu.memory_space<vmem>>, vector<1x64xf32>
      tpu.vector_store %arg13[%620, %c0_413], %616 {strides = array<i32>} : memref<24x64xf32, #tpu.memory_space<vmem>>, vector<1x64xf32>,
    } else {
    }
    %c2_i32_117 = arith.constant 2 : i32
    %c12_i32_118 = arith.constant 12 : i32
    %174 = arith.muli %c2_i32_117, %c12_i32_118 : i32
    %c0_i32_119 = arith.constant 0 : i32
    %175 = arith.addi %174, %c0_i32_119 : i32
    %c0_i32_120 = arith.constant 0 : i32
    %176 = arith.addi %175, %c0_i32_120 : i32
    %177 = arith.index_cast %176 : i32 to index
    %178 = memref.load %arg1[%177] : memref<84xi32, #tpu.memory_space<smem>>
    %179 = arith.index_cast %178 : i32 to index
    %c0_121 = arith.constant 0 : index
    %180 = vector.load %arg13[%179, %c0_121] : memref<24x64xf32, #tpu.memory_space<vmem>>, vector<1x32xf32>
    %c0_122 = arith.constant 0 : index
    %c0_123 = arith.constant 0 : index
    %181 = vector.load %arg16[%c0_122, %c0_123] : memref<8x128xf32, #tpu.memory_space<vmem>>, vector<1x32xf32>
    tpu.vector_store %arg16[%c0_122, %c0_123], %180 {strides = array<i32>} : memref<8x128xf32, #tpu.memory_space<vmem>>, vector<1x32xf32>,
    %c1_i32_124 = arith.constant 1 : i32
    %182 = arith.addi %175, %c1_i32_124 : i32
    %183 = arith.index_cast %182 : i32 to index
    %184 = memref.load %arg1[%183] : memref<84xi32, #tpu.memory_space<smem>>
    %185 = arith.index_cast %184 : i32 to index
    %c0_125 = arith.constant 0 : index
    %186 = vector.load %arg13[%185, %c0_125] : memref<24x64xf32, #tpu.memory_space<vmem>>, vector<1x32xf32>
    %c0_126 = arith.constant 0 : index
    %c32_127 = arith.constant 32 : index
    %187 = vector.load %arg16[%c0_126, %c32_127] : memref<8x128xf32, #tpu.memory_space<vmem>>, vector<1x32xf32>
    tpu.vector_store %arg16[%c0_126, %c32_127], %186 {strides = array<i32>} : memref<8x128xf32, #tpu.memory_space<vmem>>, vector<1x32xf32>,
    %c2_i32_128 = arith.constant 2 : i32
    %188 = arith.addi %175, %c2_i32_128 : i32
    %189 = arith.index_cast %188 : i32 to index
    %190 = memref.load %arg1[%189] : memref<84xi32, #tpu.memory_space<smem>>
    %191 = arith.index_cast %190 : i32 to index
    %c0_129 = arith.constant 0 : index
    %192 = vector.load %arg13[%191, %c0_129] : memref<24x64xf32, #tpu.memory_space<vmem>>, vector<1x32xf32>
    %c0_130 = arith.constant 0 : index
    %c64_131 = arith.constant 64 : index
    %193 = vector.load %arg16[%c0_130, %c64_131] : memref<8x128xf32, #tpu.memory_space<vmem>>, vector<1x32xf32>
    tpu.vector_store %arg16[%c0_130, %c64_131], %192 {strides = array<i32>} : memref<8x128xf32, #tpu.memory_space<vmem>>, vector<1x32xf32>,
    %c6_i32_132 = arith.constant 6 : i32
    %194 = arith.addi %174, %c6_i32_132 : i32
    %c0_i32_133 = arith.constant 0 : i32
    %195 = arith.addi %194, %c0_i32_133 : i32
    %196 = arith.index_cast %195 : i32 to index
    %197 = memref.load %arg1[%196] : memref<84xi32, #tpu.memory_space<smem>>
    %198 = arith.index_cast %197 : i32 to index
    %c0_134 = arith.constant 0 : index
    %199 = vector.load %arg13[%198, %c0_134] : memref<24x64xf32, #tpu.memory_space<vmem>>, vector<1x32xf32>
    %c1_135 = arith.constant 1 : index
    %c0_136 = arith.constant 0 : index
    %200 = vector.load %arg16[%c1_135, %c0_136] : memref<8x128xf32, #tpu.memory_space<vmem>>, vector<1x32xf32>
    tpu.vector_store %arg16[%c1_135, %c0_136], %199 {strides = array<i32>} : memref<8x128xf32, #tpu.memory_space<vmem>>, vector<1x32xf32>,
    %c1_i32_137 = arith.constant 1 : i32
    %201 = arith.addi %194, %c1_i32_137 : i32
    %202 = arith.index_cast %201 : i32 to index
    %203 = memref.load %arg1[%202] : memref<84xi32, #tpu.memory_space<smem>>
    %204 = arith.index_cast %203 : i32 to index
    %c0_138 = arith.constant 0 : index
    %205 = vector.load %arg13[%204, %c0_138] : memref<24x64xf32, #tpu.memory_space<vmem>>, vector<1x32xf32>
    %c1_139 = arith.constant 1 : index
    %c32_140 = arith.constant 32 : index
    %206 = vector.load %arg16[%c1_139, %c32_140] : memref<8x128xf32, #tpu.memory_space<vmem>>, vector<1x32xf32>
    tpu.vector_store %arg16[%c1_139, %c32_140], %205 {strides = array<i32>} : memref<8x128xf32, #tpu.memory_space<vmem>>, vector<1x32xf32>,
    %c2_i32_141 = arith.constant 2 : i32
    %207 = arith.addi %194, %c2_i32_141 : i32
    %208 = arith.index_cast %207 : i32 to index
    %209 = memref.load %arg1[%208] : memref<84xi32, #tpu.memory_space<smem>>
    %210 = arith.index_cast %209 : i32 to index
    %c0_142 = arith.constant 0 : index
    %211 = vector.load %arg13[%210, %c0_142] : memref<24x64xf32, #tpu.memory_space<vmem>>, vector<1x32xf32>
    %c1_143 = arith.constant 1 : index
    %c64_144 = arith.constant 64 : index
    %212 = vector.load %arg16[%c1_143, %c64_144] : memref<8x128xf32, #tpu.memory_space<vmem>>, vector<1x32xf32>
    tpu.vector_store %arg16[%c1_143, %c64_144], %211 {strides = array<i32>} : memref<8x128xf32, #tpu.memory_space<vmem>>, vector<1x32xf32>,
    %c0_145 = arith.constant 0 : index
    %c0_146 = arith.constant 0 : index
    %213 = vector.load %arg14[%c0_145, %c0_146] : memref<8x16xf32, #tpu.memory_space<vmem>>, vector<8x16xf32>
    %c0_147 = arith.constant 0 : index
    %c96_148 = arith.constant 96 : index
    %214 = vector.load %arg16[%c0_147, %c96_148] : memref<8x128xf32, #tpu.memory_space<vmem>>, vector<8x16xf32>
    tpu.vector_store %arg16[%c0_147, %c96_148], %213 {strides = array<i32>} : memref<8x128xf32, #tpu.memory_space<vmem>>, vector<8x16xf32>,
    %c0_149 = arith.constant 0 : index
    %c0_150 = arith.constant 0 : index
    %215 = vector.load %arg16[%c0_149, %c0_150] : memref<8x128xf32, #tpu.memory_space<vmem>>, vector<8x128xf32>
    %c0_151 = arith.constant 0 : index
    %c0_152 = arith.constant 0 : index
    %216 = vector.load %arg8[%c0_151, %c0_152] : memref<128x64xf32, #tpu.memory_space<vmem>>, vector<128x64xf32>
    %cst_153 = arith.constant dense<0.000000e+00> : vector<8x64xf32>
    %217 = tpu.matmul %215, %216, %cst_153 {dimension_numbers = #tpu.dot_dimension_numbers<[1], [0], [0], [1], [0, 0, 1, 1], [], []>} : vector<8x128xf32>, vector<128x64xf32>, vector<8x64xf32> -> vector<8x64xf32>
    %c0_154 = arith.constant 0 : index
    %c0_155 = arith.constant 0 : index
    %218 = vector.load %arg9[%c0_154, %c0_155] : memref<1x64xf32, #tpu.memory_space<vmem>>, vector<1x64xf32>
    %219 = vector.broadcast %218 : vector<1x64xf32> to vector<8x64xf32>
    %220 = arith.addf %217, %219 : vector<8x64xf32>
    %cst_156 = arith.constant 5.000000e-01 : f32
    %221 = vector.broadcast %cst_156 : f32 to vector<8x64xf32>
    %222 = arith.mulf %221, %220 : vector<8x64xf32>
    %223 = math.tanh %222 : vector<8x64xf32>
    %cst_157 = arith.constant 1.000000e+00 : f32
    %224 = vector.broadcast %cst_157 : f32 to vector<8x64xf32>
    %225 = arith.addf %223, %224 : vector<8x64xf32>
    %cst_158 = arith.constant 5.000000e-01 : f32
    %226 = vector.broadcast %cst_158 : f32 to vector<8x64xf32>
    %227 = arith.mulf %226, %225 : vector<8x64xf32>
    %228 = math.tanh %220 : vector<8x64xf32>
    %229 = vector.extract_strided_slice %227 {offsets = [0, 16], sizes = [8, 16], strides = [1, 1]} : vector<8x64xf32> to vector<8x16xf32>
    %c0_159 = arith.constant 0 : index
    %c0_160 = arith.constant 0 : index
    %230 = vector.load %arg15[%c0_159, %c0_160] : memref<8x16xf32, #tpu.memory_space<vmem>>, vector<8x16xf32>
    %231 = arith.mulf %229, %230 : vector<8x16xf32>
    %232 = vector.extract_strided_slice %227 {offsets = [0, 0], sizes = [8, 16], strides = [1, 1]} : vector<8x64xf32> to vector<8x16xf32>
    %233 = vector.extract_strided_slice %228 {offsets = [0, 32], sizes = [8, 16], strides = [1, 1]} : vector<8x64xf32> to vector<8x16xf32>
    %234 = arith.mulf %232, %233 : vector<8x16xf32>
    %235 = arith.addf %231, %234 : vector<8x16xf32>
    %236 = vector.extract_strided_slice %227 {offsets = [0, 48], sizes = [8, 16], strides = [1, 1]} : vector<8x64xf32> to vector<8x16xf32>
    %237 = math.tanh %235 : vector<8x16xf32>
    %238 = arith.mulf %236, %237 : vector<8x16xf32>
    %c0_161 = arith.constant 0 : index
    %c0_162 = arith.constant 0 : index
    %239 = vector.load %arg14[%c0_161, %c0_162] : memref<8x16xf32, #tpu.memory_space<vmem>>, vector<8x16xf32>
    tpu.vector_store %arg14[%c0_161, %c0_162], %238 {strides = array<i32>} : memref<8x16xf32, #tpu.memory_space<vmem>>, vector<8x16xf32>,
    %c0_163 = arith.constant 0 : index
    %c0_164 = arith.constant 0 : index
    %240 = vector.load %arg15[%c0_163, %c0_164] : memref<8x16xf32, #tpu.memory_space<vmem>>, vector<8x16xf32>
    tpu.vector_store %arg15[%c0_163, %c0_164], %235 {strides = array<i32>} : memref<8x16xf32, #tpu.memory_space<vmem>>, vector<8x16xf32>,
    %241 = arith.index_cast %c2_i32_117 : i32 to index
    %242 = memref.load %arg2[%241] : memref<7xi32, #tpu.memory_space<smem>>
    %c0_i32_165 = arith.constant 0 : i32
    %243 = arith.cmpi sgt, %242, %c0_i32_165 : i32
    %244 = arith.extui %243 : i1 to i32
    %c0_i32_166 = arith.constant 0 : i32
    %245 = arith.cmpi ne, %244, %c0_i32_166 : i32
    scf.if %245 {
      %c0_i32_375 = arith.constant 0 : i32
      %552 = arith.addi %174, %c0_i32_375 : i32
      %c3_i32_376 = arith.constant 3 : i32
      %553 = arith.addi %552, %c3_i32_376 : i32
      %554 = arith.index_cast %553 : i32 to index
      %555 = memref.load %arg1[%554] : memref<84xi32, #tpu.memory_space<smem>>
      %556 = arith.index_cast %555 : i32 to index
      %c0_377 = arith.constant 0 : index
      %557 = vector.load %arg13[%556, %c0_377] : memref<24x64xf32, #tpu.memory_space<vmem>>, vector<1x64xf32>
      %c0_378 = arith.constant 0 : index
      %c0_379 = arith.constant 0 : index
      %558 = vector.load %arg17[%c0_378, %c0_379] : memref<8x256xf32, #tpu.memory_space<vmem>>, vector<1x64xf32>
      tpu.vector_store %arg17[%c0_378, %c0_379], %557 {strides = array<i32>} : memref<8x256xf32, #tpu.memory_space<vmem>>, vector<1x64xf32>,
      %c4_i32_380 = arith.constant 4 : i32
      %559 = arith.addi %552, %c4_i32_380 : i32
      %560 = arith.index_cast %559 : i32 to index
      %561 = memref.load %arg1[%560] : memref<84xi32, #tpu.memory_space<smem>>
      %562 = arith.index_cast %561 : i32 to index
      %c0_381 = arith.constant 0 : index
      %563 = vector.load %arg13[%562, %c0_381] : memref<24x64xf32, #tpu.memory_space<vmem>>, vector<1x64xf32>
      %c0_382 = arith.constant 0 : index
      %c64_383 = arith.constant 64 : index
      %564 = vector.load %arg17[%c0_382, %c64_383] : memref<8x256xf32, #tpu.memory_space<vmem>>, vector<1x64xf32>
      tpu.vector_store %arg17[%c0_382, %c64_383], %563 {strides = array<i32>} : memref<8x256xf32, #tpu.memory_space<vmem>>, vector<1x64xf32>,
      %c6_i32_384 = arith.constant 6 : i32
      %565 = arith.addi %174, %c6_i32_384 : i32
      %c3_i32_385 = arith.constant 3 : i32
      %566 = arith.addi %565, %c3_i32_385 : i32
      %567 = arith.index_cast %566 : i32 to index
      %568 = memref.load %arg1[%567] : memref<84xi32, #tpu.memory_space<smem>>
      %569 = arith.index_cast %568 : i32 to index
      %c0_386 = arith.constant 0 : index
      %570 = vector.load %arg13[%569, %c0_386] : memref<24x64xf32, #tpu.memory_space<vmem>>, vector<1x64xf32>
      %c1_387 = arith.constant 1 : index
      %c0_388 = arith.constant 0 : index
      %571 = vector.load %arg17[%c1_387, %c0_388] : memref<8x256xf32, #tpu.memory_space<vmem>>, vector<1x64xf32>
      tpu.vector_store %arg17[%c1_387, %c0_388], %570 {strides = array<i32>} : memref<8x256xf32, #tpu.memory_space<vmem>>, vector<1x64xf32>,
      %c4_i32_389 = arith.constant 4 : i32
      %572 = arith.addi %565, %c4_i32_389 : i32
      %573 = arith.index_cast %572 : i32 to index
      %574 = memref.load %arg1[%573] : memref<84xi32, #tpu.memory_space<smem>>
      %575 = arith.index_cast %574 : i32 to index
      %c0_390 = arith.constant 0 : index
      %576 = vector.load %arg13[%575, %c0_390] : memref<24x64xf32, #tpu.memory_space<vmem>>, vector<1x64xf32>
      %c1_391 = arith.constant 1 : index
      %c64_392 = arith.constant 64 : index
      %577 = vector.load %arg17[%c1_391, %c64_392] : memref<8x256xf32, #tpu.memory_space<vmem>>, vector<1x64xf32>
      tpu.vector_store %arg17[%c1_391, %c64_392], %576 {strides = array<i32>} : memref<8x256xf32, #tpu.memory_space<vmem>>, vector<1x64xf32>,
      %c0_393 = arith.constant 0 : index
      %c128 = arith.constant 128 : index
      %578 = vector.load %arg17[%c0_393, %c128] : memref<8x256xf32, #tpu.memory_space<vmem>>, vector<8x16xf32>
      tpu.vector_store %arg17[%c0_393, %c128], %238 {strides = array<i32>} : memref<8x256xf32, #tpu.memory_space<vmem>>, vector<8x16xf32>,
      %c0_394 = arith.constant 0 : index
      %c0_395 = arith.constant 0 : index
      %579 = vector.load %arg17[%c0_394, %c0_395] : memref<8x256xf32, #tpu.memory_space<vmem>>, vector<8x256xf32>
      %c0_396 = arith.constant 0 : index
      %c0_397 = arith.constant 0 : index
      %580 = vector.load %arg10[%c0_396, %c0_397] : memref<256x160xf32, #tpu.memory_space<vmem>>, vector<256x160xf32>
      %cst_398 = arith.constant dense<0.000000e+00> : vector<8x160xf32>
      %581 = tpu.matmul %579, %580, %cst_398 {dimension_numbers = #tpu.dot_dimension_numbers<[1], [0], [0], [1], [0, 0, 1, 1], [], []>} : vector<8x256xf32>, vector<256x160xf32>, vector<8x160xf32> -> vector<8x160xf32>
      %c0_399 = arith.constant 0 : index
      %c0_400 = arith.constant 0 : index
      %582 = vector.load %arg11[%c0_399, %c0_400] : memref<1x160xf32, #tpu.memory_space<vmem>>, vector<1x160xf32>
      %583 = vector.broadcast %582 : vector<1x160xf32> to vector<8x160xf32>
      %584 = arith.addf %581, %583 : vector<8x160xf32>
      %cst_401 = arith.constant 5.000000e-01 : f32
      %585 = vector.broadcast %cst_401 : f32 to vector<8x160xf32>
      %586 = arith.mulf %585, %584 : vector<8x160xf32>
      %587 = math.tanh %586 : vector<8x160xf32>
      %cst_402 = arith.constant 1.000000e+00 : f32
      %588 = vector.broadcast %cst_402 : f32 to vector<8x160xf32>
      %589 = arith.addf %587, %588 : vector<8x160xf32>
      %cst_403 = arith.constant 5.000000e-01 : f32
      %590 = vector.broadcast %cst_403 : f32 to vector<8x160xf32>
      %591 = arith.mulf %590, %589 : vector<8x160xf32>
      %592 = math.tanh %584 : vector<8x160xf32>
      %c0_404 = arith.constant 0 : index
      %c32_405 = arith.constant 32 : index
      %593 = vector.load %arg17[%c0_404, %c32_405] : memref<8x256xf32, #tpu.memory_space<vmem>>, vector<8x32xf32>
      %c0_406 = arith.constant 0 : index
      %c96_407 = arith.constant 96 : index
      %594 = vector.load %arg17[%c0_406, %c96_407] : memref<8x256xf32, #tpu.memory_space<vmem>>, vector<8x32xf32>
      %595 = vector.extract_strided_slice %592 {offsets = [0, 0], sizes = [8, 32], strides = [1, 1]} : vector<8x160xf32> to vector<8x32xf32>
      %596 = vector.extract_strided_slice %591 {offsets = [0, 32], sizes = [8, 32], strides = [1, 1]} : vector<8x160xf32> to vector<8x32xf32>
      %597 = arith.mulf %595, %596 : vector<8x32xf32>
      %598 = vector.extract_strided_slice %591 {offsets = [0, 64], sizes = [8, 32], strides = [1, 1]} : vector<8x160xf32> to vector<8x32xf32>
      %599 = arith.mulf %598, %593 : vector<8x32xf32>
      %600 = arith.addf %597, %599 : vector<8x32xf32>
      %601 = vector.extract_strided_slice %591 {offsets = [0, 96], sizes = [8, 32], strides = [1, 1]} : vector<8x160xf32> to vector<8x32xf32>
      %602 = arith.mulf %601, %594 : vector<8x32xf32>
      %603 = arith.addf %600, %602 : vector<8x32xf32>
      %604 = vector.extract_strided_slice %591 {offsets = [0, 128], sizes = [8, 32], strides = [1, 1]} : vector<8x160xf32> to vector<8x32xf32>
      %605 = math.tanh %603 : vector<8x32xf32>
      %606 = arith.mulf %604, %605 : vector<8x32xf32>
      %607 = tpu.concatenate %606, %603 in 1 : vector<8x32xf32>, vector<8x32xf32> -> vector<8x64xf32>
      %c0_i32_408 = arith.constant 0 : i32
      %608 = arith.addi %174, %c0_i32_408 : i32
      %609 = vector.extract_strided_slice %607 {offsets = [0, 0], sizes = [1, 64], strides = [1, 1]} : vector<8x64xf32> to vector<1x64xf32>
      %c5_i32_409 = arith.constant 5 : i32
      %610 = arith.addi %608, %c5_i32_409 : i32
      %611 = arith.index_cast %610 : i32 to index
      %612 = memref.load %arg1[%611] : memref<84xi32, #tpu.memory_space<smem>>
      %613 = arith.index_cast %612 : i32 to index
      %c0_410 = arith.constant 0 : index
      %614 = vector.load %arg13[%613, %c0_410] : memref<24x64xf32, #tpu.memory_space<vmem>>, vector<1x64xf32>
      tpu.vector_store %arg13[%613, %c0_410], %609 {strides = array<i32>} : memref<24x64xf32, #tpu.memory_space<vmem>>, vector<1x64xf32>,
      %c6_i32_411 = arith.constant 6 : i32
      %615 = arith.addi %174, %c6_i32_411 : i32
      %616 = vector.extract_strided_slice %607 {offsets = [1, 0], sizes = [1, 64], strides = [1, 1]} : vector<8x64xf32> to vector<1x64xf32>
      %c5_i32_412 = arith.constant 5 : i32
      %617 = arith.addi %615, %c5_i32_412 : i32
      %618 = arith.index_cast %617 : i32 to index
      %619 = memref.load %arg1[%618] : memref<84xi32, #tpu.memory_space<smem>>
      %620 = arith.index_cast %619 : i32 to index
      %c0_413 = arith.constant 0 : index
      %621 = vector.load %arg13[%620, %c0_413] : memref<24x64xf32, #tpu.memory_space<vmem>>, vector<1x64xf32>
      tpu.vector_store %arg13[%620, %c0_413], %616 {strides = array<i32>} : memref<24x64xf32, #tpu.memory_space<vmem>>, vector<1x64xf32>,
    } else {
    }
    %c3_i32 = arith.constant 3 : i32
    %c12_i32_167 = arith.constant 12 : i32
    %246 = arith.muli %c3_i32, %c12_i32_167 : i32
    %c0_i32_168 = arith.constant 0 : i32
    %247 = arith.addi %246, %c0_i32_168 : i32
    %c0_i32_169 = arith.constant 0 : i32
    %248 = arith.addi %247, %c0_i32_169 : i32
    %249 = arith.index_cast %248 : i32 to index
    %250 = memref.load %arg1[%249] : memref<84xi32, #tpu.memory_space<smem>>
    %251 = arith.index_cast %250 : i32 to index
    %c0_170 = arith.constant 0 : index
    %252 = vector.load %arg13[%251, %c0_170] : memref<24x64xf32, #tpu.memory_space<vmem>>, vector<1x32xf32>
    %c0_171 = arith.constant 0 : index
    %c0_172 = arith.constant 0 : index
    %253 = vector.load %arg16[%c0_171, %c0_172] : memref<8x128xf32, #tpu.memory_space<vmem>>, vector<1x32xf32>
    tpu.vector_store %arg16[%c0_171, %c0_172], %252 {strides = array<i32>} : memref<8x128xf32, #tpu.memory_space<vmem>>, vector<1x32xf32>,
    %c1_i32_173 = arith.constant 1 : i32
    %254 = arith.addi %247, %c1_i32_173 : i32
    %255 = arith.index_cast %254 : i32 to index
    %256 = memref.load %arg1[%255] : memref<84xi32, #tpu.memory_space<smem>>
    %257 = arith.index_cast %256 : i32 to index
    %c0_174 = arith.constant 0 : index
    %258 = vector.load %arg13[%257, %c0_174] : memref<24x64xf32, #tpu.memory_space<vmem>>, vector<1x32xf32>
    %c0_175 = arith.constant 0 : index
    %c32_176 = arith.constant 32 : index
    %259 = vector.load %arg16[%c0_175, %c32_176] : memref<8x128xf32, #tpu.memory_space<vmem>>, vector<1x32xf32>
    tpu.vector_store %arg16[%c0_175, %c32_176], %258 {strides = array<i32>} : memref<8x128xf32, #tpu.memory_space<vmem>>, vector<1x32xf32>,
    %c2_i32_177 = arith.constant 2 : i32
    %260 = arith.addi %247, %c2_i32_177 : i32
    %261 = arith.index_cast %260 : i32 to index
    %262 = memref.load %arg1[%261] : memref<84xi32, #tpu.memory_space<smem>>
    %263 = arith.index_cast %262 : i32 to index
    %c0_178 = arith.constant 0 : index
    %264 = vector.load %arg13[%263, %c0_178] : memref<24x64xf32, #tpu.memory_space<vmem>>, vector<1x32xf32>
    %c0_179 = arith.constant 0 : index
    %c64_180 = arith.constant 64 : index
    %265 = vector.load %arg16[%c0_179, %c64_180] : memref<8x128xf32, #tpu.memory_space<vmem>>, vector<1x32xf32>
    tpu.vector_store %arg16[%c0_179, %c64_180], %264 {strides = array<i32>} : memref<8x128xf32, #tpu.memory_space<vmem>>, vector<1x32xf32>,
    %c6_i32_181 = arith.constant 6 : i32
    %266 = arith.addi %246, %c6_i32_181 : i32
    %c0_i32_182 = arith.constant 0 : i32
    %267 = arith.addi %266, %c0_i32_182 : i32
    %268 = arith.index_cast %267 : i32 to index
    %269 = memref.load %arg1[%268] : memref<84xi32, #tpu.memory_space<smem>>
    %270 = arith.index_cast %269 : i32 to index
    %c0_183 = arith.constant 0 : index
    %271 = vector.load %arg13[%270, %c0_183] : memref<24x64xf32, #tpu.memory_space<vmem>>, vector<1x32xf32>
    %c1_184 = arith.constant 1 : index
    %c0_185 = arith.constant 0 : index
    %272 = vector.load %arg16[%c1_184, %c0_185] : memref<8x128xf32, #tpu.memory_space<vmem>>, vector<1x32xf32>
    tpu.vector_store %arg16[%c1_184, %c0_185], %271 {strides = array<i32>} : memref<8x128xf32, #tpu.memory_space<vmem>>, vector<1x32xf32>,
    %c1_i32_186 = arith.constant 1 : i32
    %273 = arith.addi %266, %c1_i32_186 : i32
    %274 = arith.index_cast %273 : i32 to index
    %275 = memref.load %arg1[%274] : memref<84xi32, #tpu.memory_space<smem>>
    %276 = arith.index_cast %275 : i32 to index
    %c0_187 = arith.constant 0 : index
    %277 = vector.load %arg13[%276, %c0_187] : memref<24x64xf32, #tpu.memory_space<vmem>>, vector<1x32xf32>
    %c1_188 = arith.constant 1 : index
    %c32_189 = arith.constant 32 : index
    %278 = vector.load %arg16[%c1_188, %c32_189] : memref<8x128xf32, #tpu.memory_space<vmem>>, vector<1x32xf32>
    tpu.vector_store %arg16[%c1_188, %c32_189], %277 {strides = array<i32>} : memref<8x128xf32, #tpu.memory_space<vmem>>, vector<1x32xf32>,
    %c2_i32_190 = arith.constant 2 : i32
    %279 = arith.addi %266, %c2_i32_190 : i32
    %280 = arith.index_cast %279 : i32 to index
    %281 = memref.load %arg1[%280] : memref<84xi32, #tpu.memory_space<smem>>
    %282 = arith.index_cast %281 : i32 to index
    %c0_191 = arith.constant 0 : index
    %283 = vector.load %arg13[%282, %c0_191] : memref<24x64xf32, #tpu.memory_space<vmem>>, vector<1x32xf32>
    %c1_192 = arith.constant 1 : index
    %c64_193 = arith.constant 64 : index
    %284 = vector.load %arg16[%c1_192, %c64_193] : memref<8x128xf32, #tpu.memory_space<vmem>>, vector<1x32xf32>
    tpu.vector_store %arg16[%c1_192, %c64_193], %283 {strides = array<i32>} : memref<8x128xf32, #tpu.memory_space<vmem>>, vector<1x32xf32>,
    %c0_194 = arith.constant 0 : index
    %c0_195 = arith.constant 0 : index
    %285 = vector.load %arg14[%c0_194, %c0_195] : memref<8x16xf32, #tpu.memory_space<vmem>>, vector<8x16xf32>
    %c0_196 = arith.constant 0 : index
    %c96_197 = arith.constant 96 : index
    %286 = vector.load %arg16[%c0_196, %c96_197] : memref<8x128xf32, #tpu.memory_space<vmem>>, vector<8x16xf32>
    tpu.vector_store %arg16[%c0_196, %c96_197], %285 {strides = array<i32>} : memref<8x128xf32, #tpu.memory_space<vmem>>, vector<8x16xf32>,
    %c0_198 = arith.constant 0 : index
    %c0_199 = arith.constant 0 : index
    %287 = vector.load %arg16[%c0_198, %c0_199] : memref<8x128xf32, #tpu.memory_space<vmem>>, vector<8x128xf32>
    %c0_200 = arith.constant 0 : index
    %c0_201 = arith.constant 0 : index
    %288 = vector.load %arg8[%c0_200, %c0_201] : memref<128x64xf32, #tpu.memory_space<vmem>>, vector<128x64xf32>
    %cst_202 = arith.constant dense<0.000000e+00> : vector<8x64xf32>
    %289 = tpu.matmul %287, %288, %cst_202 {dimension_numbers = #tpu.dot_dimension_numbers<[1], [0], [0], [1], [0, 0, 1, 1], [], []>} : vector<8x128xf32>, vector<128x64xf32>, vector<8x64xf32> -> vector<8x64xf32>
    %c0_203 = arith.constant 0 : index
    %c0_204 = arith.constant 0 : index
    %290 = vector.load %arg9[%c0_203, %c0_204] : memref<1x64xf32, #tpu.memory_space<vmem>>, vector<1x64xf32>
    %291 = vector.broadcast %290 : vector<1x64xf32> to vector<8x64xf32>
    %292 = arith.addf %289, %291 : vector<8x64xf32>
    %cst_205 = arith.constant 5.000000e-01 : f32
    %293 = vector.broadcast %cst_205 : f32 to vector<8x64xf32>
    %294 = arith.mulf %293, %292 : vector<8x64xf32>
    %295 = math.tanh %294 : vector<8x64xf32>
    %cst_206 = arith.constant 1.000000e+00 : f32
    %296 = vector.broadcast %cst_206 : f32 to vector<8x64xf32>
    %297 = arith.addf %295, %296 : vector<8x64xf32>
    %cst_207 = arith.constant 5.000000e-01 : f32
    %298 = vector.broadcast %cst_207 : f32 to vector<8x64xf32>
    %299 = arith.mulf %298, %297 : vector<8x64xf32>
    %300 = math.tanh %292 : vector<8x64xf32>
    %301 = vector.extract_strided_slice %299 {offsets = [0, 16], sizes = [8, 16], strides = [1, 1]} : vector<8x64xf32> to vector<8x16xf32>
    %c0_208 = arith.constant 0 : index
    %c0_209 = arith.constant 0 : index
    %302 = vector.load %arg15[%c0_208, %c0_209] : memref<8x16xf32, #tpu.memory_space<vmem>>, vector<8x16xf32>
    %303 = arith.mulf %301, %302 : vector<8x16xf32>
    %304 = vector.extract_strided_slice %299 {offsets = [0, 0], sizes = [8, 16], strides = [1, 1]} : vector<8x64xf32> to vector<8x16xf32>
    %305 = vector.extract_strided_slice %300 {offsets = [0, 32], sizes = [8, 16], strides = [1, 1]} : vector<8x64xf32> to vector<8x16xf32>
    %306 = arith.mulf %304, %305 : vector<8x16xf32>
    %307 = arith.addf %303, %306 : vector<8x16xf32>
    %308 = vector.extract_strided_slice %299 {offsets = [0, 48], sizes = [8, 16], strides = [1, 1]} : vector<8x64xf32> to vector<8x16xf32>
    %309 = math.tanh %307 : vector<8x16xf32>
    %310 = arith.mulf %308, %309 : vector<8x16xf32>
    %c0_210 = arith.constant 0 : index
    %c0_211 = arith.constant 0 : index
    %311 = vector.load %arg14[%c0_210, %c0_211] : memref<8x16xf32, #tpu.memory_space<vmem>>, vector<8x16xf32>
    tpu.vector_store %arg14[%c0_210, %c0_211], %310 {strides = array<i32>} : memref<8x16xf32, #tpu.memory_space<vmem>>, vector<8x16xf32>,
    %c0_212 = arith.constant 0 : index
    %c0_213 = arith.constant 0 : index
    %312 = vector.load %arg15[%c0_212, %c0_213] : memref<8x16xf32, #tpu.memory_space<vmem>>, vector<8x16xf32>
    tpu.vector_store %arg15[%c0_212, %c0_213], %307 {strides = array<i32>} : memref<8x16xf32, #tpu.memory_space<vmem>>, vector<8x16xf32>,
    %313 = arith.index_cast %c3_i32 : i32 to index
    %314 = memref.load %arg2[%313] : memref<7xi32, #tpu.memory_space<smem>>
    %c0_i32_214 = arith.constant 0 : i32
    %315 = arith.cmpi sgt, %314, %c0_i32_214 : i32
    %316 = arith.extui %315 : i1 to i32
    %c0_i32_215 = arith.constant 0 : i32
    %317 = arith.cmpi ne, %316, %c0_i32_215 : i32
    scf.if %317 {
      %c0_i32_375 = arith.constant 0 : i32
      %552 = arith.addi %246, %c0_i32_375 : i32
      %c3_i32_376 = arith.constant 3 : i32
      %553 = arith.addi %552, %c3_i32_376 : i32
      %554 = arith.index_cast %553 : i32 to index
      %555 = memref.load %arg1[%554] : memref<84xi32, #tpu.memory_space<smem>>
      %556 = arith.index_cast %555 : i32 to index
      %c0_377 = arith.constant 0 : index
      %557 = vector.load %arg13[%556, %c0_377] : memref<24x64xf32, #tpu.memory_space<vmem>>, vector<1x64xf32>
      %c0_378 = arith.constant 0 : index
      %c0_379 = arith.constant 0 : index
      %558 = vector.load %arg17[%c0_378, %c0_379] : memref<8x256xf32, #tpu.memory_space<vmem>>, vector<1x64xf32>
      tpu.vector_store %arg17[%c0_378, %c0_379], %557 {strides = array<i32>} : memref<8x256xf32, #tpu.memory_space<vmem>>, vector<1x64xf32>,
      %c4_i32_380 = arith.constant 4 : i32
      %559 = arith.addi %552, %c4_i32_380 : i32
      %560 = arith.index_cast %559 : i32 to index
      %561 = memref.load %arg1[%560] : memref<84xi32, #tpu.memory_space<smem>>
      %562 = arith.index_cast %561 : i32 to index
      %c0_381 = arith.constant 0 : index
      %563 = vector.load %arg13[%562, %c0_381] : memref<24x64xf32, #tpu.memory_space<vmem>>, vector<1x64xf32>
      %c0_382 = arith.constant 0 : index
      %c64_383 = arith.constant 64 : index
      %564 = vector.load %arg17[%c0_382, %c64_383] : memref<8x256xf32, #tpu.memory_space<vmem>>, vector<1x64xf32>
      tpu.vector_store %arg17[%c0_382, %c64_383], %563 {strides = array<i32>} : memref<8x256xf32, #tpu.memory_space<vmem>>, vector<1x64xf32>,
      %c6_i32_384 = arith.constant 6 : i32
      %565 = arith.addi %246, %c6_i32_384 : i32
      %c3_i32_385 = arith.constant 3 : i32
      %566 = arith.addi %565, %c3_i32_385 : i32
      %567 = arith.index_cast %566 : i32 to index
      %568 = memref.load %arg1[%567] : memref<84xi32, #tpu.memory_space<smem>>
      %569 = arith.index_cast %568 : i32 to index
      %c0_386 = arith.constant 0 : index
      %570 = vector.load %arg13[%569, %c0_386] : memref<24x64xf32, #tpu.memory_space<vmem>>, vector<1x64xf32>
      %c1_387 = arith.constant 1 : index
      %c0_388 = arith.constant 0 : index
      %571 = vector.load %arg17[%c1_387, %c0_388] : memref<8x256xf32, #tpu.memory_space<vmem>>, vector<1x64xf32>
      tpu.vector_store %arg17[%c1_387, %c0_388], %570 {strides = array<i32>} : memref<8x256xf32, #tpu.memory_space<vmem>>, vector<1x64xf32>,
      %c4_i32_389 = arith.constant 4 : i32
      %572 = arith.addi %565, %c4_i32_389 : i32
      %573 = arith.index_cast %572 : i32 to index
      %574 = memref.load %arg1[%573] : memref<84xi32, #tpu.memory_space<smem>>
      %575 = arith.index_cast %574 : i32 to index
      %c0_390 = arith.constant 0 : index
      %576 = vector.load %arg13[%575, %c0_390] : memref<24x64xf32, #tpu.memory_space<vmem>>, vector<1x64xf32>
      %c1_391 = arith.constant 1 : index
      %c64_392 = arith.constant 64 : index
      %577 = vector.load %arg17[%c1_391, %c64_392] : memref<8x256xf32, #tpu.memory_space<vmem>>, vector<1x64xf32>
      tpu.vector_store %arg17[%c1_391, %c64_392], %576 {strides = array<i32>} : memref<8x256xf32, #tpu.memory_space<vmem>>, vector<1x64xf32>,
      %c0_393 = arith.constant 0 : index
      %c128 = arith.constant 128 : index
      %578 = vector.load %arg17[%c0_393, %c128] : memref<8x256xf32, #tpu.memory_space<vmem>>, vector<8x16xf32>
      tpu.vector_store %arg17[%c0_393, %c128], %310 {strides = array<i32>} : memref<8x256xf32, #tpu.memory_space<vmem>>, vector<8x16xf32>,
      %c0_394 = arith.constant 0 : index
      %c0_395 = arith.constant 0 : index
      %579 = vector.load %arg17[%c0_394, %c0_395] : memref<8x256xf32, #tpu.memory_space<vmem>>, vector<8x256xf32>
      %c0_396 = arith.constant 0 : index
      %c0_397 = arith.constant 0 : index
      %580 = vector.load %arg10[%c0_396, %c0_397] : memref<256x160xf32, #tpu.memory_space<vmem>>, vector<256x160xf32>
      %cst_398 = arith.constant dense<0.000000e+00> : vector<8x160xf32>
      %581 = tpu.matmul %579, %580, %cst_398 {dimension_numbers = #tpu.dot_dimension_numbers<[1], [0], [0], [1], [0, 0, 1, 1], [], []>} : vector<8x256xf32>, vector<256x160xf32>, vector<8x160xf32> -> vector<8x160xf32>
      %c0_399 = arith.constant 0 : index
      %c0_400 = arith.constant 0 : index
      %582 = vector.load %arg11[%c0_399, %c0_400] : memref<1x160xf32, #tpu.memory_space<vmem>>, vector<1x160xf32>
      %583 = vector.broadcast %582 : vector<1x160xf32> to vector<8x160xf32>
      %584 = arith.addf %581, %583 : vector<8x160xf32>
      %cst_401 = arith.constant 5.000000e-01 : f32
      %585 = vector.broadcast %cst_401 : f32 to vector<8x160xf32>
      %586 = arith.mulf %585, %584 : vector<8x160xf32>
      %587 = math.tanh %586 : vector<8x160xf32>
      %cst_402 = arith.constant 1.000000e+00 : f32
      %588 = vector.broadcast %cst_402 : f32 to vector<8x160xf32>
      %589 = arith.addf %587, %588 : vector<8x160xf32>
      %cst_403 = arith.constant 5.000000e-01 : f32
      %590 = vector.broadcast %cst_403 : f32 to vector<8x160xf32>
      %591 = arith.mulf %590, %589 : vector<8x160xf32>
      %592 = math.tanh %584 : vector<8x160xf32>
      %c0_404 = arith.constant 0 : index
      %c32_405 = arith.constant 32 : index
      %593 = vector.load %arg17[%c0_404, %c32_405] : memref<8x256xf32, #tpu.memory_space<vmem>>, vector<8x32xf32>
      %c0_406 = arith.constant 0 : index
      %c96_407 = arith.constant 96 : index
      %594 = vector.load %arg17[%c0_406, %c96_407] : memref<8x256xf32, #tpu.memory_space<vmem>>, vector<8x32xf32>
      %595 = vector.extract_strided_slice %592 {offsets = [0, 0], sizes = [8, 32], strides = [1, 1]} : vector<8x160xf32> to vector<8x32xf32>
      %596 = vector.extract_strided_slice %591 {offsets = [0, 32], sizes = [8, 32], strides = [1, 1]} : vector<8x160xf32> to vector<8x32xf32>
      %597 = arith.mulf %595, %596 : vector<8x32xf32>
      %598 = vector.extract_strided_slice %591 {offsets = [0, 64], sizes = [8, 32], strides = [1, 1]} : vector<8x160xf32> to vector<8x32xf32>
      %599 = arith.mulf %598, %593 : vector<8x32xf32>
      %600 = arith.addf %597, %599 : vector<8x32xf32>
      %601 = vector.extract_strided_slice %591 {offsets = [0, 96], sizes = [8, 32], strides = [1, 1]} : vector<8x160xf32> to vector<8x32xf32>
      %602 = arith.mulf %601, %594 : vector<8x32xf32>
      %603 = arith.addf %600, %602 : vector<8x32xf32>
      %604 = vector.extract_strided_slice %591 {offsets = [0, 128], sizes = [8, 32], strides = [1, 1]} : vector<8x160xf32> to vector<8x32xf32>
      %605 = math.tanh %603 : vector<8x32xf32>
      %606 = arith.mulf %604, %605 : vector<8x32xf32>
      %607 = tpu.concatenate %606, %603 in 1 : vector<8x32xf32>, vector<8x32xf32> -> vector<8x64xf32>
      %c0_i32_408 = arith.constant 0 : i32
      %608 = arith.addi %246, %c0_i32_408 : i32
      %609 = vector.extract_strided_slice %607 {offsets = [0, 0], sizes = [1, 64], strides = [1, 1]} : vector<8x64xf32> to vector<1x64xf32>
      %c5_i32_409 = arith.constant 5 : i32
      %610 = arith.addi %608, %c5_i32_409 : i32
      %611 = arith.index_cast %610 : i32 to index
      %612 = memref.load %arg1[%611] : memref<84xi32, #tpu.memory_space<smem>>
      %613 = arith.index_cast %612 : i32 to index
      %c0_410 = arith.constant 0 : index
      %614 = vector.load %arg13[%613, %c0_410] : memref<24x64xf32, #tpu.memory_space<vmem>>, vector<1x64xf32>
      tpu.vector_store %arg13[%613, %c0_410], %609 {strides = array<i32>} : memref<24x64xf32, #tpu.memory_space<vmem>>, vector<1x64xf32>,
      %c6_i32_411 = arith.constant 6 : i32
      %615 = arith.addi %246, %c6_i32_411 : i32
      %616 = vector.extract_strided_slice %607 {offsets = [1, 0], sizes = [1, 64], strides = [1, 1]} : vector<8x64xf32> to vector<1x64xf32>
      %c5_i32_412 = arith.constant 5 : i32
      %617 = arith.addi %615, %c5_i32_412 : i32
      %618 = arith.index_cast %617 : i32 to index
      %619 = memref.load %arg1[%618] : memref<84xi32, #tpu.memory_space<smem>>
      %620 = arith.index_cast %619 : i32 to index
      %c0_413 = arith.constant 0 : index
      %621 = vector.load %arg13[%620, %c0_413] : memref<24x64xf32, #tpu.memory_space<vmem>>, vector<1x64xf32>
      tpu.vector_store %arg13[%620, %c0_413], %616 {strides = array<i32>} : memref<24x64xf32, #tpu.memory_space<vmem>>, vector<1x64xf32>,
    } else {
    }
    %c4_i32 = arith.constant 4 : i32
    %c12_i32_216 = arith.constant 12 : i32
    %318 = arith.muli %c4_i32, %c12_i32_216 : i32
    %c0_i32_217 = arith.constant 0 : i32
    %319 = arith.addi %318, %c0_i32_217 : i32
    %c0_i32_218 = arith.constant 0 : i32
    %320 = arith.addi %319, %c0_i32_218 : i32
    %321 = arith.index_cast %320 : i32 to index
    %322 = memref.load %arg1[%321] : memref<84xi32, #tpu.memory_space<smem>>
    %323 = arith.index_cast %322 : i32 to index
    %c0_219 = arith.constant 0 : index
    %324 = vector.load %arg13[%323, %c0_219] : memref<24x64xf32, #tpu.memory_space<vmem>>, vector<1x32xf32>
    %c0_220 = arith.constant 0 : index
    %c0_221 = arith.constant 0 : index
    %325 = vector.load %arg16[%c0_220, %c0_221] : memref<8x128xf32, #tpu.memory_space<vmem>>, vector<1x32xf32>
    tpu.vector_store %arg16[%c0_220, %c0_221], %324 {strides = array<i32>} : memref<8x128xf32, #tpu.memory_space<vmem>>, vector<1x32xf32>,
    %c1_i32_222 = arith.constant 1 : i32
    %326 = arith.addi %319, %c1_i32_222 : i32
    %327 = arith.index_cast %326 : i32 to index
    %328 = memref.load %arg1[%327] : memref<84xi32, #tpu.memory_space<smem>>
    %329 = arith.index_cast %328 : i32 to index
    %c0_223 = arith.constant 0 : index
    %330 = vector.load %arg13[%329, %c0_223] : memref<24x64xf32, #tpu.memory_space<vmem>>, vector<1x32xf32>
    %c0_224 = arith.constant 0 : index
    %c32_225 = arith.constant 32 : index
    %331 = vector.load %arg16[%c0_224, %c32_225] : memref<8x128xf32, #tpu.memory_space<vmem>>, vector<1x32xf32>
    tpu.vector_store %arg16[%c0_224, %c32_225], %330 {strides = array<i32>} : memref<8x128xf32, #tpu.memory_space<vmem>>, vector<1x32xf32>,
    %c2_i32_226 = arith.constant 2 : i32
    %332 = arith.addi %319, %c2_i32_226 : i32
    %333 = arith.index_cast %332 : i32 to index
    %334 = memref.load %arg1[%333] : memref<84xi32, #tpu.memory_space<smem>>
    %335 = arith.index_cast %334 : i32 to index
    %c0_227 = arith.constant 0 : index
    %336 = vector.load %arg13[%335, %c0_227] : memref<24x64xf32, #tpu.memory_space<vmem>>, vector<1x32xf32>
    %c0_228 = arith.constant 0 : index
    %c64_229 = arith.constant 64 : index
    %337 = vector.load %arg16[%c0_228, %c64_229] : memref<8x128xf32, #tpu.memory_space<vmem>>, vector<1x32xf32>
    tpu.vector_store %arg16[%c0_228, %c64_229], %336 {strides = array<i32>} : memref<8x128xf32, #tpu.memory_space<vmem>>, vector<1x32xf32>,
    %c6_i32_230 = arith.constant 6 : i32
    %338 = arith.addi %318, %c6_i32_230 : i32
    %c0_i32_231 = arith.constant 0 : i32
    %339 = arith.addi %338, %c0_i32_231 : i32
    %340 = arith.index_cast %339 : i32 to index
    %341 = memref.load %arg1[%340] : memref<84xi32, #tpu.memory_space<smem>>
    %342 = arith.index_cast %341 : i32 to index
    %c0_232 = arith.constant 0 : index
    %343 = vector.load %arg13[%342, %c0_232] : memref<24x64xf32, #tpu.memory_space<vmem>>, vector<1x32xf32>
    %c1_233 = arith.constant 1 : index
    %c0_234 = arith.constant 0 : index
    %344 = vector.load %arg16[%c1_233, %c0_234] : memref<8x128xf32, #tpu.memory_space<vmem>>, vector<1x32xf32>
    tpu.vector_store %arg16[%c1_233, %c0_234], %343 {strides = array<i32>} : memref<8x128xf32, #tpu.memory_space<vmem>>, vector<1x32xf32>,
    %c1_i32_235 = arith.constant 1 : i32
    %345 = arith.addi %338, %c1_i32_235 : i32
    %346 = arith.index_cast %345 : i32 to index
    %347 = memref.load %arg1[%346] : memref<84xi32, #tpu.memory_space<smem>>
    %348 = arith.index_cast %347 : i32 to index
    %c0_236 = arith.constant 0 : index
    %349 = vector.load %arg13[%348, %c0_236] : memref<24x64xf32, #tpu.memory_space<vmem>>, vector<1x32xf32>
    %c1_237 = arith.constant 1 : index
    %c32_238 = arith.constant 32 : index
    %350 = vector.load %arg16[%c1_237, %c32_238] : memref<8x128xf32, #tpu.memory_space<vmem>>, vector<1x32xf32>
    tpu.vector_store %arg16[%c1_237, %c32_238], %349 {strides = array<i32>} : memref<8x128xf32, #tpu.memory_space<vmem>>, vector<1x32xf32>,
    %c2_i32_239 = arith.constant 2 : i32
    %351 = arith.addi %338, %c2_i32_239 : i32
    %352 = arith.index_cast %351 : i32 to index
    %353 = memref.load %arg1[%352] : memref<84xi32, #tpu.memory_space<smem>>
    %354 = arith.index_cast %353 : i32 to index
    %c0_240 = arith.constant 0 : index
    %355 = vector.load %arg13[%354, %c0_240] : memref<24x64xf32, #tpu.memory_space<vmem>>, vector<1x32xf32>
    %c1_241 = arith.constant 1 : index
    %c64_242 = arith.constant 64 : index
    %356 = vector.load %arg16[%c1_241, %c64_242] : memref<8x128xf32, #tpu.memory_space<vmem>>, vector<1x32xf32>
    tpu.vector_store %arg16[%c1_241, %c64_242], %355 {strides = array<i32>} : memref<8x128xf32, #tpu.memory_space<vmem>>, vector<1x32xf32>,
    %c0_243 = arith.constant 0 : index
    %c0_244 = arith.constant 0 : index
    %357 = vector.load %arg14[%c0_243, %c0_244] : memref<8x16xf32, #tpu.memory_space<vmem>>, vector<8x16xf32>
    %c0_245 = arith.constant 0 : index
    %c96_246 = arith.constant 96 : index
    %358 = vector.load %arg16[%c0_245, %c96_246] : memref<8x128xf32, #tpu.memory_space<vmem>>, vector<8x16xf32>
    tpu.vector_store %arg16[%c0_245, %c96_246], %357 {strides = array<i32>} : memref<8x128xf32, #tpu.memory_space<vmem>>, vector<8x16xf32>,
    %c0_247 = arith.constant 0 : index
    %c0_248 = arith.constant 0 : index
    %359 = vector.load %arg16[%c0_247, %c0_248] : memref<8x128xf32, #tpu.memory_space<vmem>>, vector<8x128xf32>
    %c0_249 = arith.constant 0 : index
    %c0_250 = arith.constant 0 : index
    %360 = vector.load %arg8[%c0_249, %c0_250] : memref<128x64xf32, #tpu.memory_space<vmem>>, vector<128x64xf32>
    %cst_251 = arith.constant dense<0.000000e+00> : vector<8x64xf32>
    %361 = tpu.matmul %359, %360, %cst_251 {dimension_numbers = #tpu.dot_dimension_numbers<[1], [0], [0], [1], [0, 0, 1, 1], [], []>} : vector<8x128xf32>, vector<128x64xf32>, vector<8x64xf32> -> vector<8x64xf32>
    %c0_252 = arith.constant 0 : index
    %c0_253 = arith.constant 0 : index
    %362 = vector.load %arg9[%c0_252, %c0_253] : memref<1x64xf32, #tpu.memory_space<vmem>>, vector<1x64xf32>
    %363 = vector.broadcast %362 : vector<1x64xf32> to vector<8x64xf32>
    %364 = arith.addf %361, %363 : vector<8x64xf32>
    %cst_254 = arith.constant 5.000000e-01 : f32
    %365 = vector.broadcast %cst_254 : f32 to vector<8x64xf32>
    %366 = arith.mulf %365, %364 : vector<8x64xf32>
    %367 = math.tanh %366 : vector<8x64xf32>
    %cst_255 = arith.constant 1.000000e+00 : f32
    %368 = vector.broadcast %cst_255 : f32 to vector<8x64xf32>
    %369 = arith.addf %367, %368 : vector<8x64xf32>
    %cst_256 = arith.constant 5.000000e-01 : f32
    %370 = vector.broadcast %cst_256 : f32 to vector<8x64xf32>
    %371 = arith.mulf %370, %369 : vector<8x64xf32>
    %372 = math.tanh %364 : vector<8x64xf32>
    %373 = vector.extract_strided_slice %371 {offsets = [0, 16], sizes = [8, 16], strides = [1, 1]} : vector<8x64xf32> to vector<8x16xf32>
    %c0_257 = arith.constant 0 : index
    %c0_258 = arith.constant 0 : index
    %374 = vector.load %arg15[%c0_257, %c0_258] : memref<8x16xf32, #tpu.memory_space<vmem>>, vector<8x16xf32>
    %375 = arith.mulf %373, %374 : vector<8x16xf32>
    %376 = vector.extract_strided_slice %371 {offsets = [0, 0], sizes = [8, 16], strides = [1, 1]} : vector<8x64xf32> to vector<8x16xf32>
    %377 = vector.extract_strided_slice %372 {offsets = [0, 32], sizes = [8, 16], strides = [1, 1]} : vector<8x64xf32> to vector<8x16xf32>
    %378 = arith.mulf %376, %377 : vector<8x16xf32>
    %379 = arith.addf %375, %378 : vector<8x16xf32>
    %380 = vector.extract_strided_slice %371 {offsets = [0, 48], sizes = [8, 16], strides = [1, 1]} : vector<8x64xf32> to vector<8x16xf32>
    %381 = math.tanh %379 : vector<8x16xf32>
    %382 = arith.mulf %380, %381 : vector<8x16xf32>
    %c0_259 = arith.constant 0 : index
    %c0_260 = arith.constant 0 : index
    %383 = vector.load %arg14[%c0_259, %c0_260] : memref<8x16xf32, #tpu.memory_space<vmem>>, vector<8x16xf32>
    tpu.vector_store %arg14[%c0_259, %c0_260], %382 {strides = array<i32>} : memref<8x16xf32, #tpu.memory_space<vmem>>, vector<8x16xf32>,
    %c0_261 = arith.constant 0 : index
    %c0_262 = arith.constant 0 : index
    %384 = vector.load %arg15[%c0_261, %c0_262] : memref<8x16xf32, #tpu.memory_space<vmem>>, vector<8x16xf32>
    tpu.vector_store %arg15[%c0_261, %c0_262], %379 {strides = array<i32>} : memref<8x16xf32, #tpu.memory_space<vmem>>, vector<8x16xf32>,
    %385 = arith.index_cast %c4_i32 : i32 to index
    %386 = memref.load %arg2[%385] : memref<7xi32, #tpu.memory_space<smem>>
    %c0_i32_263 = arith.constant 0 : i32
    %387 = arith.cmpi sgt, %386, %c0_i32_263 : i32
    %388 = arith.extui %387 : i1 to i32
    %c0_i32_264 = arith.constant 0 : i32
    %389 = arith.cmpi ne, %388, %c0_i32_264 : i32
    scf.if %389 {
      %c0_i32_375 = arith.constant 0 : i32
      %552 = arith.addi %318, %c0_i32_375 : i32
      %c3_i32_376 = arith.constant 3 : i32
      %553 = arith.addi %552, %c3_i32_376 : i32
      %554 = arith.index_cast %553 : i32 to index
      %555 = memref.load %arg1[%554] : memref<84xi32, #tpu.memory_space<smem>>
      %556 = arith.index_cast %555 : i32 to index
      %c0_377 = arith.constant 0 : index
      %557 = vector.load %arg13[%556, %c0_377] : memref<24x64xf32, #tpu.memory_space<vmem>>, vector<1x64xf32>
      %c0_378 = arith.constant 0 : index
      %c0_379 = arith.constant 0 : index
      %558 = vector.load %arg17[%c0_378, %c0_379] : memref<8x256xf32, #tpu.memory_space<vmem>>, vector<1x64xf32>
      tpu.vector_store %arg17[%c0_378, %c0_379], %557 {strides = array<i32>} : memref<8x256xf32, #tpu.memory_space<vmem>>, vector<1x64xf32>,
      %c4_i32_380 = arith.constant 4 : i32
      %559 = arith.addi %552, %c4_i32_380 : i32
      %560 = arith.index_cast %559 : i32 to index
      %561 = memref.load %arg1[%560] : memref<84xi32, #tpu.memory_space<smem>>
      %562 = arith.index_cast %561 : i32 to index
      %c0_381 = arith.constant 0 : index
      %563 = vector.load %arg13[%562, %c0_381] : memref<24x64xf32, #tpu.memory_space<vmem>>, vector<1x64xf32>
      %c0_382 = arith.constant 0 : index
      %c64_383 = arith.constant 64 : index
      %564 = vector.load %arg17[%c0_382, %c64_383] : memref<8x256xf32, #tpu.memory_space<vmem>>, vector<1x64xf32>
      tpu.vector_store %arg17[%c0_382, %c64_383], %563 {strides = array<i32>} : memref<8x256xf32, #tpu.memory_space<vmem>>, vector<1x64xf32>,
      %c6_i32_384 = arith.constant 6 : i32
      %565 = arith.addi %318, %c6_i32_384 : i32
      %c3_i32_385 = arith.constant 3 : i32
      %566 = arith.addi %565, %c3_i32_385 : i32
      %567 = arith.index_cast %566 : i32 to index
      %568 = memref.load %arg1[%567] : memref<84xi32, #tpu.memory_space<smem>>
      %569 = arith.index_cast %568 : i32 to index
      %c0_386 = arith.constant 0 : index
      %570 = vector.load %arg13[%569, %c0_386] : memref<24x64xf32, #tpu.memory_space<vmem>>, vector<1x64xf32>
      %c1_387 = arith.constant 1 : index
      %c0_388 = arith.constant 0 : index
      %571 = vector.load %arg17[%c1_387, %c0_388] : memref<8x256xf32, #tpu.memory_space<vmem>>, vector<1x64xf32>
      tpu.vector_store %arg17[%c1_387, %c0_388], %570 {strides = array<i32>} : memref<8x256xf32, #tpu.memory_space<vmem>>, vector<1x64xf32>,
      %c4_i32_389 = arith.constant 4 : i32
      %572 = arith.addi %565, %c4_i32_389 : i32
      %573 = arith.index_cast %572 : i32 to index
      %574 = memref.load %arg1[%573] : memref<84xi32, #tpu.memory_space<smem>>
      %575 = arith.index_cast %574 : i32 to index
      %c0_390 = arith.constant 0 : index
      %576 = vector.load %arg13[%575, %c0_390] : memref<24x64xf32, #tpu.memory_space<vmem>>, vector<1x64xf32>
      %c1_391 = arith.constant 1 : index
      %c64_392 = arith.constant 64 : index
      %577 = vector.load %arg17[%c1_391, %c64_392] : memref<8x256xf32, #tpu.memory_space<vmem>>, vector<1x64xf32>
      tpu.vector_store %arg17[%c1_391, %c64_392], %576 {strides = array<i32>} : memref<8x256xf32, #tpu.memory_space<vmem>>, vector<1x64xf32>,
      %c0_393 = arith.constant 0 : index
      %c128 = arith.constant 128 : index
      %578 = vector.load %arg17[%c0_393, %c128] : memref<8x256xf32, #tpu.memory_space<vmem>>, vector<8x16xf32>
      tpu.vector_store %arg17[%c0_393, %c128], %382 {strides = array<i32>} : memref<8x256xf32, #tpu.memory_space<vmem>>, vector<8x16xf32>,
      %c0_394 = arith.constant 0 : index
      %c0_395 = arith.constant 0 : index
      %579 = vector.load %arg17[%c0_394, %c0_395] : memref<8x256xf32, #tpu.memory_space<vmem>>, vector<8x256xf32>
      %c0_396 = arith.constant 0 : index
      %c0_397 = arith.constant 0 : index
      %580 = vector.load %arg10[%c0_396, %c0_397] : memref<256x160xf32, #tpu.memory_space<vmem>>, vector<256x160xf32>
      %cst_398 = arith.constant dense<0.000000e+00> : vector<8x160xf32>
      %581 = tpu.matmul %579, %580, %cst_398 {dimension_numbers = #tpu.dot_dimension_numbers<[1], [0], [0], [1], [0, 0, 1, 1], [], []>} : vector<8x256xf32>, vector<256x160xf32>, vector<8x160xf32> -> vector<8x160xf32>
      %c0_399 = arith.constant 0 : index
      %c0_400 = arith.constant 0 : index
      %582 = vector.load %arg11[%c0_399, %c0_400] : memref<1x160xf32, #tpu.memory_space<vmem>>, vector<1x160xf32>
      %583 = vector.broadcast %582 : vector<1x160xf32> to vector<8x160xf32>
      %584 = arith.addf %581, %583 : vector<8x160xf32>
      %cst_401 = arith.constant 5.000000e-01 : f32
      %585 = vector.broadcast %cst_401 : f32 to vector<8x160xf32>
      %586 = arith.mulf %585, %584 : vector<8x160xf32>
      %587 = math.tanh %586 : vector<8x160xf32>
      %cst_402 = arith.constant 1.000000e+00 : f32
      %588 = vector.broadcast %cst_402 : f32 to vector<8x160xf32>
      %589 = arith.addf %587, %588 : vector<8x160xf32>
      %cst_403 = arith.constant 5.000000e-01 : f32
      %590 = vector.broadcast %cst_403 : f32 to vector<8x160xf32>
      %591 = arith.mulf %590, %589 : vector<8x160xf32>
      %592 = math.tanh %584 : vector<8x160xf32>
      %c0_404 = arith.constant 0 : index
      %c32_405 = arith.constant 32 : index
      %593 = vector.load %arg17[%c0_404, %c32_405] : memref<8x256xf32, #tpu.memory_space<vmem>>, vector<8x32xf32>
      %c0_406 = arith.constant 0 : index
      %c96_407 = arith.constant 96 : index
      %594 = vector.load %arg17[%c0_406, %c96_407] : memref<8x256xf32, #tpu.memory_space<vmem>>, vector<8x32xf32>
      %595 = vector.extract_strided_slice %592 {offsets = [0, 0], sizes = [8, 32], strides = [1, 1]} : vector<8x160xf32> to vector<8x32xf32>
      %596 = vector.extract_strided_slice %591 {offsets = [0, 32], sizes = [8, 32], strides = [1, 1]} : vector<8x160xf32> to vector<8x32xf32>
      %597 = arith.mulf %595, %596 : vector<8x32xf32>
      %598 = vector.extract_strided_slice %591 {offsets = [0, 64], sizes = [8, 32], strides = [1, 1]} : vector<8x160xf32> to vector<8x32xf32>
      %599 = arith.mulf %598, %593 : vector<8x32xf32>
      %600 = arith.addf %597, %599 : vector<8x32xf32>
      %601 = vector.extract_strided_slice %591 {offsets = [0, 96], sizes = [8, 32], strides = [1, 1]} : vector<8x160xf32> to vector<8x32xf32>
      %602 = arith.mulf %601, %594 : vector<8x32xf32>
      %603 = arith.addf %600, %602 : vector<8x32xf32>
      %604 = vector.extract_strided_slice %591 {offsets = [0, 128], sizes = [8, 32], strides = [1, 1]} : vector<8x160xf32> to vector<8x32xf32>
      %605 = math.tanh %603 : vector<8x32xf32>
      %606 = arith.mulf %604, %605 : vector<8x32xf32>
      %607 = tpu.concatenate %606, %603 in 1 : vector<8x32xf32>, vector<8x32xf32> -> vector<8x64xf32>
      %c0_i32_408 = arith.constant 0 : i32
      %608 = arith.addi %318, %c0_i32_408 : i32
      %609 = vector.extract_strided_slice %607 {offsets = [0, 0], sizes = [1, 64], strides = [1, 1]} : vector<8x64xf32> to vector<1x64xf32>
      %c5_i32_409 = arith.constant 5 : i32
      %610 = arith.addi %608, %c5_i32_409 : i32
      %611 = arith.index_cast %610 : i32 to index
      %612 = memref.load %arg1[%611] : memref<84xi32, #tpu.memory_space<smem>>
      %613 = arith.index_cast %612 : i32 to index
      %c0_410 = arith.constant 0 : index
      %614 = vector.load %arg13[%613, %c0_410] : memref<24x64xf32, #tpu.memory_space<vmem>>, vector<1x64xf32>
      tpu.vector_store %arg13[%613, %c0_410], %609 {strides = array<i32>} : memref<24x64xf32, #tpu.memory_space<vmem>>, vector<1x64xf32>,
      %c6_i32_411 = arith.constant 6 : i32
      %615 = arith.addi %318, %c6_i32_411 : i32
      %616 = vector.extract_strided_slice %607 {offsets = [1, 0], sizes = [1, 64], strides = [1, 1]} : vector<8x64xf32> to vector<1x64xf32>
      %c5_i32_412 = arith.constant 5 : i32
      %617 = arith.addi %615, %c5_i32_412 : i32
      %618 = arith.index_cast %617 : i32 to index
      %619 = memref.load %arg1[%618] : memref<84xi32, #tpu.memory_space<smem>>
      %620 = arith.index_cast %619 : i32 to index
      %c0_413 = arith.constant 0 : index
      %621 = vector.load %arg13[%620, %c0_413] : memref<24x64xf32, #tpu.memory_space<vmem>>, vector<1x64xf32>
      tpu.vector_store %arg13[%620, %c0_413], %616 {strides = array<i32>} : memref<24x64xf32, #tpu.memory_space<vmem>>, vector<1x64xf32>,
    } else {
    }
    %c5_i32 = arith.constant 5 : i32
    %c12_i32_265 = arith.constant 12 : i32
    %390 = arith.muli %c5_i32, %c12_i32_265 : i32
    %c0_i32_266 = arith.constant 0 : i32
    %391 = arith.addi %390, %c0_i32_266 : i32
    %c0_i32_267 = arith.constant 0 : i32
    %392 = arith.addi %391, %c0_i32_267 : i32
    %393 = arith.index_cast %392 : i32 to index
    %394 = memref.load %arg1[%393] : memref<84xi32, #tpu.memory_space<smem>>
    %395 = arith.index_cast %394 : i32 to index
    %c0_268 = arith.constant 0 : index
    %396 = vector.load %arg13[%395, %c0_268] : memref<24x64xf32, #tpu.memory_space<vmem>>, vector<1x32xf32>
    %c0_269 = arith.constant 0 : index
    %c0_270 = arith.constant 0 : index
    %397 = vector.load %arg16[%c0_269, %c0_270] : memref<8x128xf32, #tpu.memory_space<vmem>>, vector<1x32xf32>
    tpu.vector_store %arg16[%c0_269, %c0_270], %396 {strides = array<i32>} : memref<8x128xf32, #tpu.memory_space<vmem>>, vector<1x32xf32>,
    %c1_i32_271 = arith.constant 1 : i32
    %398 = arith.addi %391, %c1_i32_271 : i32
    %399 = arith.index_cast %398 : i32 to index
    %400 = memref.load %arg1[%399] : memref<84xi32, #tpu.memory_space<smem>>
    %401 = arith.index_cast %400 : i32 to index
    %c0_272 = arith.constant 0 : index
    %402 = vector.load %arg13[%401, %c0_272] : memref<24x64xf32, #tpu.memory_space<vmem>>, vector<1x32xf32>
    %c0_273 = arith.constant 0 : index
    %c32_274 = arith.constant 32 : index
    %403 = vector.load %arg16[%c0_273, %c32_274] : memref<8x128xf32, #tpu.memory_space<vmem>>, vector<1x32xf32>
    tpu.vector_store %arg16[%c0_273, %c32_274], %402 {strides = array<i32>} : memref<8x128xf32, #tpu.memory_space<vmem>>, vector<1x32xf32>,
    %c2_i32_275 = arith.constant 2 : i32
    %404 = arith.addi %391, %c2_i32_275 : i32
    %405 = arith.index_cast %404 : i32 to index
    %406 = memref.load %arg1[%405] : memref<84xi32, #tpu.memory_space<smem>>
    %407 = arith.index_cast %406 : i32 to index
    %c0_276 = arith.constant 0 : index
    %408 = vector.load %arg13[%407, %c0_276] : memref<24x64xf32, #tpu.memory_space<vmem>>, vector<1x32xf32>
    %c0_277 = arith.constant 0 : index
    %c64_278 = arith.constant 64 : index
    %409 = vector.load %arg16[%c0_277, %c64_278] : memref<8x128xf32, #tpu.memory_space<vmem>>, vector<1x32xf32>
    tpu.vector_store %arg16[%c0_277, %c64_278], %408 {strides = array<i32>} : memref<8x128xf32, #tpu.memory_space<vmem>>, vector<1x32xf32>,
    %c6_i32_279 = arith.constant 6 : i32
    %410 = arith.addi %390, %c6_i32_279 : i32
    %c0_i32_280 = arith.constant 0 : i32
    %411 = arith.addi %410, %c0_i32_280 : i32
    %412 = arith.index_cast %411 : i32 to index
    %413 = memref.load %arg1[%412] : memref<84xi32, #tpu.memory_space<smem>>
    %414 = arith.index_cast %413 : i32 to index
    %c0_281 = arith.constant 0 : index
    %415 = vector.load %arg13[%414, %c0_281] : memref<24x64xf32, #tpu.memory_space<vmem>>, vector<1x32xf32>
    %c1_282 = arith.constant 1 : index
    %c0_283 = arith.constant 0 : index
    %416 = vector.load %arg16[%c1_282, %c0_283] : memref<8x128xf32, #tpu.memory_space<vmem>>, vector<1x32xf32>
    tpu.vector_store %arg16[%c1_282, %c0_283], %415 {strides = array<i32>} : memref<8x128xf32, #tpu.memory_space<vmem>>, vector<1x32xf32>,
    %c1_i32_284 = arith.constant 1 : i32
    %417 = arith.addi %410, %c1_i32_284 : i32
    %418 = arith.index_cast %417 : i32 to index
    %419 = memref.load %arg1[%418] : memref<84xi32, #tpu.memory_space<smem>>
    %420 = arith.index_cast %419 : i32 to index
    %c0_285 = arith.constant 0 : index
    %421 = vector.load %arg13[%420, %c0_285] : memref<24x64xf32, #tpu.memory_space<vmem>>, vector<1x32xf32>
    %c1_286 = arith.constant 1 : index
    %c32_287 = arith.constant 32 : index
    %422 = vector.load %arg16[%c1_286, %c32_287] : memref<8x128xf32, #tpu.memory_space<vmem>>, vector<1x32xf32>
    tpu.vector_store %arg16[%c1_286, %c32_287], %421 {strides = array<i32>} : memref<8x128xf32, #tpu.memory_space<vmem>>, vector<1x32xf32>,
    %c2_i32_288 = arith.constant 2 : i32
    %423 = arith.addi %410, %c2_i32_288 : i32
    %424 = arith.index_cast %423 : i32 to index
    %425 = memref.load %arg1[%424] : memref<84xi32, #tpu.memory_space<smem>>
    %426 = arith.index_cast %425 : i32 to index
    %c0_289 = arith.constant 0 : index
    %427 = vector.load %arg13[%426, %c0_289] : memref<24x64xf32, #tpu.memory_space<vmem>>, vector<1x32xf32>
    %c1_290 = arith.constant 1 : index
    %c64_291 = arith.constant 64 : index
    %428 = vector.load %arg16[%c1_290, %c64_291] : memref<8x128xf32, #tpu.memory_space<vmem>>, vector<1x32xf32>
    tpu.vector_store %arg16[%c1_290, %c64_291], %427 {strides = array<i32>} : memref<8x128xf32, #tpu.memory_space<vmem>>, vector<1x32xf32>,
    %c0_292 = arith.constant 0 : index
    %c0_293 = arith.constant 0 : index
    %429 = vector.load %arg14[%c0_292, %c0_293] : memref<8x16xf32, #tpu.memory_space<vmem>>, vector<8x16xf32>
    %c0_294 = arith.constant 0 : index
    %c96_295 = arith.constant 96 : index
    %430 = vector.load %arg16[%c0_294, %c96_295] : memref<8x128xf32, #tpu.memory_space<vmem>>, vector<8x16xf32>
    tpu.vector_store %arg16[%c0_294, %c96_295], %429 {strides = array<i32>} : memref<8x128xf32, #tpu.memory_space<vmem>>, vector<8x16xf32>,
    %c0_296 = arith.constant 0 : index
    %c0_297 = arith.constant 0 : index
    %431 = vector.load %arg16[%c0_296, %c0_297] : memref<8x128xf32, #tpu.memory_space<vmem>>, vector<8x128xf32>
    %c0_298 = arith.constant 0 : index
    %c0_299 = arith.constant 0 : index
    %432 = vector.load %arg8[%c0_298, %c0_299] : memref<128x64xf32, #tpu.memory_space<vmem>>, vector<128x64xf32>
    %cst_300 = arith.constant dense<0.000000e+00> : vector<8x64xf32>
    %433 = tpu.matmul %431, %432, %cst_300 {dimension_numbers = #tpu.dot_dimension_numbers<[1], [0], [0], [1], [0, 0, 1, 1], [], []>} : vector<8x128xf32>, vector<128x64xf32>, vector<8x64xf32> -> vector<8x64xf32>
    %c0_301 = arith.constant 0 : index
    %c0_302 = arith.constant 0 : index
    %434 = vector.load %arg9[%c0_301, %c0_302] : memref<1x64xf32, #tpu.memory_space<vmem>>, vector<1x64xf32>
    %435 = vector.broadcast %434 : vector<1x64xf32> to vector<8x64xf32>
    %436 = arith.addf %433, %435 : vector<8x64xf32>
    %cst_303 = arith.constant 5.000000e-01 : f32
    %437 = vector.broadcast %cst_303 : f32 to vector<8x64xf32>
    %438 = arith.mulf %437, %436 : vector<8x64xf32>
    %439 = math.tanh %438 : vector<8x64xf32>
    %cst_304 = arith.constant 1.000000e+00 : f32
    %440 = vector.broadcast %cst_304 : f32 to vector<8x64xf32>
    %441 = arith.addf %439, %440 : vector<8x64xf32>
    %cst_305 = arith.constant 5.000000e-01 : f32
    %442 = vector.broadcast %cst_305 : f32 to vector<8x64xf32>
    %443 = arith.mulf %442, %441 : vector<8x64xf32>
    %444 = math.tanh %436 : vector<8x64xf32>
    %445 = vector.extract_strided_slice %443 {offsets = [0, 16], sizes = [8, 16], strides = [1, 1]} : vector<8x64xf32> to vector<8x16xf32>
    %c0_306 = arith.constant 0 : index
    %c0_307 = arith.constant 0 : index
    %446 = vector.load %arg15[%c0_306, %c0_307] : memref<8x16xf32, #tpu.memory_space<vmem>>, vector<8x16xf32>
    %447 = arith.mulf %445, %446 : vector<8x16xf32>
    %448 = vector.extract_strided_slice %443 {offsets = [0, 0], sizes = [8, 16], strides = [1, 1]} : vector<8x64xf32> to vector<8x16xf32>
    %449 = vector.extract_strided_slice %444 {offsets = [0, 32], sizes = [8, 16], strides = [1, 1]} : vector<8x64xf32> to vector<8x16xf32>
    %450 = arith.mulf %448, %449 : vector<8x16xf32>
    %451 = arith.addf %447, %450 : vector<8x16xf32>
    %452 = vector.extract_strided_slice %443 {offsets = [0, 48], sizes = [8, 16], strides = [1, 1]} : vector<8x64xf32> to vector<8x16xf32>
    %453 = math.tanh %451 : vector<8x16xf32>
    %454 = arith.mulf %452, %453 : vector<8x16xf32>
    %c0_308 = arith.constant 0 : index
    %c0_309 = arith.constant 0 : index
    %455 = vector.load %arg14[%c0_308, %c0_309] : memref<8x16xf32, #tpu.memory_space<vmem>>, vector<8x16xf32>
    tpu.vector_store %arg14[%c0_308, %c0_309], %454 {strides = array<i32>} : memref<8x16xf32, #tpu.memory_space<vmem>>, vector<8x16xf32>,
    %c0_310 = arith.constant 0 : index
    %c0_311 = arith.constant 0 : index
    %456 = vector.load %arg15[%c0_310, %c0_311] : memref<8x16xf32, #tpu.memory_space<vmem>>, vector<8x16xf32>
    tpu.vector_store %arg15[%c0_310, %c0_311], %451 {strides = array<i32>} : memref<8x16xf32, #tpu.memory_space<vmem>>, vector<8x16xf32>,
    %457 = arith.index_cast %c5_i32 : i32 to index
    %458 = memref.load %arg2[%457] : memref<7xi32, #tpu.memory_space<smem>>
    %c0_i32_312 = arith.constant 0 : i32
    %459 = arith.cmpi sgt, %458, %c0_i32_312 : i32
    %460 = arith.extui %459 : i1 to i32
    %c0_i32_313 = arith.constant 0 : i32
    %461 = arith.cmpi ne, %460, %c0_i32_313 : i32
    scf.if %461 {
      %c0_i32_375 = arith.constant 0 : i32
      %552 = arith.addi %390, %c0_i32_375 : i32
      %c3_i32_376 = arith.constant 3 : i32
      %553 = arith.addi %552, %c3_i32_376 : i32
      %554 = arith.index_cast %553 : i32 to index
      %555 = memref.load %arg1[%554] : memref<84xi32, #tpu.memory_space<smem>>
      %556 = arith.index_cast %555 : i32 to index
      %c0_377 = arith.constant 0 : index
      %557 = vector.load %arg13[%556, %c0_377] : memref<24x64xf32, #tpu.memory_space<vmem>>, vector<1x64xf32>
      %c0_378 = arith.constant 0 : index
      %c0_379 = arith.constant 0 : index
      %558 = vector.load %arg17[%c0_378, %c0_379] : memref<8x256xf32, #tpu.memory_space<vmem>>, vector<1x64xf32>
      tpu.vector_store %arg17[%c0_378, %c0_379], %557 {strides = array<i32>} : memref<8x256xf32, #tpu.memory_space<vmem>>, vector<1x64xf32>,
      %c4_i32_380 = arith.constant 4 : i32
      %559 = arith.addi %552, %c4_i32_380 : i32
      %560 = arith.index_cast %559 : i32 to index
      %561 = memref.load %arg1[%560] : memref<84xi32, #tpu.memory_space<smem>>
      %562 = arith.index_cast %561 : i32 to index
      %c0_381 = arith.constant 0 : index
      %563 = vector.load %arg13[%562, %c0_381] : memref<24x64xf32, #tpu.memory_space<vmem>>, vector<1x64xf32>
      %c0_382 = arith.constant 0 : index
      %c64_383 = arith.constant 64 : index
      %564 = vector.load %arg17[%c0_382, %c64_383] : memref<8x256xf32, #tpu.memory_space<vmem>>, vector<1x64xf32>
      tpu.vector_store %arg17[%c0_382, %c64_383], %563 {strides = array<i32>} : memref<8x256xf32, #tpu.memory_space<vmem>>, vector<1x64xf32>,
      %c6_i32_384 = arith.constant 6 : i32
      %565 = arith.addi %390, %c6_i32_384 : i32
      %c3_i32_385 = arith.constant 3 : i32
      %566 = arith.addi %565, %c3_i32_385 : i32
      %567 = arith.index_cast %566 : i32 to index
      %568 = memref.load %arg1[%567] : memref<84xi32, #tpu.memory_space<smem>>
      %569 = arith.index_cast %568 : i32 to index
      %c0_386 = arith.constant 0 : index
      %570 = vector.load %arg13[%569, %c0_386] : memref<24x64xf32, #tpu.memory_space<vmem>>, vector<1x64xf32>
      %c1_387 = arith.constant 1 : index
      %c0_388 = arith.constant 0 : index
      %571 = vector.load %arg17[%c1_387, %c0_388] : memref<8x256xf32, #tpu.memory_space<vmem>>, vector<1x64xf32>
      tpu.vector_store %arg17[%c1_387, %c0_388], %570 {strides = array<i32>} : memref<8x256xf32, #tpu.memory_space<vmem>>, vector<1x64xf32>,
      %c4_i32_389 = arith.constant 4 : i32
      %572 = arith.addi %565, %c4_i32_389 : i32
      %573 = arith.index_cast %572 : i32 to index
      %574 = memref.load %arg1[%573] : memref<84xi32, #tpu.memory_space<smem>>
      %575 = arith.index_cast %574 : i32 to index
      %c0_390 = arith.constant 0 : index
      %576 = vector.load %arg13[%575, %c0_390] : memref<24x64xf32, #tpu.memory_space<vmem>>, vector<1x64xf32>
      %c1_391 = arith.constant 1 : index
      %c64_392 = arith.constant 64 : index
      %577 = vector.load %arg17[%c1_391, %c64_392] : memref<8x256xf32, #tpu.memory_space<vmem>>, vector<1x64xf32>
      tpu.vector_store %arg17[%c1_391, %c64_392], %576 {strides = array<i32>} : memref<8x256xf32, #tpu.memory_space<vmem>>, vector<1x64xf32>,
      %c0_393 = arith.constant 0 : index
      %c128 = arith.constant 128 : index
      %578 = vector.load %arg17[%c0_393, %c128] : memref<8x256xf32, #tpu.memory_space<vmem>>, vector<8x16xf32>
      tpu.vector_store %arg17[%c0_393, %c128], %454 {strides = array<i32>} : memref<8x256xf32, #tpu.memory_space<vmem>>, vector<8x16xf32>,
      %c0_394 = arith.constant 0 : index
      %c0_395 = arith.constant 0 : index
      %579 = vector.load %arg17[%c0_394, %c0_395] : memref<8x256xf32, #tpu.memory_space<vmem>>, vector<8x256xf32>
      %c0_396 = arith.constant 0 : index
      %c0_397 = arith.constant 0 : index
      %580 = vector.load %arg10[%c0_396, %c0_397] : memref<256x160xf32, #tpu.memory_space<vmem>>, vector<256x160xf32>
      %cst_398 = arith.constant dense<0.000000e+00> : vector<8x160xf32>
      %581 = tpu.matmul %579, %580, %cst_398 {dimension_numbers = #tpu.dot_dimension_numbers<[1], [0], [0], [1], [0, 0, 1, 1], [], []>} : vector<8x256xf32>, vector<256x160xf32>, vector<8x160xf32> -> vector<8x160xf32>
      %c0_399 = arith.constant 0 : index
      %c0_400 = arith.constant 0 : index
      %582 = vector.load %arg11[%c0_399, %c0_400] : memref<1x160xf32, #tpu.memory_space<vmem>>, vector<1x160xf32>
      %583 = vector.broadcast %582 : vector<1x160xf32> to vector<8x160xf32>
      %584 = arith.addf %581, %583 : vector<8x160xf32>
      %cst_401 = arith.constant 5.000000e-01 : f32
      %585 = vector.broadcast %cst_401 : f32 to vector<8x160xf32>
      %586 = arith.mulf %585, %584 : vector<8x160xf32>
      %587 = math.tanh %586 : vector<8x160xf32>
      %cst_402 = arith.constant 1.000000e+00 : f32
      %588 = vector.broadcast %cst_402 : f32 to vector<8x160xf32>
      %589 = arith.addf %587, %588 : vector<8x160xf32>
      %cst_403 = arith.constant 5.000000e-01 : f32
      %590 = vector.broadcast %cst_403 : f32 to vector<8x160xf32>
      %591 = arith.mulf %590, %589 : vector<8x160xf32>
      %592 = math.tanh %584 : vector<8x160xf32>
      %c0_404 = arith.constant 0 : index
      %c32_405 = arith.constant 32 : index
      %593 = vector.load %arg17[%c0_404, %c32_405] : memref<8x256xf32, #tpu.memory_space<vmem>>, vector<8x32xf32>
      %c0_406 = arith.constant 0 : index
      %c96_407 = arith.constant 96 : index
      %594 = vector.load %arg17[%c0_406, %c96_407] : memref<8x256xf32, #tpu.memory_space<vmem>>, vector<8x32xf32>
      %595 = vector.extract_strided_slice %592 {offsets = [0, 0], sizes = [8, 32], strides = [1, 1]} : vector<8x160xf32> to vector<8x32xf32>
      %596 = vector.extract_strided_slice %591 {offsets = [0, 32], sizes = [8, 32], strides = [1, 1]} : vector<8x160xf32> to vector<8x32xf32>
      %597 = arith.mulf %595, %596 : vector<8x32xf32>
      %598 = vector.extract_strided_slice %591 {offsets = [0, 64], sizes = [8, 32], strides = [1, 1]} : vector<8x160xf32> to vector<8x32xf32>
      %599 = arith.mulf %598, %593 : vector<8x32xf32>
      %600 = arith.addf %597, %599 : vector<8x32xf32>
      %601 = vector.extract_strided_slice %591 {offsets = [0, 96], sizes = [8, 32], strides = [1, 1]} : vector<8x160xf32> to vector<8x32xf32>
      %602 = arith.mulf %601, %594 : vector<8x32xf32>
      %603 = arith.addf %600, %602 : vector<8x32xf32>
      %604 = vector.extract_strided_slice %591 {offsets = [0, 128], sizes = [8, 32], strides = [1, 1]} : vector<8x160xf32> to vector<8x32xf32>
      %605 = math.tanh %603 : vector<8x32xf32>
      %606 = arith.mulf %604, %605 : vector<8x32xf32>
      %607 = tpu.concatenate %606, %603 in 1 : vector<8x32xf32>, vector<8x32xf32> -> vector<8x64xf32>
      %c0_i32_408 = arith.constant 0 : i32
      %608 = arith.addi %390, %c0_i32_408 : i32
      %609 = vector.extract_strided_slice %607 {offsets = [0, 0], sizes = [1, 64], strides = [1, 1]} : vector<8x64xf32> to vector<1x64xf32>
      %c5_i32_409 = arith.constant 5 : i32
      %610 = arith.addi %608, %c5_i32_409 : i32
      %611 = arith.index_cast %610 : i32 to index
      %612 = memref.load %arg1[%611] : memref<84xi32, #tpu.memory_space<smem>>
      %613 = arith.index_cast %612 : i32 to index
      %c0_410 = arith.constant 0 : index
      %614 = vector.load %arg13[%613, %c0_410] : memref<24x64xf32, #tpu.memory_space<vmem>>, vector<1x64xf32>
      tpu.vector_store %arg13[%613, %c0_410], %609 {strides = array<i32>} : memref<24x64xf32, #tpu.memory_space<vmem>>, vector<1x64xf32>,
      %c6_i32_411 = arith.constant 6 : i32
      %615 = arith.addi %390, %c6_i32_411 : i32
      %616 = vector.extract_strided_slice %607 {offsets = [1, 0], sizes = [1, 64], strides = [1, 1]} : vector<8x64xf32> to vector<1x64xf32>
      %c5_i32_412 = arith.constant 5 : i32
      %617 = arith.addi %615, %c5_i32_412 : i32
      %618 = arith.index_cast %617 : i32 to index
      %619 = memref.load %arg1[%618] : memref<84xi32, #tpu.memory_space<smem>>
      %620 = arith.index_cast %619 : i32 to index
      %c0_413 = arith.constant 0 : index
      %621 = vector.load %arg13[%620, %c0_413] : memref<24x64xf32, #tpu.memory_space<vmem>>, vector<1x64xf32>
      tpu.vector_store %arg13[%620, %c0_413], %616 {strides = array<i32>} : memref<24x64xf32, #tpu.memory_space<vmem>>, vector<1x64xf32>,
    } else {
    }
    %c6_i32_314 = arith.constant 6 : i32
    %c12_i32_315 = arith.constant 12 : i32
    %462 = arith.muli %c6_i32_314, %c12_i32_315 : i32
    %c0_i32_316 = arith.constant 0 : i32
    %463 = arith.addi %462, %c0_i32_316 : i32
    %c0_i32_317 = arith.constant 0 : i32
    %464 = arith.addi %463, %c0_i32_317 : i32
    %465 = arith.index_cast %464 : i32 to index
    %466 = memref.load %arg1[%465] : memref<84xi32, #tpu.memory_space<smem>>
    %467 = arith.index_cast %466 : i32 to index
    %c0_318 = arith.constant 0 : index
    %468 = vector.load %arg13[%467, %c0_318] : memref<24x64xf32, #tpu.memory_space<vmem>>, vector<1x32xf32>
    %c0_319 = arith.constant 0 : index
    %c0_320 = arith.constant 0 : index
    %469 = vector.load %arg16[%c0_319, %c0_320] : memref<8x128xf32, #tpu.memory_space<vmem>>, vector<1x32xf32>
    tpu.vector_store %arg16[%c0_319, %c0_320], %468 {strides = array<i32>} : memref<8x128xf32, #tpu.memory_space<vmem>>, vector<1x32xf32>,
    %c1_i32_321 = arith.constant 1 : i32
    %470 = arith.addi %463, %c1_i32_321 : i32
    %471 = arith.index_cast %470 : i32 to index
    %472 = memref.load %arg1[%471] : memref<84xi32, #tpu.memory_space<smem>>
    %473 = arith.index_cast %472 : i32 to index
    %c0_322 = arith.constant 0 : index
    %474 = vector.load %arg13[%473, %c0_322] : memref<24x64xf32, #tpu.memory_space<vmem>>, vector<1x32xf32>
    %c0_323 = arith.constant 0 : index
    %c32_324 = arith.constant 32 : index
    %475 = vector.load %arg16[%c0_323, %c32_324] : memref<8x128xf32, #tpu.memory_space<vmem>>, vector<1x32xf32>
    tpu.vector_store %arg16[%c0_323, %c32_324], %474 {strides = array<i32>} : memref<8x128xf32, #tpu.memory_space<vmem>>, vector<1x32xf32>,
    %c2_i32_325 = arith.constant 2 : i32
    %476 = arith.addi %463, %c2_i32_325 : i32
    %477 = arith.index_cast %476 : i32 to index
    %478 = memref.load %arg1[%477] : memref<84xi32, #tpu.memory_space<smem>>
    %479 = arith.index_cast %478 : i32 to index
    %c0_326 = arith.constant 0 : index
    %480 = vector.load %arg13[%479, %c0_326] : memref<24x64xf32, #tpu.memory_space<vmem>>, vector<1x32xf32>
    %c0_327 = arith.constant 0 : index
    %c64_328 = arith.constant 64 : index
    %481 = vector.load %arg16[%c0_327, %c64_328] : memref<8x128xf32, #tpu.memory_space<vmem>>, vector<1x32xf32>
    tpu.vector_store %arg16[%c0_327, %c64_328], %480 {strides = array<i32>} : memref<8x128xf32, #tpu.memory_space<vmem>>, vector<1x32xf32>,
    %c6_i32_329 = arith.constant 6 : i32
    %482 = arith.addi %462, %c6_i32_329 : i32
    %c0_i32_330 = arith.constant 0 : i32
    %483 = arith.addi %482, %c0_i32_330 : i32
    %484 = arith.index_cast %483 : i32 to index
    %485 = memref.load %arg1[%484] : memref<84xi32, #tpu.memory_space<smem>>
    %486 = arith.index_cast %485 : i32 to index
    %c0_331 = arith.constant 0 : index
    %487 = vector.load %arg13[%486, %c0_331] : memref<24x64xf32, #tpu.memory_space<vmem>>, vector<1x32xf32>
    %c1_332 = arith.constant 1 : index
    %c0_333 = arith.constant 0 : index
    %488 = vector.load %arg16[%c1_332, %c0_333] : memref<8x128xf32, #tpu.memory_space<vmem>>, vector<1x32xf32>
    tpu.vector_store %arg16[%c1_332, %c0_333], %487 {strides = array<i32>} : memref<8x128xf32, #tpu.memory_space<vmem>>, vector<1x32xf32>,
    %c1_i32_334 = arith.constant 1 : i32
    %489 = arith.addi %482, %c1_i32_334 : i32
    %490 = arith.index_cast %489 : i32 to index
    %491 = memref.load %arg1[%490] : memref<84xi32, #tpu.memory_space<smem>>
    %492 = arith.index_cast %491 : i32 to index
    %c0_335 = arith.constant 0 : index
    %493 = vector.load %arg13[%492, %c0_335] : memref<24x64xf32, #tpu.memory_space<vmem>>, vector<1x32xf32>
    %c1_336 = arith.constant 1 : index
    %c32_337 = arith.constant 32 : index
    %494 = vector.load %arg16[%c1_336, %c32_337] : memref<8x128xf32, #tpu.memory_space<vmem>>, vector<1x32xf32>
    tpu.vector_store %arg16[%c1_336, %c32_337], %493 {strides = array<i32>} : memref<8x128xf32, #tpu.memory_space<vmem>>, vector<1x32xf32>,
    %c2_i32_338 = arith.constant 2 : i32
    %495 = arith.addi %482, %c2_i32_338 : i32
    %496 = arith.index_cast %495 : i32 to index
    %497 = memref.load %arg1[%496] : memref<84xi32, #tpu.memory_space<smem>>
    %498 = arith.index_cast %497 : i32 to index
    %c0_339 = arith.constant 0 : index
    %499 = vector.load %arg13[%498, %c0_339] : memref<24x64xf32, #tpu.memory_space<vmem>>, vector<1x32xf32>
    %c1_340 = arith.constant 1 : index
    %c64_341 = arith.constant 64 : index
    %500 = vector.load %arg16[%c1_340, %c64_341] : memref<8x128xf32, #tpu.memory_space<vmem>>, vector<1x32xf32>
    tpu.vector_store %arg16[%c1_340, %c64_341], %499 {strides = array<i32>} : memref<8x128xf32, #tpu.memory_space<vmem>>, vector<1x32xf32>,
    %c0_342 = arith.constant 0 : index
    %c0_343 = arith.constant 0 : index
    %501 = vector.load %arg14[%c0_342, %c0_343] : memref<8x16xf32, #tpu.memory_space<vmem>>, vector<8x16xf32>
    %c0_344 = arith.constant 0 : index
    %c96_345 = arith.constant 96 : index
    %502 = vector.load %arg16[%c0_344, %c96_345] : memref<8x128xf32, #tpu.memory_space<vmem>>, vector<8x16xf32>
    tpu.vector_store %arg16[%c0_344, %c96_345], %501 {strides = array<i32>} : memref<8x128xf32, #tpu.memory_space<vmem>>, vector<8x16xf32>,
    %c0_346 = arith.constant 0 : index
    %c0_347 = arith.constant 0 : index
    %503 = vector.load %arg16[%c0_346, %c0_347] : memref<8x128xf32, #tpu.memory_space<vmem>>, vector<8x128xf32>
    %c0_348 = arith.constant 0 : index
    %c0_349 = arith.constant 0 : index
    %504 = vector.load %arg8[%c0_348, %c0_349] : memref<128x64xf32, #tpu.memory_space<vmem>>, vector<128x64xf32>
    %cst_350 = arith.constant dense<0.000000e+00> : vector<8x64xf32>
    %505 = tpu.matmul %503, %504, %cst_350 {dimension_numbers = #tpu.dot_dimension_numbers<[1], [0], [0], [1], [0, 0, 1, 1], [], []>} : vector<8x128xf32>, vector<128x64xf32>, vector<8x64xf32> -> vector<8x64xf32>
    %c0_351 = arith.constant 0 : index
    %c0_352 = arith.constant 0 : index
    %506 = vector.load %arg9[%c0_351, %c0_352] : memref<1x64xf32, #tpu.memory_space<vmem>>, vector<1x64xf32>
    %507 = vector.broadcast %506 : vector<1x64xf32> to vector<8x64xf32>
    %508 = arith.addf %505, %507 : vector<8x64xf32>
    %cst_353 = arith.constant 5.000000e-01 : f32
    %509 = vector.broadcast %cst_353 : f32 to vector<8x64xf32>
    %510 = arith.mulf %509, %508 : vector<8x64xf32>
    %511 = math.tanh %510 : vector<8x64xf32>
    %cst_354 = arith.constant 1.000000e+00 : f32
    %512 = vector.broadcast %cst_354 : f32 to vector<8x64xf32>
    %513 = arith.addf %511, %512 : vector<8x64xf32>
    %cst_355 = arith.constant 5.000000e-01 : f32
    %514 = vector.broadcast %cst_355 : f32 to vector<8x64xf32>
    %515 = arith.mulf %514, %513 : vector<8x64xf32>
    %516 = math.tanh %508 : vector<8x64xf32>
    %517 = vector.extract_strided_slice %515 {offsets = [0, 16], sizes = [8, 16], strides = [1, 1]} : vector<8x64xf32> to vector<8x16xf32>
    %c0_356 = arith.constant 0 : index
    %c0_357 = arith.constant 0 : index
    %518 = vector.load %arg15[%c0_356, %c0_357] : memref<8x16xf32, #tpu.memory_space<vmem>>, vector<8x16xf32>
    %519 = arith.mulf %517, %518 : vector<8x16xf32>
    %520 = vector.extract_strided_slice %515 {offsets = [0, 0], sizes = [8, 16], strides = [1, 1]} : vector<8x64xf32> to vector<8x16xf32>
    %521 = vector.extract_strided_slice %516 {offsets = [0, 32], sizes = [8, 16], strides = [1, 1]} : vector<8x64xf32> to vector<8x16xf32>
    %522 = arith.mulf %520, %521 : vector<8x16xf32>
    %523 = arith.addf %519, %522 : vector<8x16xf32>
    %524 = vector.extract_strided_slice %515 {offsets = [0, 48], sizes = [8, 16], strides = [1, 1]} : vector<8x64xf32> to vector<8x16xf32>
    %525 = math.tanh %523 : vector<8x16xf32>
    %526 = arith.mulf %524, %525 : vector<8x16xf32>
    %c0_358 = arith.constant 0 : index
    %c0_359 = arith.constant 0 : index
    %527 = vector.load %arg14[%c0_358, %c0_359] : memref<8x16xf32, #tpu.memory_space<vmem>>, vector<8x16xf32>
    tpu.vector_store %arg14[%c0_358, %c0_359], %526 {strides = array<i32>} : memref<8x16xf32, #tpu.memory_space<vmem>>, vector<8x16xf32>,
    %c0_360 = arith.constant 0 : index
    %c0_361 = arith.constant 0 : index
    %528 = vector.load %arg15[%c0_360, %c0_361] : memref<8x16xf32, #tpu.memory_space<vmem>>, vector<8x16xf32>
    tpu.vector_store %arg15[%c0_360, %c0_361], %523 {strides = array<i32>} : memref<8x16xf32, #tpu.memory_space<vmem>>, vector<8x16xf32>,
    %529 = arith.index_cast %c6_i32_314 : i32 to index
    %530 = memref.load %arg2[%529] : memref<7xi32, #tpu.memory_space<smem>>
    %c0_i32_362 = arith.constant 0 : i32
    %531 = arith.cmpi sgt, %530, %c0_i32_362 : i32
    %532 = arith.extui %531 : i1 to i32
    %c0_i32_363 = arith.constant 0 : i32
    %533 = arith.cmpi ne, %532, %c0_i32_363 : i32
    scf.if %533 {
      %c0_i32_375 = arith.constant 0 : i32
      %552 = arith.addi %462, %c0_i32_375 : i32
      %c3_i32_376 = arith.constant 3 : i32
      %553 = arith.addi %552, %c3_i32_376 : i32
      %554 = arith.index_cast %553 : i32 to index
      %555 = memref.load %arg1[%554] : memref<84xi32, #tpu.memory_space<smem>>
      %556 = arith.index_cast %555 : i32 to index
      %c0_377 = arith.constant 0 : index
      %557 = vector.load %arg13[%556, %c0_377] : memref<24x64xf32, #tpu.memory_space<vmem>>, vector<1x64xf32>
      %c0_378 = arith.constant 0 : index
      %c0_379 = arith.constant 0 : index
      %558 = vector.load %arg17[%c0_378, %c0_379] : memref<8x256xf32, #tpu.memory_space<vmem>>, vector<1x64xf32>
      tpu.vector_store %arg17[%c0_378, %c0_379], %557 {strides = array<i32>} : memref<8x256xf32, #tpu.memory_space<vmem>>, vector<1x64xf32>,
      %c4_i32_380 = arith.constant 4 : i32
      %559 = arith.addi %552, %c4_i32_380 : i32
      %560 = arith.index_cast %559 : i32 to index
      %561 = memref.load %arg1[%560] : memref<84xi32, #tpu.memory_space<smem>>
      %562 = arith.index_cast %561 : i32 to index
      %c0_381 = arith.constant 0 : index
      %563 = vector.load %arg13[%562, %c0_381] : memref<24x64xf32, #tpu.memory_space<vmem>>, vector<1x64xf32>
      %c0_382 = arith.constant 0 : index
      %c64_383 = arith.constant 64 : index
      %564 = vector.load %arg17[%c0_382, %c64_383] : memref<8x256xf32, #tpu.memory_space<vmem>>, vector<1x64xf32>
      tpu.vector_store %arg17[%c0_382, %c64_383], %563 {strides = array<i32>} : memref<8x256xf32, #tpu.memory_space<vmem>>, vector<1x64xf32>,
      %c6_i32_384 = arith.constant 6 : i32
      %565 = arith.addi %462, %c6_i32_384 : i32
      %c3_i32_385 = arith.constant 3 : i32
      %566 = arith.addi %565, %c3_i32_385 : i32
      %567 = arith.index_cast %566 : i32 to index
      %568 = memref.load %arg1[%567] : memref<84xi32, #tpu.memory_space<smem>>
      %569 = arith.index_cast %568 : i32 to index
      %c0_386 = arith.constant 0 : index
      %570 = vector.load %arg13[%569, %c0_386] : memref<24x64xf32, #tpu.memory_space<vmem>>, vector<1x64xf32>
      %c1_387 = arith.constant 1 : index
      %c0_388 = arith.constant 0 : index
      %571 = vector.load %arg17[%c1_387, %c0_388] : memref<8x256xf32, #tpu.memory_space<vmem>>, vector<1x64xf32>
      tpu.vector_store %arg17[%c1_387, %c0_388], %570 {strides = array<i32>} : memref<8x256xf32, #tpu.memory_space<vmem>>, vector<1x64xf32>,
      %c4_i32_389 = arith.constant 4 : i32
      %572 = arith.addi %565, %c4_i32_389 : i32
      %573 = arith.index_cast %572 : i32 to index
      %574 = memref.load %arg1[%573] : memref<84xi32, #tpu.memory_space<smem>>
      %575 = arith.index_cast %574 : i32 to index
      %c0_390 = arith.constant 0 : index
      %576 = vector.load %arg13[%575, %c0_390] : memref<24x64xf32, #tpu.memory_space<vmem>>, vector<1x64xf32>
      %c1_391 = arith.constant 1 : index
      %c64_392 = arith.constant 64 : index
      %577 = vector.load %arg17[%c1_391, %c64_392] : memref<8x256xf32, #tpu.memory_space<vmem>>, vector<1x64xf32>
      tpu.vector_store %arg17[%c1_391, %c64_392], %576 {strides = array<i32>} : memref<8x256xf32, #tpu.memory_space<vmem>>, vector<1x64xf32>,
      %c0_393 = arith.constant 0 : index
      %c128 = arith.constant 128 : index
      %578 = vector.load %arg17[%c0_393, %c128] : memref<8x256xf32, #tpu.memory_space<vmem>>, vector<8x16xf32>
      tpu.vector_store %arg17[%c0_393, %c128], %526 {strides = array<i32>} : memref<8x256xf32, #tpu.memory_space<vmem>>, vector<8x16xf32>,
      %c0_394 = arith.constant 0 : index
      %c0_395 = arith.constant 0 : index
      %579 = vector.load %arg17[%c0_394, %c0_395] : memref<8x256xf32, #tpu.memory_space<vmem>>, vector<8x256xf32>
      %c0_396 = arith.constant 0 : index
      %c0_397 = arith.constant 0 : index
      %580 = vector.load %arg10[%c0_396, %c0_397] : memref<256x160xf32, #tpu.memory_space<vmem>>, vector<256x160xf32>
      %cst_398 = arith.constant dense<0.000000e+00> : vector<8x160xf32>
      %581 = tpu.matmul %579, %580, %cst_398 {dimension_numbers = #tpu.dot_dimension_numbers<[1], [0], [0], [1], [0, 0, 1, 1], [], []>} : vector<8x256xf32>, vector<256x160xf32>, vector<8x160xf32> -> vector<8x160xf32>
      %c0_399 = arith.constant 0 : index
      %c0_400 = arith.constant 0 : index
      %582 = vector.load %arg11[%c0_399, %c0_400] : memref<1x160xf32, #tpu.memory_space<vmem>>, vector<1x160xf32>
      %583 = vector.broadcast %582 : vector<1x160xf32> to vector<8x160xf32>
      %584 = arith.addf %581, %583 : vector<8x160xf32>
      %cst_401 = arith.constant 5.000000e-01 : f32
      %585 = vector.broadcast %cst_401 : f32 to vector<8x160xf32>
      %586 = arith.mulf %585, %584 : vector<8x160xf32>
      %587 = math.tanh %586 : vector<8x160xf32>
      %cst_402 = arith.constant 1.000000e+00 : f32
      %588 = vector.broadcast %cst_402 : f32 to vector<8x160xf32>
      %589 = arith.addf %587, %588 : vector<8x160xf32>
      %cst_403 = arith.constant 5.000000e-01 : f32
      %590 = vector.broadcast %cst_403 : f32 to vector<8x160xf32>
      %591 = arith.mulf %590, %589 : vector<8x160xf32>
      %592 = math.tanh %584 : vector<8x160xf32>
      %c0_404 = arith.constant 0 : index
      %c32_405 = arith.constant 32 : index
      %593 = vector.load %arg17[%c0_404, %c32_405] : memref<8x256xf32, #tpu.memory_space<vmem>>, vector<8x32xf32>
      %c0_406 = arith.constant 0 : index
      %c96_407 = arith.constant 96 : index
      %594 = vector.load %arg17[%c0_406, %c96_407] : memref<8x256xf32, #tpu.memory_space<vmem>>, vector<8x32xf32>
      %595 = vector.extract_strided_slice %592 {offsets = [0, 0], sizes = [8, 32], strides = [1, 1]} : vector<8x160xf32> to vector<8x32xf32>
      %596 = vector.extract_strided_slice %591 {offsets = [0, 32], sizes = [8, 32], strides = [1, 1]} : vector<8x160xf32> to vector<8x32xf32>
      %597 = arith.mulf %595, %596 : vector<8x32xf32>
      %598 = vector.extract_strided_slice %591 {offsets = [0, 64], sizes = [8, 32], strides = [1, 1]} : vector<8x160xf32> to vector<8x32xf32>
      %599 = arith.mulf %598, %593 : vector<8x32xf32>
      %600 = arith.addf %597, %599 : vector<8x32xf32>
      %601 = vector.extract_strided_slice %591 {offsets = [0, 96], sizes = [8, 32], strides = [1, 1]} : vector<8x160xf32> to vector<8x32xf32>
      %602 = arith.mulf %601, %594 : vector<8x32xf32>
      %603 = arith.addf %600, %602 : vector<8x32xf32>
      %604 = vector.extract_strided_slice %591 {offsets = [0, 128], sizes = [8, 32], strides = [1, 1]} : vector<8x160xf32> to vector<8x32xf32>
      %605 = math.tanh %603 : vector<8x32xf32>
      %606 = arith.mulf %604, %605 : vector<8x32xf32>
      %607 = tpu.concatenate %606, %603 in 1 : vector<8x32xf32>, vector<8x32xf32> -> vector<8x64xf32>
      %c0_i32_408 = arith.constant 0 : i32
      %608 = arith.addi %462, %c0_i32_408 : i32
      %609 = vector.extract_strided_slice %607 {offsets = [0, 0], sizes = [1, 64], strides = [1, 1]} : vector<8x64xf32> to vector<1x64xf32>
      %c5_i32_409 = arith.constant 5 : i32
      %610 = arith.addi %608, %c5_i32_409 : i32
      %611 = arith.index_cast %610 : i32 to index
      %612 = memref.load %arg1[%611] : memref<84xi32, #tpu.memory_space<smem>>
      %613 = arith.index_cast %612 : i32 to index
      %c0_410 = arith.constant 0 : index
      %614 = vector.load %arg13[%613, %c0_410] : memref<24x64xf32, #tpu.memory_space<vmem>>, vector<1x64xf32>
      tpu.vector_store %arg13[%613, %c0_410], %609 {strides = array<i32>} : memref<24x64xf32, #tpu.memory_space<vmem>>, vector<1x64xf32>,
      %c6_i32_411 = arith.constant 6 : i32
      %615 = arith.addi %462, %c6_i32_411 : i32
      %616 = vector.extract_strided_slice %607 {offsets = [1, 0], sizes = [1, 64], strides = [1, 1]} : vector<8x64xf32> to vector<1x64xf32>
      %c5_i32_412 = arith.constant 5 : i32
      %617 = arith.addi %615, %c5_i32_412 : i32
      %618 = arith.index_cast %617 : i32 to index
      %619 = memref.load %arg1[%618] : memref<84xi32, #tpu.memory_space<smem>>
      %620 = arith.index_cast %619 : i32 to index
      %c0_413 = arith.constant 0 : index
      %621 = vector.load %arg13[%620, %c0_413] : memref<24x64xf32, #tpu.memory_space<vmem>>, vector<1x64xf32>
      tpu.vector_store %arg13[%620, %c0_413], %616 {strides = array<i32>} : memref<24x64xf32, #tpu.memory_space<vmem>>, vector<1x64xf32>,
    } else {
    }
    %c7_i32 = arith.constant 7 : i32
    %c0_364 = arith.constant 0 : index
    %c0_365 = arith.constant 0 : index
    %534 = vector.load %arg13[%c0_364, %c0_365] : memref<24x64xf32, #tpu.memory_space<vmem>>, vector<24x32xf32>
    %c0_366 = arith.constant 0 : index
    %c0_367 = arith.constant 0 : index
    %535 = vector.load %arg6[%c0_366, %c0_367] : memref<32x128xf32, #tpu.memory_space<vmem>>, vector<32x128xf32>
    %cst_368 = arith.constant dense<0.000000e+00> : vector<24x128xf32>
    %536 = tpu.matmul %534, %535, %cst_368 {dimension_numbers = #tpu.dot_dimension_numbers<[1], [0], [0], [1], [0, 0, 1, 1], [], []>} : vector<24x32xf32>, vector<32x128xf32>, vector<24x128xf32> -> vector<24x128xf32>
    %c0_369 = arith.constant 0 : index
    %c0_370 = arith.constant 0 : index
    %537 = vector.load %arg7[%c0_369, %c0_370] : memref<1x128xf32, #tpu.memory_space<vmem>>, vector<1x128xf32>
    %538 = vector.broadcast %537 : vector<1x128xf32> to vector<24x128xf32>
    %539 = arith.addf %536, %538 : vector<24x128xf32>
    %cst_371 = arith.constant dense<0xFF800000> : vector<24xf32>
    %540 = vector.multi_reduction <maximumf>, %539, %cst_371 [1] : vector<24x128xf32> to vector<24xf32>
    %541 = vector.shape_cast %540 : vector<24xf32> to vector<24x1xf32>
    %542 = vector.broadcast %541 : vector<24x1xf32> to vector<24x128xf32>
    %543 = arith.subf %539, %542 : vector<24x128xf32>
    %544 = math.exp %543 : vector<24x128xf32>
    %cst_372 = arith.constant dense<0.000000e+00> : vector<24xf32>
    %545 = vector.multi_reduction <add>, %544, %cst_372 [1] : vector<24x128xf32> to vector<24xf32>
    %546 = vector.shape_cast %545 : vector<24xf32> to vector<24x1xf32>
    %547 = math.log %546 : vector<24x1xf32>
    %548 = arith.addf %547, %541 : vector<24x1xf32>
    %549 = vector.broadcast %548 : vector<24x1xf32> to vector<24x128xf32>
    %550 = arith.subf %539, %549 : vector<24x128xf32>
    %c0_373 = arith.constant 0 : index
    %c0_374 = arith.constant 0 : index
    %551 = vector.load %arg12[%c0_373, %c0_374] : memref<24x128xf32, #tpu.memory_space<vmem>>, vector<24x128xf32>
    tpu.vector_store %arg12[%c0_373, %c0_374], %550 {strides = array<i32>} : memref<24x128xf32, #tpu.memory_space<vmem>>, vector<24x128xf32>,
    return
  }
  func.func @transform_0(%arg0: i32, %arg1: memref<84xi32, #tpu.memory_space<smem>>, %arg2: memref<7xi32, #tpu.memory_space<smem>>) -> (i32, i32) {
    %c0_i32 = arith.constant 0 : i32
    %c0_i32_0 = arith.constant 0 : i32
    %c0_i32_1 = arith.constant 0 : i32
    return %c0_i32, %c0_i32_0 : i32, i32
  }
  func.func @transform_1(%arg0: i32, %arg1: memref<84xi32, #tpu.memory_space<smem>>, %arg2: memref<7xi32, #tpu.memory_space<smem>>) -> (i32, i32) {
    %c0_i32 = arith.constant 0 : i32
    %c0_i32_0 = arith.constant 0 : i32
    %c0_i32_1 = arith.constant 0 : i32
    return %c0_i32, %c0_i32_0 : i32, i32
  }
  func.func @transform_2(%arg0: i32, %arg1: memref<84xi32, #tpu.memory_space<smem>>, %arg2: memref<7xi32, #tpu.memory_space<smem>>) -> (i32, i32) {
    %c0_i32 = arith.constant 0 : i32
    %c0_i32_0 = arith.constant 0 : i32
    %c0_i32_1 = arith.constant 0 : i32
    return %c0_i32, %c0_i32_0 : i32, i32
  }
  func.func @transform_3(%arg0: i32, %arg1: memref<84xi32, #tpu.memory_space<smem>>, %arg2: memref<7xi32, #tpu.memory_space<smem>>) -> (i32, i32) {
    %c0_i32 = arith.constant 0 : i32
    %c0_i32_0 = arith.constant 0 : i32
    %c0_i32_1 = arith.constant 0 : i32
    return %c0_i32, %c0_i32_0 : i32, i32
  }
  func.func @transform_4(%arg0: i32, %arg1: memref<84xi32, #tpu.memory_space<smem>>, %arg2: memref<7xi32, #tpu.memory_space<smem>>) -> (i32, i32) {
    %c0_i32 = arith.constant 0 : i32
    %c0_i32_0 = arith.constant 0 : i32
    %c0_i32_1 = arith.constant 0 : i32
    return %c0_i32, %c0_i32_0 : i32, i32
  }
  func.func @transform_5(%arg0: i32, %arg1: memref<84xi32, #tpu.memory_space<smem>>, %arg2: memref<7xi32, #tpu.memory_space<smem>>) -> (i32, i32) {
    %c0_i32 = arith.constant 0 : i32
    %c0_i32_0 = arith.constant 0 : i32
    %c0_i32_1 = arith.constant 0 : i32
    return %c0_i32, %c0_i32_0 : i32, i32
  }
  func.func @transform_6(%arg0: i32, %arg1: memref<84xi32, #tpu.memory_space<smem>>, %arg2: memref<7xi32, #tpu.memory_space<smem>>) -> (i32, i32) {
    %c0_i32 = arith.constant 0 : i32
    %c0_i32_0 = arith.constant 0 : i32
    %c0_i32_1 = arith.constant 0 : i32
    return %c0_i32, %c0_i32_0 : i32, i32
  }
  func.func @transform_7(%arg0: i32, %arg1: memref<84xi32, #tpu.memory_space<smem>>, %arg2: memref<7xi32, #tpu.memory_space<smem>>) -> (i32, i32) {
    %c0_i32 = arith.constant 0 : i32
    %c0_i32_0 = arith.constant 0 : i32
    %c0_i32_1 = arith.constant 0 : i32
    return %c0_i32, %c0_i32_0 : i32, i32
  }
  func.func @transform_8(%arg0: i32, %arg1: memref<84xi32, #tpu.memory_space<smem>>, %arg2: memref<7xi32, #tpu.memory_space<smem>>) -> (i32, i32) {
    %c0_i32 = arith.constant 0 : i32
    %c0_i32_0 = arith.constant 0 : i32
    %c0_i32_1 = arith.constant 0 : i32
    return %c0_i32, %c0_i32_0 : i32, i32
  }
  func.func @transform_9(%arg0: i32, %arg1: memref<84xi32, #tpu.memory_space<smem>>, %arg2: memref<7xi32, #tpu.memory_space<smem>>) -> (i32, i32) {
    %c0_i32 = arith.constant 0 : i32
    %c0_i32_0 = arith.constant 0 : i32
    %c0_i32_1 = arith.constant 0 : i32
    return %c0_i32, %c0_i32_0 : i32, i32
  }
}

</mosaic_0001>

<llo_original>
// kernel: tpu_custom_call.1
$region0: #{tpu_custom_call.1}
  #allocation0 [shape = 'u32[]', space=smem, size = 0x4, offset = 0x4, fixed_abs, tag = 'smem constant byte address 0x4 - core index']
  #allocation1 [shape = 'u32[144,128]{1,0:T(1,128)}', space=vmem, size = 0x12000, scoped, tag = 'internal scratch']
  #allocation2 [shape = 'f32[24,64]{1,0:T(8,128)}', space=vmem, size = 0x3000, scoped, tag = 'scratch operand']
  #allocation3 [shape = 'f32[8,16]{1,0:T(8,128)}', space=vmem, size = 0x1000, scoped, tag = 'scratch operand']
  #allocation4 [shape = 'f32[8,16]{1,0:T(8,128)}', space=vmem, size = 0x1000, scoped, tag = 'scratch operand']
  #allocation5 [shape = 'f32[8,128]{1,0:T(8,128)}', space=vmem, size = 0x1000, scoped, tag = 'scratch operand']
  #allocation6 [shape = 'f32[8,256]{1,0:T(8,128)}', space=vmem, size = 0x2000, scoped, tag = 'scratch operand']
  #allocation7 [shape = 's32[1]{0}', space=sflag, size = 0x4, scoped, tag = 'scoped memory for tpu_custom_call.1']
  #allocation8 [shape = 'u8[512]{0}', space=smem, size = 0x200, scoped, tag = 'prefetched SMEM operand 0']
  #allocation9 [shape = 'u8[512]{0}', space=smem, size = 0x200, scoped, tag = 'prefetched SMEM operand 1']
  %s0 = inlined_call_operand.vmem [shape: s32[84], index: 0, kind: input, shape index: {}]
  %s1 = inlined_call_operand.vmem [shape: s32[7], index: 1, kind: input, shape index: {}]
  %s2 = inlined_call_operand.vmem [shape: f32[16,16], index: 2, kind: input, shape index: {}]
  %s3 = inlined_call_operand.vmem [shape: f32[16,32], index: 3, kind: input, shape index: {}]
  %s4 = inlined_call_operand.vmem [shape: f32[1,32], index: 4, kind: input, shape index: {}]
  %s5 = inlined_call_operand.vmem [shape: f32[32,128], index: 5, kind: input, shape index: {}]
  %s6 = inlined_call_operand.vmem [shape: f32[1,128], index: 6, kind: input, shape index: {}]
  %s7 = inlined_call_operand.vmem [shape: f32[128,64], index: 7, kind: input, shape index: {}]
  %s8 = inlined_call_operand.vmem [shape: f32[1,64], index: 8, kind: input, shape index: {}]
  %s9 = inlined_call_operand.vmem [shape: f32[256,160], index: 9, kind: input, shape index: {}]
  %s10 = inlined_call_operand.vmem [shape: f32[1,160], index: 10, kind: input, shape index: {}]
  %s11 = inlined_call_operand.hbm [shape: f32[24,128], index: 11, kind: output, shape index: {}]
  %s12 = sld [smem:[#allocation0]]
  $region74: #{tpu_custom_call.1} parent=0
    _
  %s14 = ssub.s32 1, %s12
  %s15 = scalar_select 0, %s14, %s12
  %s16 = sshll.u32 %s0, 4
  %s17 = int_to_ptr.vmem [resolvable:$true] %s16
  %19 = dma.vmem_to_smem %s17, 16, [#allocation8], [#allocation7]
  %s20 = sshll.u32 %s1, 4
  %s21 = int_to_ptr.vmem [resolvable:$true] %s20
  %23 = dma.vmem_to_smem %s21, 16, [#allocation9], [#allocation7]
  %24 = dma.done [#allocation7], 32
  %25 = sfence
  $region1: #{tpu_custom_call.1} parent=0
    #allocation10 [shape = 'u8[12288]{0}', space=vmem, size = 0x3000, scoped, tag = 'output window, operand 0, single buffered']
    #allocation11 [shape = 's32[1]{0}', space=sflag, size = 0x4, scoped, tag = 'scoped memory for tpu_custom_call.1']
    %26 = vsyncpa [#allocation11], 0
    // Predicated region
    $region2: #{tpu_custom_call.1} parent=1 // pred_check
      _
    $region3: #{tpu_custom_call.1} parent=1 // pred_check_branch
      %28 = sbr.rel (0) target = $region5
    $region4: #{tpu_custom_call.1} parent=1 // pred_region
      _
    $region5: #{tpu_custom_call.1} parent=1 // pred_fallthru
      _
    // Predicated region
    $region6: #{tpu_custom_call.1} parent=1 // pred_check
      _
    $region7: #{tpu_custom_call.1} parent=1 // pred_check_branch
      %30 = sbr.rel (0) target = $region9
    $region8: #{tpu_custom_call.1} parent=1 // pred_region
      _
    $region9: #{tpu_custom_call.1} parent=1 // pred_fallthru
      _
    // Predicated region
    $region10: #{tpu_custom_call.1} parent=1 // pred_check
      _
    $region11: #{tpu_custom_call.1} parent=1 // pred_check_branch
      %32 = sbr.rel (0) target = $region13
    $region12: #{tpu_custom_call.1} parent=1 // pred_region
      _
    $region13: #{tpu_custom_call.1} parent=1 // pred_fallthru
      _
    // Predicated region
    $region14: #{tpu_custom_call.1} parent=1 // pred_check
      _
    $region15: #{tpu_custom_call.1} parent=1 // pred_check_branch
      %34 = sbr.rel (0) target = $region17
    $region16: #{tpu_custom_call.1} parent=1 // pred_region
      _
    $region17: #{tpu_custom_call.1} parent=1 // pred_fallthru
      _
    // Predicated region
    $region18: #{tpu_custom_call.1} parent=1 // pred_check
      _
    $region19: #{tpu_custom_call.1} parent=1 // pred_check_branch
      %36 = sbr.rel (0) target = $region21
    $region20: #{tpu_custom_call.1} parent=1 // pred_region
      _
    $region21: #{tpu_custom_call.1} parent=1 // pred_fallthru
      _
    // Predicated region
    $region22: #{tpu_custom_call.1} parent=1 // pred_check
      _
    $region23: #{tpu_custom_call.1} parent=1 // pred_check_branch
      %38 = sbr.rel (0) target = $region25
    $region24: #{tpu_custom_call.1} parent=1 // pred_region
      _
    $region25: #{tpu_custom_call.1} parent=1 // pred_fallthru
      _
    // Predicated region
    $region26: #{tpu_custom_call.1} parent=1 // pred_check
      _
    $region27: #{tpu_custom_call.1} parent=1 // pred_check_branch
      %40 = sbr.rel (0) target = $region29
    $region28: #{tpu_custom_call.1} parent=1 // pred_region
      _
    $region29: #{tpu_custom_call.1} parent=1 // pred_fallthru
      _
    // Predicated region
    $region30: #{tpu_custom_call.1} parent=1 // pred_check
      _
    $region31: #{tpu_custom_call.1} parent=1 // pred_check_branch
      %42 = sbr.rel (0) target = $region33
    $region32: #{tpu_custom_call.1} parent=1 // pred_region
      _
    $region33: #{tpu_custom_call.1} parent=1 // pred_fallthru
      _
    // Predicated region
    $region34: #{tpu_custom_call.1} parent=1 // pred_check
      _
    $region35: #{tpu_custom_call.1} parent=1 // pred_check_branch
      %44 = sbr.rel (0) target = $region37
    $region36: #{tpu_custom_call.1} parent=1 // pred_region
      _
    $region37: #{tpu_custom_call.1} parent=1 // pred_fallthru
      _
    %v45 = vld [vmem:[%s2] sm:$0xff]
    %v46 = vld [vmem:[%s2 + $0x8] sm:$0xff]
    %v47 = vld [vmem:[%s3] sm:$0xff]
    %v48 = vld [vmem:[%s3 + $0x8] sm:$0xff]
    %v49 = vld [vmem:[%s4] sm:$0x1]
    %v51 = vlaneseq
    %v52 = vshrl.u32 %v51, 7
    %v53 = vsub.s32 0, %v52
    %v54 = vrot.slane %v49, %v53
    %vm56 = vcmask 130048
    %v58 = vsel %vm56, %v45, 0
    %v61 = vsel %vm56, %v46, 0
    %63 = vmatprep.subr.mxu0 0.0
    %64 = vmatpush1.msra.mxu0 %v47
    %65 = vmatprep.subr.mxu0 0.0
    %66 = vmatpush1.msra.mxu0 %v48
    %67 = vmatprep.subr.mxu0 0.0
    %68 = vmatpush1.msra.mxu0 0.0
    %69 = vmatprep.subr.mxu0 0.0
    %70 = vmatpush1.msra.mxu0 0.0
    %71 = vmatprep.subr.mxu0 0.0
    %72 = vmatpush1.msra.mxu0 0.0
    %73 = vmatprep.subr.mxu0 0.0
    %74 = vmatpush1.msra.mxu0 0.0
    %75 = vmatprep.subr.mxu0 0.0
    %76 = vmatpush1.msra.mxu0 0.0
    %77 = vmatprep.subr.mxu0 0.0
    %78 = vmatpush1.msra.mxu0 0.0
    %79 = vmatprep.subr.mxu0 0.0
    %80 = vmatpush1.msra.mxu0 0.0
    %81 = vmatprep.subr.mxu0 0.0
    %82 = vmatpush1.msra.mxu0 0.0
    %83 = vmatprep.subr.mxu0 0.0
    %84 = vmatpush1.msra.mxu0 0.0
    %85 = vmatprep.subr.mxu0 0.0
    %86 = vmatpush1.msra.mxu0 0.0
    %87 = vmatprep.subr.mxu0 0.0
    %88 = vmatpush1.msra.mxu0 0.0
    %89 = vmatprep.subr.mxu0 0.0
    %90 = vmatpush1.msra.mxu0 0.0
    %91 = vmatprep.subr.mxu0 0.0
    %92 = vmatpush1.msra.mxu0 0.0
    %93 = vmatprep.subr.mxu0 0.0
    %94 = vmatpush1.msra.mxu0 0.0
    %95 = vmatprep.subr.mxu0 0.0
    %96 = vmatpush1.msra.mxu0 0.0
    %97 = vmatprep.subr.mxu0 0.0
    %98 = vmatpush1.msra.mxu0 0.0
    %99 = vmatprep.subr.mxu0 0.0
    %100 = vmatpush1.msra.mxu0 0.0
    %101 = vmatprep.subr.mxu0 0.0
    %102 = vmatpush1.msra.mxu0 0.0
    %103 = vmatprep.subr.mxu0 0.0
    %104 = vmatpush1.msra.mxu0 0.0
    %105 = vmatprep.subr.mxu0 0.0
    %106 = vmatpush1.msra.mxu0 0.0
    %107 = vmatprep.subr.mxu0 0.0
    %108 = vmatpush1.msra.mxu0 0.0
    %109 = vmatprep.subr.mxu0 0.0
    %110 = vmatpush1.msra.mxu0 0.0
    %111 = vmatprep.subr.mxu0 0.0
    %112 = vmatpush1.msra.mxu0 0.0
    %113 = vmatprep.subr.mxu0 0.0
    %114 = vmatpush1.msra.mxu0 0.0
    %115 = vmatprep.subr.mxu0 0.0
    %116 = vmatpush1.msra.mxu0 0.0
    %117 = vmatprep.subr.mxu0 0.0
    %118 = vmatpush1.msra.mxu0 0.0
    %119 = vmatprep.subr.mxu0 0.0
    %120 = vmatpush1.msra.mxu0 0.0
    %121 = vmatprep.subr.mxu0 0.0
    %122 = vmatpush1.msra.mxu0 0.0
    %123 = vmatprep.subr.mxu0 0.0
    %124 = vmatpush1.msra.mxu0 0.0
    %125 = vmatprep.subr.mxu0 0.0
    %126 = vmatpush1.msra.mxu0 0.0
    %127 = vmatprep.mubr.f32.mxu0 0.0
    %128 = vmatmul.mubr.f32.gmra.mrb[0].mxu0 %v58
    %v129 = vpop.f32.mrb[0].mxu0
    %v130 = vadd.f32 %v54, %v129
    %v131 = vpop.f32.mrb[0].mxu0
    %132 = vmatprep.mubr.f32.mxu0 0.0
    %133 = vmatmul.mubr.f32.gmra.mrb[0].mxu0 %v61
    %v134 = vpop.f32.mrb[0].mxu0
    %v135 = vadd.f32 %v54, %v134
    %v136 = vpop.f32.mrb[0].mxu0
    %137 = vdwg.mxu0
    %vm138 = vcmp.gt.f32.partialorder %v130, 0.0
    %vm139 = vcmp.gt.f32.partialorder %v135, 0.0
    %v140 = vmin.f32 %v130, 0.0
    %v141 = vmin.f32 %v135, 0.0
    %v142 = vmul.f32 %v140, 1.442695
    %v143 = vpow.pop %v142
    %v144 = vmul.f32 %v141, 1.442695
    %v145 = vpow.pop %v144
    %v146 = vsub.f32 %v143, 1.0
    %v147 = vsub.f32 %v145, 1.0
    %v148 = vmul.f32 %v146, 1.6732632
    %v149 = vmul.f32 %v147, 1.6732632
    %v150 = vsel %vm138, %v130, %v148
    %v151 = vsel %vm139, %v135, %v149
    %v152 = vmul.f32 %v150, 1.050701
    %v153 = vmul.f32 %v151, 1.050701
    %156 = vrot.lane.b32.xlu0 %v152, 32
    %v157 = vpop.permute.xlu0 %156
    %158 = vrot.lane.b32.xlu0 %v153, 32
    %v159 = vpop.permute.xlu0 %158
    %vm162 = vcmask 261120
    %v163 = vsel %vm162, %v152, %v157
    %v164 = vsel %vm162, %v153, %v159
    %vm165 = vcmask 523264
    %166 = vst.msk [vmem:[#allocation2] sm:$0xff] %vm165, %v163
    %167 = vst.msk [vmem:[#allocation2 + $0x8] sm:$0xff] %vm165, %v164
    %168 = vst.msk [vmem:[#allocation2 + $0x10] sm:$0xff] %vm165, 0.0
    %169 = vst.msk [vmem:[#allocation3] sm:$0xff] %vm56, 0.0
    %170 = vst.msk [vmem:[#allocation4] sm:$0xff] %vm56, 0.0
    %171 = vst [vmem:[#allocation5] sm:$0xff] 0.0
    %172 = vst [vmem:[#allocation6] sm:$0xff] 0.0
    %173 = vst [vmem:[#allocation6 + $0x8] sm:$0xff] 0.0
    %s174 = sld [smem:[#allocation8]]
    %s175 = scalar_lea.vmem [#allocation2], %s174
    %v176 = vld [vmem:[%s175] sm:$0x1]
    %vm177 = vcmask 253952
    %178 = vst.msk [vmem:[#allocation5] sm:$0x1] %vm177, %v176
    %s179 = sld [smem:[#allocation8 + $0x1]]
    %s180 = scalar_lea.vmem [#allocation2], %s179
    %v181 = vld [vmem:[%s180] sm:$0x1]
    %183 = vrot.lane.b32.xlu0 %v181, 32
    %v184 = vpop.permute.xlu0 %183
    %vm186 = vcmask 516352
    %187 = vst.msk [vmem:[#allocation5] sm:$0x1] %vm186, %v184
    %s188 = sld [smem:[#allocation8 + $0x2]]
    %s189 = scalar_lea.vmem [#allocation2], %s188
    %v190 = vld [vmem:[%s189] sm:$0x1]
    %192 = vrot.lane.b32.xlu0 %v190, 64
    %v193 = vpop.permute.xlu0 %192
    %vm195 = vcmask 778752
    %196 = vst.msk [vmem:[#allocation5] sm:$0x1] %vm195, %v193
    %s197 = sld [smem:[#allocation8 + $0x6]]
    %s198 = scalar_lea.vmem [#allocation2], %s197
    %v199 = vld [vmem:[%s198] sm:$0x1]
    %200 = vst.msk [vmem:[#allocation5 + $0x1] sm:$0x1] %vm177, %v199
    %s201 = sld [smem:[#allocation8 + $0x7]]
    %s202 = scalar_lea.vmem [#allocation2], %s201
    %v203 = vld [vmem:[%s202] sm:$0x1]
    %205 = vrot.lane.b32.xlu0 %v203, 32
    %v206 = vpop.permute.xlu0 %205
    %208 = vst.msk [vmem:[#allocation5 + $0x1] sm:$0x1] %vm186, %v206
    %s209 = sld [smem:[#allocation8 + $0x8]]
    %s210 = scalar_lea.vmem [#allocation2], %s209
    %v211 = vld [vmem:[%s210] sm:$0x1]
    %213 = vrot.lane.b32.xlu0 %v211, 64
    %v214 = vpop.permute.xlu0 %213
    %216 = vst.msk [vmem:[#allocation5 + $0x1] sm:$0x1] %vm195, %v214
    %v217 = vld [vmem:[#allocation3] sm:$0xff]
    %219 = vrot.lane.b32.xlu0 %v217, 96
    %v220 = vpop.permute.xlu0 %219
    %vm222 = vcmask 917248
    %223 = vst.msk [vmem:[#allocation5] sm:$0xff] %vm222, %v220
    %v224 = vld [vmem:[#allocation5] sm:$0xff]
    %v225 = vld [vmem:[%s7] sm:$0xff]
    %v226 = vld [vmem:[%s7 + $0x8] sm:$0xff]
    %v227 = vld [vmem:[%s7 + $0x10] sm:$0xff]
    %v228 = vld [vmem:[%s7 + $0x18] sm:$0xff]
    %v229 = vld [vmem:[%s7 + $0x20] sm:$0xff]
    %v230 = vld [vmem:[%s7 + $0x28] sm:$0xff]
    %v231 = vld [vmem:[%s7 + $0x30] sm:$0xff]
    %v232 = vld [vmem:[%s7 + $0x38] sm:$0xff]
    %v233 = vld [vmem:[%s7 + $0x40] sm:$0xff]
    %v234 = vld [vmem:[%s7 + $0x48] sm:$0xff]
    %v235 = vld [vmem:[%s7 + $0x50] sm:$0xff]
    %v236 = vld [vmem:[%s7 + $0x58] sm:$0xff]
    %v237 = vld [vmem:[%s7 + $0x60] sm:$0xff]
    %v238 = vld [vmem:[%s7 + $0x68] sm:$0xff]
    %v239 = vld [vmem:[%s7 + $0x70] sm:$0xff]
    %v240 = vld [vmem:[%s7 + $0x78] sm:$0xff]
    %v241 = vld [vmem:[%s8] sm:$0x1]
    %v243 = vlaneseq
    %v244 = vshrl.u32 %v243, 7
    %v245 = vsub.s32 0, %v244
    %v246 = vrot.slane %v241, %v245
    %248 = vmatprep.subr.mxu0 0.0
    %249 = vmatpush1.msra.mxu0 %v225
    %250 = vmatprep.subr.mxu0 0.0
    %251 = vmatpush1.msra.mxu0 %v226
    %252 = vmatprep.subr.mxu0 0.0
    %253 = vmatpush1.msra.mxu0 %v227
    %254 = vmatprep.subr.mxu0 0.0
    %255 = vmatpush1.msra.mxu0 %v228
    %256 = vmatprep.subr.mxu0 0.0
    %257 = vmatpush1.msra.mxu0 %v229
    %258 = vmatprep.subr.mxu0 0.0
    %259 = vmatpush1.msra.mxu0 %v230
    %260 = vmatprep.subr.mxu0 0.0
    %261 = vmatpush1.msra.mxu0 %v231
    %262 = vmatprep.subr.mxu0 0.0
    %263 = vmatpush1.msra.mxu0 %v232
    %264 = vmatprep.subr.mxu0 0.0
    %265 = vmatpush1.msra.mxu0 %v233
    %266 = vmatprep.subr.mxu0 0.0
    %267 = vmatpush1.msra.mxu0 %v234
    %268 = vmatprep.subr.mxu0 0.0
    %269 = vmatpush1.msra.mxu0 %v235
    %270 = vmatprep.subr.mxu0 0.0
    %271 = vmatpush1.msra.mxu0 %v236
    %272 = vmatprep.subr.mxu0 0.0
    %273 = vmatpush1.msra.mxu0 %v237
    %274 = vmatprep.subr.mxu0 0.0
    %275 = vmatpush1.msra.mxu0 %v238
    %276 = vmatprep.subr.mxu0 0.0
    %277 = vmatpush1.msra.mxu0 %v239
    %278 = vmatprep.subr.mxu0 0.0
    %279 = vmatpush1.msra.mxu0 %v240
    %280 = vmatprep.subr.mxu0 0.0
    %281 = vmatpush1.msra.mxu0 0.0
    %282 = vmatprep.subr.mxu0 0.0
    %283 = vmatpush1.msra.mxu0 0.0
    %284 = vmatprep.subr.mxu0 0.0
    %285 = vmatpush1.msra.mxu0 0.0
    %286 = vmatprep.subr.mxu0 0.0
    %287 = vmatpush1.msra.mxu0 0.0
    %288 = vmatprep.subr.mxu0 0.0
    %289 = vmatpush1.msra.mxu0 0.0
    %290 = vmatprep.subr.mxu0 0.0
    %291 = vmatpush1.msra.mxu0 0.0
    %292 = vmatprep.subr.mxu0 0.0
    %293 = vmatpush1.msra.mxu0 0.0
    %294 = vmatprep.subr.mxu0 0.0
    %295 = vmatpush1.msra.mxu0 0.0
    %296 = vmatprep.subr.mxu0 0.0
    %297 = vmatpush1.msra.mxu0 0.0
    %298 = vmatprep.subr.mxu0 0.0
    %299 = vmatpush1.msra.mxu0 0.0
    %300 = vmatprep.subr.mxu0 0.0
    %301 = vmatpush1.msra.mxu0 0.0
    %302 = vmatprep.subr.mxu0 0.0
    %303 = vmatpush1.msra.mxu0 0.0
    %304 = vmatprep.subr.mxu0 0.0
    %305 = vmatpush1.msra.mxu0 0.0
    %306 = vmatprep.subr.mxu0 0.0
    %307 = vmatpush1.msra.mxu0 0.0
    %308 = vmatprep.subr.mxu0 0.0
    %309 = vmatpush1.msra.mxu0 0.0
    %310 = vmatprep.subr.mxu0 0.0
    %311 = vmatpush1.msra.mxu0 0.0
    %312 = vmatprep.mubr.f32.mxu0 0.0
    %313 = vmatmul.mubr.f32.gmra.mrb[0].mxu0 %v224
    %v314 = vpop.f32.mrb[0].mxu0
    %v315 = vadd.f32 %v246, %v314
    %v316 = vpop.f32.mrb[0].mxu0
    %317 = vdwg.mxu0
    %v318 = vmul.f32 %v315, 0.5
    %v319 = vtanh.pop %v318
    %v320 = vadd.f32 %v319, 1.0
    %v321 = vmul.f32 %v320, 0.5
    %v322 = vtanh.pop %v315
    %v323 = vld [vmem:[#allocation4] sm:$0xff]
    %325 = vrot.lane.b32.xlu0 %v323, 16
    %v326 = vpop.permute.xlu0 %325
    %v328 = vmul.f32 %v321, %v326
    %330 = vrot.lane.b32.xlu0 %v322, 96
    %v331 = vpop.permute.xlu0 %330
    %v333 = vmul.f32 %v321, %v331
    %335 = vrot.lane.b32.xlu0 %v333, 16
    %v336 = vpop.permute.xlu0 %335
    %v338 = vadd.f32 %v328, %v336
    %v339 = vtanh.pop %v338
    %341 = vrot.lane.b32.xlu0 %v339, 32
    %v342 = vpop.permute.xlu0 %341
    %v344 = vmul.f32 %v321, %v342
    %346 = vrot.lane.b32.xlu0 %v344, 80
    %v347 = vpop.permute.xlu0 %346
    %349 = vst.msk [vmem:[#allocation3] sm:$0xff] %vm56, %v347
    %351 = vrot.lane.b32.xlu0 %v338, 112
    %v352 = vpop.permute.xlu0 %351
    %354 = vst.msk [vmem:[#allocation4] sm:$0xff] %vm56, %v352
    %s355 = sld [smem:[#allocation9]]
    %p356 = scmp.gt.s32.totalorder %s355, 0
    // Predicated region
    $region38: #{tpu_custom_call.1} parent=1 // pred_check
      %p357 = pneg %p356
    $region39: #{tpu_custom_call.1} parent=1 // pred_check_branch
      %359 = sbr.rel (%p357) target = $region41
    $region40: #{tpu_custom_call.1} parent=1 // pred_region
      %s360 = sld [smem:[#allocation8 + $0x3]]
      %s361 = scalar_lea.vmem [#allocation2], %s360
      %v362 = vld [vmem:[%s361] sm:$0x1]
      %vm363 = vcmask 516096
      %364 = vst.msk [vmem:[#allocation6] sm:$0x1] %vm363, %v362
      %s365 = sld [smem:[#allocation8 + $0x4]]
      %s366 = scalar_lea.vmem [#allocation2], %s365
      %v367 = vld [vmem:[%s366] sm:$0x1]
      %369 = vrot.lane.b32.xlu0 %v367, 64
      %v370 = vpop.permute.xlu0 %369
      %vm372 = vcmask 1040896
      %373 = vst.msk [vmem:[#allocation6] sm:$0x1] %vm372, %v370
      %s374 = sld [smem:[#allocation8 + $0x9]]
      %s375 = scalar_lea.vmem [#allocation2], %s374
      %v376 = vld [vmem:[%s375] sm:$0x1]
      %377 = vst.msk [vmem:[#allocation6 + $0x1] sm:$0x1] %vm363, %v376
      %s378 = sld [smem:[#allocation8 + $0xa]]
      %s379 = scalar_lea.vmem [#allocation2], %s378
      %v380 = vld [vmem:[%s379] sm:$0x1]
      %382 = vrot.lane.b32.xlu0 %v380, 64
      %v383 = vpop.permute.xlu0 %382
      %385 = vst.msk [vmem:[#allocation6 + $0x1] sm:$0x1] %vm372, %v383
      %386 = vst.msk [vmem:[#allocation6 + $0x8] sm:$0xff] %vm56, %v347
      %v387 = vld [vmem:[#allocation6] sm:$0xff]
      %v388 = vld [vmem:[#allocation6 + $0x8] sm:$0xff]
      %v389 = vld [vmem:[%s9] sm:$0xff]
      %v390 = vld [vmem:[%s9 + $0x8] sm:$0xff]
      %v391 = vld [vmem:[%s9 + $0x10] sm:$0xff]
      %v392 = vld [vmem:[%s9 + $0x18] sm:$0xff]
      %v393 = vld [vmem:[%s9 + $0x20] sm:$0xff]
      %v394 = vld [vmem:[%s9 + $0x28] sm:$0xff]
      %v395 = vld [vmem:[%s9 + $0x30] sm:$0xff]
      %v396 = vld [vmem:[%s9 + $0x38] sm:$0xff]
      %v397 = vld [vmem:[%s9 + $0x40] sm:$0xff]
      %v398 = vld [vmem:[%s9 + $0x48] sm:$0xff]
      %v399 = vld [vmem:[%s9 + $0x50] sm:$0xff]
      %v400 = vld [vmem:[%s9 + $0x58] sm:$0xff]
      %v401 = vld [vmem:[%s9 + $0x60] sm:$0xff]
      %v402 = vld [vmem:[%s9 + $0x68] sm:$0xff]
      %v403 = vld [vmem:[%s9 + $0x70] sm:$0xff]
      %v404 = vld [vmem:[%s9 + $0x78] sm:$0xff]
      %v405 = vld [vmem:[%s9 + $0x80] sm:$0xff]
      %v406 = vld [vmem:[%s9 + $0x88] sm:$0xff]
      %v407 = vld [vmem:[%s9 + $0x90] sm:$0xff]
      %v408 = vld [vmem:[%s9 + $0x98] sm:$0xff]
      %v409 = vld [vmem:[%s9 + $0xa0] sm:$0xff]
      %v410 = vld [vmem:[%s9 + $0xa8] sm:$0xff]
      %v411 = vld [vmem:[%s9 + $0xb0] sm:$0xff]
      %v412 = vld [vmem:[%s9 + $0xb8] sm:$0xff]
      %v413 = vld [vmem:[%s9 + $0xc0] sm:$0xff]
      %v414 = vld [vmem:[%s9 + $0xc8] sm:$0xff]
      %v415 = vld [vmem:[%s9 + $0xd0] sm:$0xff]
      %v416 = vld [vmem:[%s9 + $0xd8] sm:$0xff]
      %v417 = vld [vmem:[%s9 + $0xe0] sm:$0xff]
      %v418 = vld [vmem:[%s9 + $0xe8] sm:$0xff]
      %v419 = vld [vmem:[%s9 + $0xf0] sm:$0xff]
      %v420 = vld [vmem:[%s9 + $0xf8] sm:$0xff]
      %v421 = vld [vmem:[%s9 + $0x100] sm:$0xff]
      %v422 = vld [vmem:[%s9 + $0x108] sm:$0xff]
      %v423 = vld [vmem:[%s9 + $0x110] sm:$0xff]
      %v424 = vld [vmem:[%s9 + $0x118] sm:$0xff]
      %v425 = vld [vmem:[%s9 + $0x120] sm:$0xff]
      %v426 = vld [vmem:[%s9 + $0x128] sm:$0xff]
      %v427 = vld [vmem:[%s9 + $0x130] sm:$0xff]
      %v428 = vld [vmem:[%s9 + $0x138] sm:$0xff]
      %v429 = vld [vmem:[%s9 + $0x140] sm:$0xff]
      %v430 = vld [vmem:[%s9 + $0x148] sm:$0xff]
      %v431 = vld [vmem:[%s9 + $0x150] sm:$0xff]
      %v432 = vld [vmem:[%s9 + $0x158] sm:$0xff]
      %v433 = vld [vmem:[%s9 + $0x160] sm:$0xff]
      %v434 = vld [vmem:[%s9 + $0x168] sm:$0xff]
      %v435 = vld [vmem:[%s9 + $0x170] sm:$0xff]
      %v436 = vld [vmem:[%s9 + $0x178] sm:$0xff]
      %v437 = vld [vmem:[%s9 + $0x180] sm:$0xff]
      %v438 = vld [vmem:[%s9 + $0x188] sm:$0xff]
      %v439 = vld [vmem:[%s9 + $0x190] sm:$0xff]
      %v440 = vld [vmem:[%s9 + $0x198] sm:$0xff]
      %v441 = vld [vmem:[%s9 + $0x1a0] sm:$0xff]
      %v442 = vld [vmem:[%s9 + $0x1a8] sm:$0xff]
      %v443 = vld [vmem:[%s9 + $0x1b0] sm:$0xff]
      %v444 = vld [vmem:[%s9 + $0x1b8] sm:$0xff]
      %v445 = vld [vmem:[%s9 + $0x1c0] sm:$0xff]
      %v446 = vld [vmem:[%s9 + $0x1c8] sm:$0xff]
      %v447 = vld [vmem:[%s9 + $0x1d0] sm:$0xff]
      %v448 = vld [vmem:[%s9 + $0x1d8] sm:$0xff]
      %v449 = vld [vmem:[%s9 + $0x1e0] sm:$0xff]
      %v450 = vld [vmem:[%s9 + $0x1e8] sm:$0xff]
      %v451 = vld [vmem:[%s9 + $0x1f0] sm:$0xff]
      %v452 = vld [vmem:[%s9 + $0x1f8] sm:$0xff]
      %v453 = vld [vmem:[%s10] sm:$0x3]
      %v455 = vlaneseq
      %v456 = vshrl.u32 %v455, 7
      %v457 = vsub.s32 0, %v456
      %v458 = vrot.slane %v453, %v457
      %v459 = vlaneseq
      %v460 = vshrl.u32 %v459, 7
      %v461 = vsub.s32 1, %v460
      %v462 = vrot.slane %v453, %v461
      %465 = vmatprep.subr.mxu0 %v390
      %466 = vmatpush1.msra.mxu0 %v389
      %467 = vmatprep.subr.mxu0 %v392
      %468 = vmatpush1.msra.mxu0 %v391
      %469 = vmatprep.subr.mxu0 %v394
      %470 = vmatpush1.msra.mxu0 %v393
      %471 = vmatprep.subr.mxu0 %v396
      %472 = vmatpush1.msra.mxu0 %v395
      %473 = vmatprep.subr.mxu0 %v398
      %474 = vmatpush1.msra.mxu0 %v397
      %475 = vmatprep.subr.mxu0 %v400
      %476 = vmatpush1.msra.mxu0 %v399
      %477 = vmatprep.subr.mxu0 %v402
      %478 = vmatpush1.msra.mxu0 %v401
      %479 = vmatprep.subr.mxu0 %v404
      %480 = vmatpush1.msra.mxu0 %v403
      %481 = vmatprep.subr.mxu0 %v406
      %482 = vmatpush1.msra.mxu0 %v405
      %483 = vmatprep.subr.mxu0 %v408
      %484 = vmatpush1.msra.mxu0 %v407
      %485 = vmatprep.subr.mxu0 %v410
      %486 = vmatpush1.msra.mxu0 %v409
      %487 = vmatprep.subr.mxu0 %v412
      %488 = vmatpush1.msra.mxu0 %v411
      %489 = vmatprep.subr.mxu0 %v414
      %490 = vmatpush1.msra.mxu0 %v413
      %491 = vmatprep.subr.mxu0 %v416
      %492 = vmatpush1.msra.mxu0 %v415
      %493 = vmatprep.subr.mxu0 %v418
      %494 = vmatpush1.msra.mxu0 %v417
      %495 = vmatprep.subr.mxu0 %v420
      %496 = vmatpush1.msra.mxu0 %v419
      %497 = vmatprep.subr.mxu0 %v422
      %498 = vmatpush1.msra.mxu0 %v421
      %499 = vmatprep.subr.mxu0 %v424
      %500 = vmatpush1.msra.mxu0 %v423
      %501 = vmatprep.subr.mxu0 %v426
      %502 = vmatpush1.msra.mxu0 %v425
      %503 = vmatprep.subr.mxu0 %v428
      %504 = vmatpush1.msra.mxu0 %v427
      %505 = vmatprep.subr.mxu0 %v430
      %506 = vmatpush1.msra.mxu0 %v429
      %507 = vmatprep.subr.mxu0 %v432
      %508 = vmatpush1.msra.mxu0 %v431
      %509 = vmatprep.subr.mxu0 %v434
      %510 = vmatpush1.msra.mxu0 %v433
      %511 = vmatprep.subr.mxu0 %v436
      %512 = vmatpush1.msra.mxu0 %v435
      %513 = vmatprep.subr.mxu0 %v438
      %514 = vmatpush1.msra.mxu0 %v437
      %515 = vmatprep.subr.mxu0 %v440
      %516 = vmatpush1.msra.mxu0 %v439
      %517 = vmatprep.subr.mxu0 %v442
      %518 = vmatpush1.msra.mxu0 %v441
      %519 = vmatprep.subr.mxu0 %v444
      %520 = vmatpush1.msra.mxu0 %v443
      %521 = vmatprep.subr.mxu0 %v446
      %522 = vmatpush1.msra.mxu0 %v445
      %523 = vmatprep.subr.mxu0 %v448
      %524 = vmatpush1.msra.mxu0 %v447
      %525 = vmatprep.subr.mxu0 %v450
      %526 = vmatpush1.msra.mxu0 %v449
      %527 = vmatprep.subr.mxu0 %v452
      %528 = vmatpush1.msra.mxu0 %v451
      %529 = vmatprep.mubr.f32.mxu0 %v388
      %530 = vmatmul.mubr.f32.gmra.mrb[0].mxu0 %v387
      %v531 = vpop.f32.mrb[0].mxu0
      %v532 = vadd.f32 %v458, %v531
      %v533 = vpop.f32.mrb[0].mxu0
      %v534 = vadd.f32 %v462, %v533
      %535 = vdwg.mxu0
      %v536 = vmul.f32 %v532, 0.5
      %v537 = vmul.f32 %v534, 0.5
      %v538 = vtanh.pop %v536
      %v539 = vtanh.pop %v537
      %v540 = vadd.f32 %v538, 1.0
      %v541 = vadd.f32 %v539, 1.0
      %v542 = vmul.f32 %v540, 0.5
      %v543 = vmul.f32 %v541, 0.5
      %v544 = vtanh.pop %v532
      %v545 = vld [vmem:[#allocation6] sm:$0xff]
      %547 = vrot.lane.b32.xlu0 %v542, 96
      %v548 = vpop.permute.xlu0 %547
      %v550 = vmul.f32 %v544, %v548
      %552 = vrot.lane.b32.xlu0 %v545, 32
      %v553 = vpop.permute.xlu0 %552
      %v555 = vmul.f32 %v542, %v553
      %557 = vrot.lane.b32.xlu0 %v555, 64
      %v558 = vpop.permute.xlu0 %557
      %v560 = vadd.f32 %v550, %v558
      %v561 = vmul.f32 %v542, %v545
      %563 = vrot.lane.b32.xlu0 %v561, 32
      %v564 = vpop.permute.xlu0 %563
      %v566 = vadd.f32 %v560, %v564
      %v567 = vtanh.pop %v566
      %v568 = vmul.f32 %v543, %v567
      %570 = vrot.lane.b32.xlu0 %v566, 32
      %v571 = vpop.permute.xlu0 %570
      %v573 = vsel %vm162, %v568, %v571
      %s574 = sld [smem:[#allocation8 + $0x5]]
      %s575 = scalar_lea.vmem [#allocation2], %s574
      %576 = vst.msk [vmem:[%s575] sm:$0x1] %vm363, %v573
      %s577 = sld [smem:[#allocation8 + $0xb]]
      %s578 = scalar_lea.vmem [#allocation2], %s577
      %vm579 = vcmask 517121
      %580 = vst.msk [vmem:[%s578 - $0x1] sm:$0x2] %vm579, %v573
    $region41: #{tpu_custom_call.1} parent=1 // pred_fallthru
      _
    %s581 = sld [smem:[#allocation8 + $0xc]]
    %s582 = scalar_lea.vmem [#allocation2], %s581
    %v583 = vld [vmem:[%s582] sm:$0x1]
    %584 = vst.msk [vmem:[#allocation5] sm:$0x1] %vm177, %v583
    %s585 = sld [smem:[#allocation8 + $0xd]]
    %s586 = scalar_lea.vmem [#allocation2], %s585
    %v587 = vld [vmem:[%s586] sm:$0x1]
    %589 = vrot.lane.b32.xlu0 %v587, 32
    %v590 = vpop.permute.xlu0 %589
    %592 = vst.msk [vmem:[#allocation5] sm:$0x1] %vm186, %v590
    %s593 = sld [smem:[#allocation8 + $0xe]]
    %s594 = scalar_lea.vmem [#allocation2], %s593
    %v595 = vld [vmem:[%s594] sm:$0x1]
    %597 = vrot.lane.b32.xlu0 %v595, 64
    %v598 = vpop.permute.xlu0 %597
    %600 = vst.msk [vmem:[#allocation5] sm:$0x1] %vm195, %v598
    %s601 = sld [smem:[#allocation8 + $0x12]]
    %s602 = scalar_lea.vmem [#allocation2], %s601
    %v603 = vld [vmem:[%s602] sm:$0x1]
    %604 = vst.msk [vmem:[#allocation5 + $0x1] sm:$0x1] %vm177, %v603
    %s605 = sld [smem:[#allocation8 + $0x13]]
    %s606 = scalar_lea.vmem [#allocation2], %s605
    %v607 = vld [vmem:[%s606] sm:$0x1]
    %609 = vrot.lane.b32.xlu0 %v607, 32
    %v610 = vpop.permute.xlu0 %609
    %612 = vst.msk [vmem:[#allocation5 + $0x1] sm:$0x1] %vm186, %v610
    %s613 = sld [smem:[#allocation8 + $0x14]]
    %s614 = scalar_lea.vmem [#allocation2], %s613
    %v615 = vld [vmem:[%s614] sm:$0x1]
    %617 = vrot.lane.b32.xlu0 %v615, 64
    %v618 = vpop.permute.xlu0 %617
    %620 = vst.msk [vmem:[#allocation5 + $0x1] sm:$0x1] %vm195, %v618
    %v621 = vld [vmem:[#allocation3] sm:$0xff]
    %623 = vrot.lane.b32.xlu0 %v621, 96
    %v624 = vpop.permute.xlu0 %623
    %626 = vst.msk [vmem:[#allocation5] sm:$0xff] %vm222, %v624
    %v627 = vld [vmem:[#allocation5] sm:$0xff]
    %v628 = vld [vmem:[%s7] sm:$0xff]
    %v629 = vld [vmem:[%s7 + $0x8] sm:$0xff]
    %v630 = vld [vmem:[%s7 + $0x10] sm:$0xff]
    %v631 = vld [vmem:[%s7 + $0x18] sm:$0xff]
    %v632 = vld [vmem:[%s7 + $0x20] sm:$0xff]
    %v633 = vld [vmem:[%s7 + $0x28] sm:$0xff]
    %v634 = vld [vmem:[%s7 + $0x30] sm:$0xff]
    %v635 = vld [vmem:[%s7 + $0x38] sm:$0xff]
    %v636 = vld [vmem:[%s7 + $0x40] sm:$0xff]
    %v637 = vld [vmem:[%s7 + $0x48] sm:$0xff]
    %v638 = vld [vmem:[%s7 + $0x50] sm:$0xff]
    %v639 = vld [vmem:[%s7 + $0x58] sm:$0xff]
    %v640 = vld [vmem:[%s7 + $0x60] sm:$0xff]
    %v641 = vld [vmem:[%s7 + $0x68] sm:$0xff]
    %v642 = vld [vmem:[%s7 + $0x70] sm:$0xff]
    %v643 = vld [vmem:[%s7 + $0x78] sm:$0xff]
    %v644 = vld [vmem:[%s8] sm:$0x1]
    %v646 = vlaneseq
    %v647 = vshrl.u32 %v646, 7
    %v648 = vsub.s32 0, %v647
    %v649 = vrot.slane %v644, %v648
    %651 = vmatprep.subr.mxu0 0.0
    %652 = vmatpush1.msra.mxu0 %v628
    %653 = vmatprep.subr.mxu0 0.0
    %654 = vmatpush1.msra.mxu0 %v629
    %655 = vmatprep.subr.mxu0 0.0
    %656 = vmatpush1.msra.mxu0 %v630
    %657 = vmatprep.subr.mxu0 0.0
    %658 = vmatpush1.msra.mxu0 %v631
    %659 = vmatprep.subr.mxu0 0.0
    %660 = vmatpush1.msra.mxu0 %v632
    %661 = vmatprep.subr.mxu0 0.0
    %662 = vmatpush1.msra.mxu0 %v633
    %663 = vmatprep.subr.mxu0 0.0
    %664 = vmatpush1.msra.mxu0 %v634
    %665 = vmatprep.subr.mxu0 0.0
    %666 = vmatpush1.msra.mxu0 %v635
    %667 = vmatprep.subr.mxu0 0.0
    %668 = vmatpush1.msra.mxu0 %v636
    %669 = vmatprep.subr.mxu0 0.0
    %670 = vmatpush1.msra.mxu0 %v637
    %671 = vmatprep.subr.mxu0 0.0
    %672 = vmatpush1.msra.mxu0 %v638
    %673 = vmatprep.subr.mxu0 0.0
    %674 = vmatpush1.msra.mxu0 %v639
    %675 = vmatprep.subr.mxu0 0.0
    %676 = vmatpush1.msra.mxu0 %v640
    %677 = vmatprep.subr.mxu0 0.0
    %678 = vmatpush1.msra.mxu0 %v641
    %679 = vmatprep.subr.mxu0 0.0
    %680 = vmatpush1.msra.mxu0 %v642
    %681 = vmatprep.subr.mxu0 0.0
    %682 = vmatpush1.msra.mxu0 %v643
    %683 = vmatprep.subr.mxu0 0.0
    %684 = vmatpush1.msra.mxu0 0.0
    %685 = vmatprep.subr.mxu0 0.0
    %686 = vmatpush1.msra.mxu0 0.0
    %687 = vmatprep.subr.mxu0 0.0
    %688 = vmatpush1.msra.mxu0 0.0
    %689 = vmatprep.subr.mxu0 0.0
    %690 = vmatpush1.msra.mxu0 0.0
    %691 = vmatprep.subr.mxu0 0.0
    %692 = vmatpush1.msra.mxu0 0.0
    %693 = vmatprep.subr.mxu0 0.0
    %694 = vmatpush1.msra.mxu0 0.0
    %695 = vmatprep.subr.mxu0 0.0
    %696 = vmatpush1.msra.mxu0 0.0
    %697 = vmatprep.subr.mxu0 0.0
    %698 = vmatpush1.msra.mxu0 0.0
    %699 = vmatprep.subr.mxu0 0.0
    %700 = vmatpush1.msra.mxu0 0.0
    %701 = vmatprep.subr.mxu0 0.0
    %702 = vmatpush1.msra.mxu0 0.0
    %703 = vmatprep.subr.mxu0 0.0
    %704 = vmatpush1.msra.mxu0 0.0
    %705 = vmatprep.subr.mxu0 0.0
    %706 = vmatpush1.msra.mxu0 0.0
    %707 = vmatprep.subr.mxu0 0.0
    %708 = vmatpush1.msra.mxu0 0.0
    %709 = vmatprep.subr.mxu0 0.0
    %710 = vmatpush1.msra.mxu0 0.0
    %711 = vmatprep.subr.mxu0 0.0
    %712 = vmatpush1.msra.mxu0 0.0
    %713 = vmatprep.subr.mxu0 0.0
    %714 = vmatpush1.msra.mxu0 0.0
    %715 = vmatprep.mubr.f32.mxu0 0.0
    %716 = vmatmul.mubr.f32.gmra.mrb[0].mxu0 %v627
    %v717 = vpop.f32.mrb[0].mxu0
    %v718 = vadd.f32 %v649, %v717
    %v719 = vpop.f32.mrb[0].mxu0
    %720 = vdwg.mxu0
    %v721 = vmul.f32 %v718, 0.5
    %v722 = vtanh.pop %v721
    %v723 = vadd.f32 %v722, 1.0
    %v724 = vmul.f32 %v723, 0.5
    %v725 = vtanh.pop %v718
    %v726 = vld [vmem:[#allocation4] sm:$0xff]
    %728 = vrot.lane.b32.xlu0 %v726, 16
    %v729 = vpop.permute.xlu0 %728
    %v731 = vmul.f32 %v724, %v729
    %733 = vrot.lane.b32.xlu0 %v725, 96
    %v734 = vpop.permute.xlu0 %733
    %v736 = vmul.f32 %v724, %v734
    %738 = vrot.lane.b32.xlu0 %v736, 16
    %v739 = vpop.permute.xlu0 %738
    %v741 = vadd.f32 %v731, %v739
    %v742 = vtanh.pop %v741
    %744 = vrot.lane.b32.xlu0 %v742, 32
    %v745 = vpop.permute.xlu0 %744
    %v747 = vmul.f32 %v724, %v745
    %749 = vrot.lane.b32.xlu0 %v747, 80
    %v750 = vpop.permute.xlu0 %749
    %752 = vst.msk [vmem:[#allocation3] sm:$0xff] %vm56, %v750
    %754 = vrot.lane.b32.xlu0 %v741, 112
    %v755 = vpop.permute.xlu0 %754
    %757 = vst.msk [vmem:[#allocation4] sm:$0xff] %vm56, %v755
    %s758 = sld [smem:[#allocation9 + $0x1]]
    %p759 = scmp.gt.s32.totalorder %s758, 0
    // Predicated region
    $region42: #{tpu_custom_call.1} parent=1 // pred_check
      %p760 = pneg %p759
    $region43: #{tpu_custom_call.1} parent=1 // pred_check_branch
      %762 = sbr.rel (%p760) target = $region45
    $region44: #{tpu_custom_call.1} parent=1 // pred_region
      %s763 = sld [smem:[#allocation8 + $0xf]]
      %s764 = scalar_lea.vmem [#allocation2], %s763
      %v765 = vld [vmem:[%s764] sm:$0x1]
      %vm766 = vcmask 516096
      %767 = vst.msk [vmem:[#allocation6] sm:$0x1] %vm766, %v765
      %s768 = sld [smem:[#allocation8 + $0x10]]
      %s769 = scalar_lea.vmem [#allocation2], %s768
      %v770 = vld [vmem:[%s769] sm:$0x1]
      %772 = vrot.lane.b32.xlu0 %v770, 64
      %v773 = vpop.permute.xlu0 %772
      %vm775 = vcmask 1040896
      %776 = vst.msk [vmem:[#allocation6] sm:$0x1] %vm775, %v773
      %s777 = sld [smem:[#allocation8 + $0x15]]
      %s778 = scalar_lea.vmem [#allocation2], %s777
      %v779 = vld [vmem:[%s778] sm:$0x1]
      %780 = vst.msk [vmem:[#allocation6 + $0x1] sm:$0x1] %vm766, %v779
      %s781 = sld [smem:[#allocation8 + $0x16]]
      %s782 = scalar_lea.vmem [#allocation2], %s781
      %v783 = vld [vmem:[%s782] sm:$0x1]
      %785 = vrot.lane.b32.xlu0 %v783, 64
      %v786 = vpop.permute.xlu0 %785
      %788 = vst.msk [vmem:[#allocation6 + $0x1] sm:$0x1] %vm775, %v786
      %789 = vst.msk [vmem:[#allocation6 + $0x8] sm:$0xff] %vm56, %v750
      %v790 = vld [vmem:[#allocation6] sm:$0xff]
      %v791 = vld [vmem:[#allocation6 + $0x8] sm:$0xff]
      %v792 = vld [vmem:[%s9] sm:$0xff]
      %v793 = vld [vmem:[%s9 + $0x8] sm:$0xff]
      %v794 = vld [vmem:[%s9 + $0x10] sm:$0xff]
      %v795 = vld [vmem:[%s9 + $0x18] sm:$0xff]
      %v796 = vld [vmem:[%s9 + $0x20] sm:$0xff]
      %v797 = vld [vmem:[%s9 + $0x28] sm:$0xff]
      %v798 = vld [vmem:[%s9 + $0x30] sm:$0xff]
      %v799 = vld [vmem:[%s9 + $0x38] sm:$0xff]
      %v800 = vld [vmem:[%s9 + $0x40] sm:$0xff]
      %v801 = vld [vmem:[%s9 + $0x48] sm:$0xff]
      %v802 = vld [vmem:[%s9 + $0x50] sm:$0xff]
      %v803 = vld [vmem:[%s9 + $0x58] sm:$0xff]
      %v804 = vld [vmem:[%s9 + $0x60] sm:$0xff]
      %v805 = vld [vmem:[%s9 + $0x68] sm:$0xff]
      %v806 = vld [vmem:[%s9 + $0x70] sm:$0xff]
      %v807 = vld [vmem:[%s9 + $0x78] sm:$0xff]
      %v808 = vld [vmem:[%s9 + $0x80] sm:$0xff]
      %v809 = vld [vmem:[%s9 + $0x88] sm:$0xff]
      %v810 = vld [vmem:[%s9 + $0x90] sm:$0xff]
      %v811 = vld [vmem:[%s9 + $0x98] sm:$0xff]
      %v812 = vld [vmem:[%s9 + $0xa0] sm:$0xff]
      %v813 = vld [vmem:[%s9 + $0xa8] sm:$0xff]
      %v814 = vld [vmem:[%s9 + $0xb0] sm:$0xff]
      %v815 = vld [vmem:[%s9 + $0xb8] sm:$0xff]
      %v816 = vld [vmem:[%s9 + $0xc0] sm:$0xff]
      %v817 = vld [vmem:[%s9 + $0xc8] sm:$0xff]
      %v818 = vld [vmem:[%s9 + $0xd0] sm:$0xff]
      %v819 = vld [vmem:[%s9 + $0xd8] sm:$0xff]
      %v820 = vld [vmem:[%s9 + $0xe0] sm:$0xff]
      %v821 = vld [vmem:[%s9 + $0xe8] sm:$0xff]
      %v822 = vld [vmem:[%s9 + $0xf0] sm:$0xff]
      %v823 = vld [vmem:[%s9 + $0xf8] sm:$0xff]
      %v824 = vld [vmem:[%s9 + $0x100] sm:$0xff]
      %v825 = vld [vmem:[%s9 + $0x108] sm:$0xff]
      %v826 = vld [vmem:[%s9 + $0x110] sm:$0xff]
      %v827 = vld [vmem:[%s9 + $0x118] sm:$0xff]
      %v828 = vld [vmem:[%s9 + $0x120] sm:$0xff]
      %v829 = vld [vmem:[%s9 + $0x128] sm:$0xff]
      %v830 = vld [vmem:[%s9 + $0x130] sm:$0xff]
      %v831 = vld [vmem:[%s9 + $0x138] sm:$0xff]
      %v832 = vld [vmem:[%s9 + $0x140] sm:$0xff]
      %v833 = vld [vmem:[%s9 + $0x148] sm:$0xff]
      %v834 = vld [vmem:[%s9 + $0x150] sm:$0xff]
      %v835 = vld [vmem:[%s9 + $0x158] sm:$0xff]
      %v836 = vld [vmem:[%s9 + $0x160] sm:$0xff]
      %v837 = vld [vmem:[%s9 + $0x168] sm:$0xff]
      %v838 = vld [vmem:[%s9 + $0x170] sm:$0xff]
      %v839 = vld [vmem:[%s9 + $0x178] sm:$0xff]
      %v840 = vld [vmem:[%s9 + $0x180] sm:$0xff]
      %v841 = vld [vmem:[%s9 + $0x188] sm:$0xff]
      %v842 = vld [vmem:[%s9 + $0x190] sm:$0xff]
      %v843 = vld [vmem:[%s9 + $0x198] sm:$0xff]
      %v844 = vld [vmem:[%s9 + $0x1a0] sm:$0xff]
      %v845 = vld [vmem:[%s9 + $0x1a8] sm:$0xff]
      %v846 = vld [vmem:[%s9 + $0x1b0] sm:$0xff]
      %v847 = vld [vmem:[%s9 + $0x1b8] sm:$0xff]
      %v848 = vld [vmem:[%s9 + $0x1c0] sm:$0xff]
      %v849 = vld [vmem:[%s9 + $0x1c8] sm:$0xff]
      %v850 = vld [vmem:[%s9 + $0x1d0] sm:$0xff]
      %v851 = vld [vmem:[%s9 + $0x1d8] sm:$0xff]
      %v852 = vld [vmem:[%s9 + $0x1e0] sm:$0xff]
      %v853 = vld [vmem:[%s9 + $0x1e8] sm:$0xff]
      %v854 = vld [vmem:[%s9 + $0x1f0] sm:$0xff]
      %v855 = vld [vmem:[%s9 + $0x1f8] sm:$0xff]
      %v856 = vld [vmem:[%s10] sm:$0x3]
      %v858 = vlaneseq
      %v859 = vshrl.u32 %v858, 7
      %v860 = vsub.s32 0, %v859
      %v861 = vrot.slane %v856, %v860
      %v862 = vlaneseq
      %v863 = vshrl.u32 %v862, 7
      %v864 = vsub.s32 1, %v863
      %v865 = vrot.slane %v856, %v864
      %868 = vmatprep.subr.mxu0 %v793
      %869 = vmatpush1.msra.mxu0 %v792
      %870 = vmatprep.subr.mxu0 %v795
      %871 = vmatpush1.msra.mxu0 %v794
      %872 = vmatprep.subr.mxu0 %v797
      %873 = vmatpush1.msra.mxu0 %v796
      %874 = vmatprep.subr.mxu0 %v799
      %875 = vmatpush1.msra.mxu0 %v798
      %876 = vmatprep.subr.mxu0 %v801
      %877 = vmatpush1.msra.mxu0 %v800
      %878 = vmatprep.subr.mxu0 %v803
      %879 = vmatpush1.msra.mxu0 %v802
      %880 = vmatprep.subr.mxu0 %v805
      %881 = vmatpush1.msra.mxu0 %v804
      %882 = vmatprep.subr.mxu0 %v807
      %883 = vmatpush1.msra.mxu0 %v806
      %884 = vmatprep.subr.mxu0 %v809
      %885 = vmatpush1.msra.mxu0 %v808
      %886 = vmatprep.subr.mxu0 %v811
      %887 = vmatpush1.msra.mxu0 %v810
      %888 = vmatprep.subr.mxu0 %v813
      %889 = vmatpush1.msra.mxu0 %v812
      %890 = vmatprep.subr.mxu0 %v815
      %891 = vmatpush1.msra.mxu0 %v814
      %892 = vmatprep.subr.mxu0 %v817
      %893 = vmatpush1.msra.mxu0 %v816
      %894 = vmatprep.subr.mxu0 %v819
      %895 = vmatpush1.msra.mxu0 %v818
      %896 = vmatprep.subr.mxu0 %v821
      %897 = vmatpush1.msra.mxu0 %v820
      %898 = vmatprep.subr.mxu0 %v823
      %899 = vmatpush1.msra.mxu0 %v822
      %900 = vmatprep.subr.mxu0 %v825
      %901 = vmatpush1.msra.mxu0 %v824
      %902 = vmatprep.subr.mxu0 %v827
      %903 = vmatpush1.msra.mxu0 %v826
      %904 = vmatprep.subr.mxu0 %v829
      %905 = vmatpush1.msra.mxu0 %v828
      %906 = vmatprep.subr.mxu0 %v831
      %907 = vmatpush1.msra.mxu0 %v830
      %908 = vmatprep.subr.mxu0 %v833
      %909 = vmatpush1.msra.mxu0 %v832
      %910 = vmatprep.subr.mxu0 %v835
      %911 = vmatpush1.msra.mxu0 %v834
      %912 = vmatprep.subr.mxu0 %v837
      %913 = vmatpush1.msra.mxu0 %v836
      %914 = vmatprep.subr.mxu0 %v839
      %915 = vmatpush1.msra.mxu0 %v838
      %916 = vmatprep.subr.mxu0 %v841
      %917 = vmatpush1.msra.mxu0 %v840
      %918 = vmatprep.subr.mxu0 %v843
      %919 = vmatpush1.msra.mxu0 %v842
      %920 = vmatprep.subr.mxu0 %v845
      %921 = vmatpush1.msra.mxu0 %v844
      %922 = vmatprep.subr.mxu0 %v847
      %923 = vmatpush1.msra.mxu0 %v846
      %924 = vmatprep.subr.mxu0 %v849
      %925 = vmatpush1.msra.mxu0 %v848
      %926 = vmatprep.subr.mxu0 %v851
      %927 = vmatpush1.msra.mxu0 %v850
      %928 = vmatprep.subr.mxu0 %v853
      %929 = vmatpush1.msra.mxu0 %v852
      %930 = vmatprep.subr.mxu0 %v855
      %931 = vmatpush1.msra.mxu0 %v854
      %932 = vmatprep.mubr.f32.mxu0 %v791
      %933 = vmatmul.mubr.f32.gmra.mrb[0].mxu0 %v790
      %v934 = vpop.f32.mrb[0].mxu0
      %v935 = vadd.f32 %v861, %v934
      %v936 = vpop.f32.mrb[0].mxu0
      %v937 = vadd.f32 %v865, %v936
      %938 = vdwg.mxu0
      %v939 = vmul.f32 %v935, 0.5
      %v940 = vmul.f32 %v937, 0.5
      %v941 = vtanh.pop %v939
      %v942 = vtanh.pop %v940
      %v943 = vadd.f32 %v941, 1.0
      %v944 = vadd.f32 %v942, 1.0
      %v945 = vmul.f32 %v943, 0.5
      %v946 = vmul.f32 %v944, 0.5
      %v947 = vtanh.pop %v935
      %v948 = vld [vmem:[#allocation6] sm:$0xff]
      %950 = vrot.lane.b32.xlu0 %v945, 96
      %v951 = vpop.permute.xlu0 %950
      %v953 = vmul.f32 %v947, %v951
      %955 = vrot.lane.b32.xlu0 %v948, 32
      %v956 = vpop.permute.xlu0 %955
      %v958 = vmul.f32 %v945, %v956
      %960 = vrot.lane.b32.xlu0 %v958, 64
      %v961 = vpop.permute.xlu0 %960
      %v963 = vadd.f32 %v953, %v961
      %v964 = vmul.f32 %v945, %v948
      %966 = vrot.lane.b32.xlu0 %v964, 32
      %v967 = vpop.permute.xlu0 %966
      %v969 = vadd.f32 %v963, %v967
      %v970 = vtanh.pop %v969
      %v971 = vmul.f32 %v946, %v970
      %973 = vrot.lane.b32.xlu0 %v969, 32
      %v974 = vpop.permute.xlu0 %973
      %v976 = vsel %vm162, %v971, %v974
      %s977 = sld [smem:[#allocation8 + $0x11]]
      %s978 = scalar_lea.vmem [#allocation2], %s977
      %979 = vst.msk [vmem:[%s978] sm:$0x1] %vm766, %v976
      %s980 = sld [smem:[#allocation8 + $0x17]]
      %s981 = scalar_lea.vmem [#allocation2], %s980
      %vm982 = vcmask 517121
      %983 = vst.msk [vmem:[%s981 - $0x1] sm:$0x2] %vm982, %v976
    $region45: #{tpu_custom_call.1} parent=1 // pred_fallthru
      _
    %s984 = sld [smem:[#allocation8 + $0x18]]
    %s985 = scalar_lea.vmem [#allocation2], %s984
    %v986 = vld [vmem:[%s985] sm:$0x1]
    %987 = vst.msk [vmem:[#allocation5] sm:$0x1] %vm177, %v986
    %s988 = sld [smem:[#allocation8 + $0x19]]
    %s989 = scalar_lea.vmem [#allocation2], %s988
    %v990 = vld [vmem:[%s989] sm:$0x1]
    %992 = vrot.lane.b32.xlu0 %v990, 32
    %v993 = vpop.permute.xlu0 %992
    %995 = vst.msk [vmem:[#allocation5] sm:$0x1] %vm186, %v993
    %s996 = sld [smem:[#allocation8 + $0x1a]]
    %s997 = scalar_lea.vmem [#allocation2], %s996
    %v998 = vld [vmem:[%s997] sm:$0x1]
    %1000 = vrot.lane.b32.xlu0 %v998, 64
    %v1001 = vpop.permute.xlu0 %1000
    %1003 = vst.msk [vmem:[#allocation5] sm:$0x1] %vm195, %v1001
    %s1004 = sld [smem:[#allocation8 + $0x1e]]
    %s1005 = scalar_lea.vmem [#allocation2], %s1004
    %v1006 = vld [vmem:[%s1005] sm:$0x1]
    %1007 = vst.msk [vmem:[#allocation5 + $0x1] sm:$0x1] %vm177, %v1006
    %s1008 = sld [smem:[#allocation8 + $0x1f]]
    %s1009 = scalar_lea.vmem [#allocation2], %s1008
    %v1010 = vld [vmem:[%s1009] sm:$0x1]
    %1012 = vrot.lane.b32.xlu0 %v1010, 32
    %v1013 = vpop.permute.xlu0 %1012
    %1015 = vst.msk [vmem:[#allocation5 + $0x1] sm:$0x1] %vm186, %v1013
    %s1016 = sld [smem:[#allocation8 + $0x20]]
    %s1017 = scalar_lea.vmem [#allocation2], %s1016
    %v1018 = vld [vmem:[%s1017] sm:$0x1]
    %1020 = vrot.lane.b32.xlu0 %v1018, 64
    %v1021 = vpop.permute.xlu0 %1020
    %1023 = vst.msk [vmem:[#allocation5 + $0x1] sm:$0x1] %vm195, %v1021
    %v1024 = vld [vmem:[#allocation3] sm:$0xff]
    %1026 = vrot.lane.b32.xlu0 %v1024, 96
    %v1027 = vpop.permute.xlu0 %1026
    %1029 = vst.msk [vmem:[#allocation5] sm:$0xff] %vm222, %v1027
    %v1030 = vld [vmem:[#allocation5] sm:$0xff]
    %v1031 = vld [vmem:[%s7] sm:$0xff]
    %v1032 = vld [vmem:[%s7 + $0x8] sm:$0xff]
    %v1033 = vld [vmem:[%s7 + $0x10] sm:$0xff]
    %v1034 = vld [vmem:[%s7 + $0x18] sm:$0xff]
    %v1035 = vld [vmem:[%s7 + $0x20] sm:$0xff]
    %v1036 = vld [vmem:[%s7 + $0x28] sm:$0xff]
    %v1037 = vld [vmem:[%s7 + $0x30] sm:$0xff]
    %v1038 = vld [vmem:[%s7 + $0x38] sm:$0xff]
    %v1039 = vld [vmem:[%s7 + $0x40] sm:$0xff]
    %v1040 = vld [vmem:[%s7 + $0x48] sm:$0xff]
    %v1041 = vld [vmem:[%s7 + $0x50] sm:$0xff]
    %v1042 = vld [vmem:[%s7 + $0x58] sm:$0xff]
    %v1043 = vld [vmem:[%s7 + $0x60] sm:$0xff]
    %v1044 = vld [vmem:[%s7 + $0x68] sm:$0xff]
    %v1045 = vld [vmem:[%s7 + $0x70] sm:$0xff]
    %v1046 = vld [vmem:[%s7 + $0x78] sm:$0xff]
    %v1047 = vld [vmem:[%s8] sm:$0x1]
    %v1049 = vlaneseq
    %v1050 = vshrl.u32 %v1049, 7
    %v1051 = vsub.s32 0, %v1050
    %v1052 = vrot.slane %v1047, %v1051
    %1054 = vmatprep.subr.mxu0 0.0
    %1055 = vmatpush1.msra.mxu0 %v1031
    %1056 = vmatprep.subr.mxu0 0.0
    %1057 = vmatpush1.msra.mxu0 %v1032
    %1058 = vmatprep.subr.mxu0 0.0
    %1059 = vmatpush1.msra.mxu0 %v1033
    %1060 = vmatprep.subr.mxu0 0.0
    %1061 = vmatpush1.msra.mxu0 %v1034
    %1062 = vmatprep.subr.mxu0 0.0
    %1063 = vmatpush1.msra.mxu0 %v1035
    %1064 = vmatprep.subr.mxu0 0.0
    %1065 = vmatpush1.msra.mxu0 %v1036
    %1066 = vmatprep.subr.mxu0 0.0
    %1067 = vmatpush1.msra.mxu0 %v1037
    %1068 = vmatprep.subr.mxu0 0.0
    %1069 = vmatpush1.msra.mxu0 %v1038
    %1070 = vmatprep.subr.mxu0 0.0
    %1071 = vmatpush1.msra.mxu0 %v1039
    %1072 = vmatprep.subr.mxu0 0.0
    %1073 = vmatpush1.msra.mxu0 %v1040
    %1074 = vmatprep.subr.mxu0 0.0
    %1075 = vmatpush1.msra.mxu0 %v1041
    %1076 = vmatprep.subr.mxu0 0.0
    %1077 = vmatpush1.msra.mxu0 %v1042
    %1078 = vmatprep.subr.mxu0 0.0
    %1079 = vmatpush1.msra.mxu0 %v1043
    %1080 = vmatprep.subr.mxu0 0.0
    %1081 = vmatpush1.msra.mxu0 %v1044
    %1082 = vmatprep.subr.mxu0 0.0
    %1083 = vmatpush1.msra.mxu0 %v1045
    %1084 = vmatprep.subr.mxu0 0.0
    %1085 = vmatpush1.msra.mxu0 %v1046
    %1086 = vmatprep.subr.mxu0 0.0
    %1087 = vmatpush1.msra.mxu0 0.0
    %1088 = vmatprep.subr.mxu0 0.0
    %1089 = vmatpush1.msra.mxu0 0.0
    %1090 = vmatprep.subr.mxu0 0.0
    %1091 = vmatpush1.msra.mxu0 0.0
    %1092 = vmatprep.subr.mxu0 0.0
    %1093 = vmatpush1.msra.mxu0 0.0
    %1094 = vmatprep.subr.mxu0 0.0
    %1095 = vmatpush1.msra.mxu0 0.0
    %1096 = vmatprep.subr.mxu0 0.0
    %1097 = vmatpush1.msra.mxu0 0.0
    %1098 = vmatprep.subr.mxu0 0.0
    %1099 = vmatpush1.msra.mxu0 0.0
    %1100 = vmatprep.subr.mxu0 0.0
    %1101 = vmatpush1.msra.mxu0 0.0
    %1102 = vmatprep.subr.mxu0 0.0
    %1103 = vmatpush1.msra.mxu0 0.0
    %1104 = vmatprep.subr.mxu0 0.0
    %1105 = vmatpush1.msra.mxu0 0.0
    %1106 = vmatprep.subr.mxu0 0.0
    %1107 = vmatpush1.msra.mxu0 0.0
    %1108 = vmatprep.subr.mxu0 0.0
    %1109 = vmatpush1.msra.mxu0 0.0
    %1110 = vmatprep.subr.mxu0 0.0
    %1111 = vmatpush1.msra.mxu0 0.0
    %1112 = vmatprep.subr.mxu0 0.0
    %1113 = vmatpush1.msra.mxu0 0.0
    %1114 = vmatprep.subr.mxu0 0.0
    %1115 = vmatpush1.msra.mxu0 0.0
    %1116 = vmatprep.subr.mxu0 0.0
    %1117 = vmatpush1.msra.mxu0 0.0
    %1118 = vmatprep.mubr.f32.mxu0 0.0
    %1119 = vmatmul.mubr.f32.gmra.mrb[0].mxu0 %v1030
    %v1120 = vpop.f32.mrb[0].mxu0
    %v1121 = vadd.f32 %v1052, %v1120
    %v1122 = vpop.f32.mrb[0].mxu0
    %1123 = vdwg.mxu0
    %v1124 = vmul.f32 %v1121, 0.5
    %v1125 = vtanh.pop %v1124
    %v1126 = vadd.f32 %v1125, 1.0
    %v1127 = vmul.f32 %v1126, 0.5
    %v1128 = vtanh.pop %v1121
    %v1129 = vld [vmem:[#allocation4] sm:$0xff]
    %1131 = vrot.lane.b32.xlu0 %v1129, 16
    %v1132 = vpop.permute.xlu0 %1131
    %v1134 = vmul.f32 %v1127, %v1132
    %1136 = vrot.lane.b32.xlu0 %v1128, 96
    %v1137 = vpop.permute.xlu0 %1136
    %v1139 = vmul.f32 %v1127, %v1137
    %1141 = vrot.lane.b32.xlu0 %v1139, 16
    %v1142 = vpop.permute.xlu0 %1141
    %v1144 = vadd.f32 %v1134, %v1142
    %v1145 = vtanh.pop %v1144
    %1147 = vrot.lane.b32.xlu0 %v1145, 32
    %v1148 = vpop.permute.xlu0 %1147
    %v1150 = vmul.f32 %v1127, %v1148
    %1152 = vrot.lane.b32.xlu0 %v1150, 80
    %v1153 = vpop.permute.xlu0 %1152
    %1155 = vst.msk [vmem:[#allocation3] sm:$0xff] %vm56, %v1153
    %1157 = vrot.lane.b32.xlu0 %v1144, 112
    %v1158 = vpop.permute.xlu0 %1157
    %1160 = vst.msk [vmem:[#allocation4] sm:$0xff] %vm56, %v1158
    %s1161 = sld [smem:[#allocation9 + $0x2]]
    %p1162 = scmp.gt.s32.totalorder %s1161, 0
    // Predicated region
    $region46: #{tpu_custom_call.1} parent=1 // pred_check
      %p1163 = pneg %p1162
    $region47: #{tpu_custom_call.1} parent=1 // pred_check_branch
      %1165 = sbr.rel (%p1163) target = $region49
    $region48: #{tpu_custom_call.1} parent=1 // pred_region
      %s1166 = sld [smem:[#allocation8 + $0x1b]]
      %s1167 = scalar_lea.vmem [#allocation2], %s1166
      %v1168 = vld [vmem:[%s1167] sm:$0x1]
      %vm1169 = vcmask 516096
      %1170 = vst.msk [vmem:[#allocation6] sm:$0x1] %vm1169, %v1168
      %s1171 = sld [smem:[#allocation8 + $0x1c]]
      %s1172 = scalar_lea.vmem [#allocation2], %s1171
      %v1173 = vld [vmem:[%s1172] sm:$0x1]
      %1175 = vrot.lane.b32.xlu0 %v1173, 64
      %v1176 = vpop.permute.xlu0 %1175
      %vm1178 = vcmask 1040896
      %1179 = vst.msk [vmem:[#allocation6] sm:$0x1] %vm1178, %v1176
      %s1180 = sld [smem:[#allocation8 + $0x21]]
      %s1181 = scalar_lea.vmem [#allocation2], %s1180
      %v1182 = vld [vmem:[%s1181] sm:$0x1]
      %1183 = vst.msk [vmem:[#allocation6 + $0x1] sm:$0x1] %vm1169, %v1182
      %s1184 = sld [smem:[#allocation8 + $0x22]]
      %s1185 = scalar_lea.vmem [#allocation2], %s1184
      %v1186 = vld [vmem:[%s1185] sm:$0x1]
      %1188 = vrot.lane.b32.xlu0 %v1186, 64
      %v1189 = vpop.permute.xlu0 %1188
      %1191 = vst.msk [vmem:[#allocation6 + $0x1] sm:$0x1] %vm1178, %v1189
      %1192 = vst.msk [vmem:[#allocation6 + $0x8] sm:$0xff] %vm56, %v1153
      %v1193 = vld [vmem:[#allocation6] sm:$0xff]
      %v1194 = vld [vmem:[#allocation6 + $0x8] sm:$0xff]
      %v1195 = vld [vmem:[%s9] sm:$0xff]
      %v1196 = vld [vmem:[%s9 + $0x8] sm:$0xff]
      %v1197 = vld [vmem:[%s9 + $0x10] sm:$0xff]
      %v1198 = vld [vmem:[%s9 + $0x18] sm:$0xff]
      %v1199 = vld [vmem:[%s9 + $0x20] sm:$0xff]
      %v1200 = vld [vmem:[%s9 + $0x28] sm:$0xff]
      %v1201 = vld [vmem:[%s9 + $0x30] sm:$0xff]
      %v1202 = vld [vmem:[%s9 + $0x38] sm:$0xff]
      %v1203 = vld [vmem:[%s9 + $0x40] sm:$0xff]
      %v1204 = vld [vmem:[%s9 + $0x48] sm:$0xff]
      %v1205 = vld [vmem:[%s9 + $0x50] sm:$0xff]
      %v1206 = vld [vmem:[%s9 + $0x58] sm:$0xff]
      %v1207 = vld [vmem:[%s9 + $0x60] sm:$0xff]
      %v1208 = vld [vmem:[%s9 + $0x68] sm:$0xff]
      %v1209 = vld [vmem:[%s9 + $0x70] sm:$0xff]
      %v1210 = vld [vmem:[%s9 + $0x78] sm:$0xff]
      %v1211 = vld [vmem:[%s9 + $0x80] sm:$0xff]
      %v1212 = vld [vmem:[%s9 + $0x88] sm:$0xff]
      %v1213 = vld [vmem:[%s9 + $0x90] sm:$0xff]
      %v1214 = vld [vmem:[%s9 + $0x98] sm:$0xff]
      %v1215 = vld [vmem:[%s9 + $0xa0] sm:$0xff]
      %v1216 = vld [vmem:[%s9 + $0xa8] sm:$0xff]
      %v1217 = vld [vmem:[%s9 + $0xb0] sm:$0xff]
      %v1218 = vld [vmem:[%s9 + $0xb8] sm:$0xff]
      %v1219 = vld [vmem:[%s9 + $0xc0] sm:$0xff]
      %v1220 = vld [vmem:[%s9 + $0xc8] sm:$0xff]
      %v1221 = vld [vmem:[%s9 + $0xd0] sm:$0xff]
      %v1222 = vld [vmem:[%s9 + $0xd8] sm:$0xff]
      %v1223 = vld [vmem:[%s9 + $0xe0] sm:$0xff]
      %v1224 = vld [vmem:[%s9 + $0xe8] sm:$0xff]
      %v1225 = vld [vmem:[%s9 + $0xf0] sm:$0xff]
      %v1226 = vld [vmem:[%s9 + $0xf8] sm:$0xff]
      %v1227 = vld [vmem:[%s9 + $0x100] sm:$0xff]
      %v1228 = vld [vmem:[%s9 + $0x108] sm:$0xff]
      %v1229 = vld [vmem:[%s9 + $0x110] sm:$0xff]
      %v1230 = vld [vmem:[%s9 + $0x118] sm:$0xff]
      %v1231 = vld [vmem:[%s9 + $0x120] sm:$0xff]
      %v1232 = vld [vmem:[%s9 + $0x128] sm:$0xff]
      %v1233 = vld [vmem:[%s9 + $0x130] sm:$0xff]
      %v1234 = vld [vmem:[%s9 + $0x138] sm:$0xff]
      %v1235 = vld [vmem:[%s9 + $0x140] sm:$0xff]
      %v1236 = vld [vmem:[%s9 + $0x148] sm:$0xff]
      %v1237 = vld [vmem:[%s9 + $0x150] sm:$0xff]
      %v1238 = vld [vmem:[%s9 + $0x158] sm:$0xff]
      %v1239 = vld [vmem:[%s9 + $0x160] sm:$0xff]
      %v1240 = vld [vmem:[%s9 + $0x168] sm:$0xff]
      %v1241 = vld [vmem:[%s9 + $0x170] sm:$0xff]
      %v1242 = vld [vmem:[%s9 + $0x178] sm:$0xff]
      %v1243 = vld [vmem:[%s9 + $0x180] sm:$0xff]
      %v1244 = vld [vmem:[%s9 + $0x188] sm:$0xff]
      %v1245 = vld [vmem:[%s9 + $0x190] sm:$0xff]
      %v1246 = vld [vmem:[%s9 + $0x198] sm:$0xff]
      %v1247 = vld [vmem:[%s9 + $0x1a0] sm:$0xff]
      %v1248 = vld [vmem:[%s9 + $0x1a8] sm:$0xff]
      %v1249 = vld [vmem:[%s9 + $0x1b0] sm:$0xff]
      %v1250 = vld [vmem:[%s9 + $0x1b8] sm:$0xff]
      %v1251 = vld [vmem:[%s9 + $0x1c0] sm:$0xff]
      %v1252 = vld [vmem:[%s9 + $0x1c8] sm:$0xff]
      %v1253 = vld [vmem:[%s9 + $0x1d0] sm:$0xff]
      %v1254 = vld [vmem:[%s9 + $0x1d8] sm:$0xff]
      %v1255 = vld [vmem:[%s9 + $0x1e0] sm:$0xff]
      %v1256 = vld [vmem:[%s9 + $0x1e8] sm:$0xff]
      %v1257 = vld [vmem:[%s9 + $0x1f0] sm:$0xff]
      %v1258 = vld [vmem:[%s9 + $0x1f8] sm:$0xff]
      %v1259 = vld [vmem:[%s10] sm:$0x3]
      %v1261 = vlaneseq
      %v1262 = vshrl.u32 %v1261, 7
      %v1263 = vsub.s32 0, %v1262
      %v1264 = vrot.slane %v1259, %v1263
      %v1265 = vlaneseq
      %v1266 = vshrl.u32 %v1265, 7
      %v1267 = vsub.s32 1, %v1266
      %v1268 = vrot.slane %v1259, %v1267
      %1271 = vmatprep.subr.mxu0 %v1196
      %1272 = vmatpush1.msra.mxu0 %v1195
      %1273 = vmatprep.subr.mxu0 %v1198
      %1274 = vmatpush1.msra.mxu0 %v1197
      %1275 = vmatprep.subr.mxu0 %v1200
      %1276 = vmatpush1.msra.mxu0 %v1199
      %1277 = vmatprep.subr.mxu0 %v1202
      %1278 = vmatpush1.msra.mxu0 %v1201
      %1279 = vmatprep.subr.mxu0 %v1204
      %1280 = vmatpush1.msra.mxu0 %v1203
      %1281 = vmatprep.subr.mxu0 %v1206
      %1282 = vmatpush1.msra.mxu0 %v1205
      %1283 = vmatprep.subr.mxu0 %v1208
      %1284 = vmatpush1.msra.mxu0 %v1207
      %1285 = vmatprep.subr.mxu0 %v1210
      %1286 = vmatpush1.msra.mxu0 %v1209
      %1287 = vmatprep.subr.mxu0 %v1212
      %1288 = vmatpush1.msra.mxu0 %v1211
      %1289 = vmatprep.subr.mxu0 %v1214
      %1290 = vmatpush1.msra.mxu0 %v1213
      %1291 = vmatprep.subr.mxu0 %v1216
      %1292 = vmatpush1.msra.mxu0 %v1215
      %1293 = vmatprep.subr.mxu0 %v1218
      %1294 = vmatpush1.msra.mxu0 %v1217
      %1295 = vmatprep.subr.mxu0 %v1220
      %1296 = vmatpush1.msra.mxu0 %v1219
      %1297 = vmatprep.subr.mxu0 %v1222
      %1298 = vmatpush1.msra.mxu0 %v1221
      %1299 = vmatprep.subr.mxu0 %v1224
      %1300 = vmatpush1.msra.mxu0 %v1223
      %1301 = vmatprep.subr.mxu0 %v1226
      %1302 = vmatpush1.msra.mxu0 %v1225
      %1303 = vmatprep.subr.mxu0 %v1228
      %1304 = vmatpush1.msra.mxu0 %v1227
      %1305 = vmatprep.subr.mxu0 %v1230
      %1306 = vmatpush1.msra.mxu0 %v1229
      %1307 = vmatprep.subr.mxu0 %v1232
      %1308 = vmatpush1.msra.mxu0 %v1231
      %1309 = vmatprep.subr.mxu0 %v1234
      %1310 = vmatpush1.msra.mxu0 %v1233
      %1311 = vmatprep.subr.mxu0 %v1236
      %1312 = vmatpush1.msra.mxu0 %v1235
      %1313 = vmatprep.subr.mxu0 %v1238
      %1314 = vmatpush1.msra.mxu0 %v1237
      %1315 = vmatprep.subr.mxu0 %v1240
      %1316 = vmatpush1.msra.mxu0 %v1239
      %1317 = vmatprep.subr.mxu0 %v1242
      %1318 = vmatpush1.msra.mxu0 %v1241
      %1319 = vmatprep.subr.mxu0 %v1244
      %1320 = vmatpush1.msra.mxu0 %v1243
      %1321 = vmatprep.subr.mxu0 %v1246
      %1322 = vmatpush1.msra.mxu0 %v1245
      %1323 = vmatprep.subr.mxu0 %v1248
      %1324 = vmatpush1.msra.mxu0 %v1247
      %1325 = vmatprep.subr.mxu0 %v1250
      %1326 = vmatpush1.msra.mxu0 %v1249
      %1327 = vmatprep.subr.mxu0 %v1252
      %1328 = vmatpush1.msra.mxu0 %v1251
      %1329 = vmatprep.subr.mxu0 %v1254
      %1330 = vmatpush1.msra.mxu0 %v1253
      %1331 = vmatprep.subr.mxu0 %v1256
      %1332 = vmatpush1.msra.mxu0 %v1255
      %1333 = vmatprep.subr.mxu0 %v1258
      %1334 = vmatpush1.msra.mxu0 %v1257
      %1335 = vmatprep.mubr.f32.mxu0 %v1194
      %1336 = vmatmul.mubr.f32.gmra.mrb[0].mxu0 %v1193
      %v1337 = vpop.f32.mrb[0].mxu0
      %v1338 = vadd.f32 %v1264, %v1337
      %v1339 = vpop.f32.mrb[0].mxu0
      %v1340 = vadd.f32 %v1268, %v1339
      %1341 = vdwg.mxu0
      %v1342 = vmul.f32 %v1338, 0.5
      %v1343 = vmul.f32 %v1340, 0.5
      %v1344 = vtanh.pop %v1342
      %v1345 = vtanh.pop %v1343
      %v1346 = vadd.f32 %v1344, 1.0
      %v1347 = vadd.f32 %v1345, 1.0
      %v1348 = vmul.f32 %v1346, 0.5
      %v1349 = vmul.f32 %v1347, 0.5
      %v1350 = vtanh.pop %v1338
      %v1351 = vld [vmem:[#allocation6] sm:$0xff]
      %1353 = vrot.lane.b32.xlu0 %v1348, 96
      %v1354 = vpop.permute.xlu0 %1353
      %v1356 = vmul.f32 %v1350, %v1354
      %1358 = vrot.lane.b32.xlu0 %v1351, 32
      %v1359 = vpop.permute.xlu0 %1358
      %v1361 = vmul.f32 %v1348, %v1359
      %1363 = vrot.lane.b32.xlu0 %v1361, 64
      %v1364 = vpop.permute.xlu0 %1363
      %v1366 = vadd.f32 %v1356, %v1364
      %v1367 = vmul.f32 %v1348, %v1351
      %1369 = vrot.lane.b32.xlu0 %v1367, 32
      %v1370 = vpop.permute.xlu0 %1369
      %v1372 = vadd.f32 %v1366, %v1370
      %v1373 = vtanh.pop %v1372
      %v1374 = vmul.f32 %v1349, %v1373
      %1376 = vrot.lane.b32.xlu0 %v1372, 32
      %v1377 = vpop.permute.xlu0 %1376
      %v1379 = vsel %vm162, %v1374, %v1377
      %s1380 = sld [smem:[#allocation8 + $0x1d]]
      %s1381 = scalar_lea.vmem [#allocation2], %s1380
      %1382 = vst.msk [vmem:[%s1381] sm:$0x1] %vm1169, %v1379
      %s1383 = sld [smem:[#allocation8 + $0x23]]
      %s1384 = scalar_lea.vmem [#allocation2], %s1383
      %vm1385 = vcmask 517121
      %1386 = vst.msk [vmem:[%s1384 - $0x1] sm:$0x2] %vm1385, %v1379
    $region49: #{tpu_custom_call.1} parent=1 // pred_fallthru
      _
    %s1387 = sld [smem:[#allocation8 + $0x24]]
    %s1388 = scalar_lea.vmem [#allocation2], %s1387
    %v1389 = vld [vmem:[%s1388] sm:$0x1]
    %1390 = vst.msk [vmem:[#allocation5] sm:$0x1] %vm177, %v1389
    %s1391 = sld [smem:[#allocation8 + $0x25]]
    %s1392 = scalar_lea.vmem [#allocation2], %s1391
    %v1393 = vld [vmem:[%s1392] sm:$0x1]
    %1395 = vrot.lane.b32.xlu0 %v1393, 32
    %v1396 = vpop.permute.xlu0 %1395
    %1398 = vst.msk [vmem:[#allocation5] sm:$0x1] %vm186, %v1396
    %s1399 = sld [smem:[#allocation8 + $0x26]]
    %s1400 = scalar_lea.vmem [#allocation2], %s1399
    %v1401 = vld [vmem:[%s1400] sm:$0x1]
    %1403 = vrot.lane.b32.xlu0 %v1401, 64
    %v1404 = vpop.permute.xlu0 %1403
    %1406 = vst.msk [vmem:[#allocation5] sm:$0x1] %vm195, %v1404
    %s1407 = sld [smem:[#allocation8 + $0x2a]]
    %s1408 = scalar_lea.vmem [#allocation2], %s1407
    %v1409 = vld [vmem:[%s1408] sm:$0x1]
    %1410 = vst.msk [vmem:[#allocation5 + $0x1] sm:$0x1] %vm177, %v1409
    %s1411 = sld [smem:[#allocation8 + $0x2b]]
    %s1412 = scalar_lea.vmem [#allocation2], %s1411
    %v1413 = vld [vmem:[%s1412] sm:$0x1]
    %1415 = vrot.lane.b32.xlu0 %v1413, 32
    %v1416 = vpop.permute.xlu0 %1415
    %1418 = vst.msk [vmem:[#allocation5 + $0x1] sm:$0x1] %vm186, %v1416
    %s1419 = sld [smem:[#allocation8 + $0x2c]]
    %s1420 = scalar_lea.vmem [#allocation2], %s1419
    %v1421 = vld [vmem:[%s1420] sm:$0x1]
    %1423 = vrot.lane.b32.xlu0 %v1421, 64
    %v1424 = vpop.permute.xlu0 %1423
    %1426 = vst.msk [vmem:[#allocation5 + $0x1] sm:$0x1] %vm195, %v1424
    %v1427 = vld [vmem:[#allocation3] sm:$0xff]
    %1429 = vrot.lane.b32.xlu0 %v1427, 96
    %v1430 = vpop.permute.xlu0 %1429
    %1432 = vst.msk [vmem:[#allocation5] sm:$0xff] %vm222, %v1430
    %v1433 = vld [vmem:[#allocation5] sm:$0xff]
    %v1434 = vld [vmem:[%s7] sm:$0xff]
    %v1435 = vld [vmem:[%s7 + $0x8] sm:$0xff]
    %v1436 = vld [vmem:[%s7 + $0x10] sm:$0xff]
    %v1437 = vld [vmem:[%s7 + $0x18] sm:$0xff]
    %v1438 = vld [vmem:[%s7 + $0x20] sm:$0xff]
    %v1439 = vld [vmem:[%s7 + $0x28] sm:$0xff]
    %v1440 = vld [vmem:[%s7 + $0x30] sm:$0xff]
    %v1441 = vld [vmem:[%s7 + $0x38] sm:$0xff]
    %v1442 = vld [vmem:[%s7 + $0x40] sm:$0xff]
    %v1443 = vld [vmem:[%s7 + $0x48] sm:$0xff]
    %v1444 = vld [vmem:[%s7 + $0x50] sm:$0xff]
    %v1445 = vld [vmem:[%s7 + $0x58] sm:$0xff]
    %v1446 = vld [vmem:[%s7 + $0x60] sm:$0xff]
    %v1447 = vld [vmem:[%s7 + $0x68] sm:$0xff]
    %v1448 = vld [vmem:[%s7 + $0x70] sm:$0xff]
    %v1449 = vld [vmem:[%s7 + $0x78] sm:$0xff]
    %v1450 = vld [vmem:[%s8] sm:$0x1]
    %v1452 = vlaneseq
    %v1453 = vshrl.u32 %v1452, 7
    %v1454 = vsub.s32 0, %v1453
    %v1455 = vrot.slane %v1450, %v1454
    %1457 = vmatprep.subr.mxu0 0.0
    %1458 = vmatpush1.msra.mxu0 %v1434
    %1459 = vmatprep.subr.mxu0 0.0
    %1460 = vmatpush1.msra.mxu0 %v1435
    %1461 = vmatprep.subr.mxu0 0.0
    %1462 = vmatpush1.msra.mxu0 %v1436
    %1463 = vmatprep.subr.mxu0 0.0
    %1464 = vmatpush1.msra.mxu0 %v1437
    %1465 = vmatprep.subr.mxu0 0.0
    %1466 = vmatpush1.msra.mxu0 %v1438
    %1467 = vmatprep.subr.mxu0 0.0
    %1468 = vmatpush1.msra.mxu0 %v1439
    %1469 = vmatprep.subr.mxu0 0.0
    %1470 = vmatpush1.msra.mxu0 %v1440
    %1471 = vmatprep.subr.mxu0 0.0
    %1472 = vmatpush1.msra.mxu0 %v1441
    %1473 = vmatprep.subr.mxu0 0.0
    %1474 = vmatpush1.msra.mxu0 %v1442
    %1475 = vmatprep.subr.mxu0 0.0
    %1476 = vmatpush1.msra.mxu0 %v1443
    %1477 = vmatprep.subr.mxu0 0.0
    %1478 = vmatpush1.msra.mxu0 %v1444
    %1479 = vmatprep.subr.mxu0 0.0
    %1480 = vmatpush1.msra.mxu0 %v1445
    %1481 = vmatprep.subr.mxu0 0.0
    %1482 = vmatpush1.msra.mxu0 %v1446
    %1483 = vmatprep.subr.mxu0 0.0
    %1484 = vmatpush1.msra.mxu0 %v1447
    %1485 = vmatprep.subr.mxu0 0.0
    %1486 = vmatpush1.msra.mxu0 %v1448
    %1487 = vmatprep.subr.mxu0 0.0
    %1488 = vmatpush1.msra.mxu0 %v1449
    %1489 = vmatprep.subr.mxu0 0.0
    %1490 = vmatpush1.msra.mxu0 0.0
    %1491 = vmatprep.subr.mxu0 0.0
    %1492 = vmatpush1.msra.mxu0 0.0
    %1493 = vmatprep.subr.mxu0 0.0
    %1494 = vmatpush1.msra.mxu0 0.0
    %1495 = vmatprep.subr.mxu0 0.0
    %1496 = vmatpush1.msra.mxu0 0.0
    %1497 = vmatprep.subr.mxu0 0.0
    %1498 = vmatpush1.msra.mxu0 0.0
    %1499 = vmatprep.subr.mxu0 0.0
    %1500 = vmatpush1.msra.mxu0 0.0
    %1501 = vmatprep.subr.mxu0 0.0
    %1502 = vmatpush1.msra.mxu0 0.0
    %1503 = vmatprep.subr.mxu0 0.0
    %1504 = vmatpush1.msra.mxu0 0.0
    %1505 = vmatprep.subr.mxu0 0.0
    %1506 = vmatpush1.msra.mxu0 0.0
    %1507 = vmatprep.subr.mxu0 0.0
    %1508 = vmatpush1.msra.mxu0 0.0
    %1509 = vmatprep.subr.mxu0 0.0
    %1510 = vmatpush1.msra.mxu0 0.0
    %1511 = vmatprep.subr.mxu0 0.0
    %1512 = vmatpush1.msra.mxu0 0.0
    %1513 = vmatprep.subr.mxu0 0.0
    %1514 = vmatpush1.msra.mxu0 0.0
    %1515 = vmatprep.subr.mxu0 0.0
    %1516 = vmatpush1.msra.mxu0 0.0
    %1517 = vmatprep.subr.mxu0 0.0
    %1518 = vmatpush1.msra.mxu0 0.0
    %1519 = vmatprep.subr.mxu0 0.0
    %1520 = vmatpush1.msra.mxu0 0.0
    %1521 = vmatprep.mubr.f32.mxu0 0.0
    %1522 = vmatmul.mubr.f32.gmra.mrb[0].mxu0 %v1433
    %v1523 = vpop.f32.mrb[0].mxu0
    %v1524 = vadd.f32 %v1455, %v1523
    %v1525 = vpop.f32.mrb[0].mxu0
    %1526 = vdwg.mxu0
    %v1527 = vmul.f32 %v1524, 0.5
    %v1528 = vtanh.pop %v1527
    %v1529 = vadd.f32 %v1528, 1.0
    %v1530 = vmul.f32 %v1529, 0.5
    %v1531 = vtanh.pop %v1524
    %v1532 = vld [vmem:[#allocation4] sm:$0xff]
    %1534 = vrot.lane.b32.xlu0 %v1532, 16
    %v1535 = vpop.permute.xlu0 %1534
    %v1537 = vmul.f32 %v1530, %v1535
    %1539 = vrot.lane.b32.xlu0 %v1531, 96
    %v1540 = vpop.permute.xlu0 %1539
    %v1542 = vmul.f32 %v1530, %v1540
    %1544 = vrot.lane.b32.xlu0 %v1542, 16
    %v1545 = vpop.permute.xlu0 %1544
    %v1547 = vadd.f32 %v1537, %v1545
    %v1548 = vtanh.pop %v1547
    %1550 = vrot.lane.b32.xlu0 %v1548, 32
    %v1551 = vpop.permute.xlu0 %1550
    %v1553 = vmul.f32 %v1530, %v1551
    %1555 = vrot.lane.b32.xlu0 %v1553, 80
    %v1556 = vpop.permute.xlu0 %1555
    %1558 = vst.msk [vmem:[#allocation3] sm:$0xff] %vm56, %v1556
    %1560 = vrot.lane.b32.xlu0 %v1547, 112
    %v1561 = vpop.permute.xlu0 %1560
    %1563 = vst.msk [vmem:[#allocation4] sm:$0xff] %vm56, %v1561
    %s1564 = sld [smem:[#allocation9 + $0x3]]
    %p1565 = scmp.gt.s32.totalorder %s1564, 0
    // Predicated region
    $region50: #{tpu_custom_call.1} parent=1 // pred_check
      %p1566 = pneg %p1565
    $region51: #{tpu_custom_call.1} parent=1 // pred_check_branch
      %1568 = sbr.rel (%p1566) target = $region53
    $region52: #{tpu_custom_call.1} parent=1 // pred_region
      %s1569 = sld [smem:[#allocation8 + $0x27]]
      %s1570 = scalar_lea.vmem [#allocation2], %s1569
      %v1571 = vld [vmem:[%s1570] sm:$0x1]
      %vm1572 = vcmask 516096
      %1573 = vst.msk [vmem:[#allocation6] sm:$0x1] %vm1572, %v1571
      %s1574 = sld [smem:[#allocation8 + $0x28]]
      %s1575 = scalar_lea.vmem [#allocation2], %s1574
      %v1576 = vld [vmem:[%s1575] sm:$0x1]
      %1578 = vrot.lane.b32.xlu0 %v1576, 64
      %v1579 = vpop.permute.xlu0 %1578
      %vm1581 = vcmask 1040896
      %1582 = vst.msk [vmem:[#allocation6] sm:$0x1] %vm1581, %v1579
      %s1583 = sld [smem:[#allocation8 + $0x2d]]
      %s1584 = scalar_lea.vmem [#allocation2], %s1583
      %v1585 = vld [vmem:[%s1584] sm:$0x1]
      %1586 = vst.msk [vmem:[#allocation6 + $0x1] sm:$0x1] %vm1572, %v1585
      %s1587 = sld [smem:[#allocation8 + $0x2e]]
      %s1588 = scalar_lea.vmem [#allocation2], %s1587
      %v1589 = vld [vmem:[%s1588] sm:$0x1]
      %1591 = vrot.lane.b32.xlu0 %v1589, 64
      %v1592 = vpop.permute.xlu0 %1591
      %1594 = vst.msk [vmem:[#allocation6 + $0x1] sm:$0x1] %vm1581, %v1592
      %1595 = vst.msk [vmem:[#allocation6 + $0x8] sm:$0xff] %vm56, %v1556
      %v1596 = vld [vmem:[#allocation6] sm:$0xff]
      %v1597 = vld [vmem:[#allocation6 + $0x8] sm:$0xff]
      %v1598 = vld [vmem:[%s9] sm:$0xff]
      %v1599 = vld [vmem:[%s9 + $0x8] sm:$0xff]
      %v1600 = vld [vmem:[%s9 + $0x10] sm:$0xff]
      %v1601 = vld [vmem:[%s9 + $0x18] sm:$0xff]
      %v1602 = vld [vmem:[%s9 + $0x20] sm:$0xff]
      %v1603 = vld [vmem:[%s9 + $0x28] sm:$0xff]
      %v1604 = vld [vmem:[%s9 + $0x30] sm:$0xff]
      %v1605 = vld [vmem:[%s9 + $0x38] sm:$0xff]
      %v1606 = vld [vmem:[%s9 + $0x40] sm:$0xff]
      %v1607 = vld [vmem:[%s9 + $0x48] sm:$0xff]
      %v1608 = vld [vmem:[%s9 + $0x50] sm:$0xff]
      %v1609 = vld [vmem:[%s9 + $0x58] sm:$0xff]
      %v1610 = vld [vmem:[%s9 + $0x60] sm:$0xff]
      %v1611 = vld [vmem:[%s9 + $0x68] sm:$0xff]
      %v1612 = vld [vmem:[%s9 + $0x70] sm:$0xff]
      %v1613 = vld [vmem:[%s9 + $0x78] sm:$0xff]
      %v1614 = vld [vmem:[%s9 + $0x80] sm:$0xff]
      %v1615 = vld [vmem:[%s9 + $0x88] sm:$0xff]
      %v1616 = vld [vmem:[%s9 + $0x90] sm:$0xff]
      %v1617 = vld [vmem:[%s9 + $0x98] sm:$0xff]
      %v1618 = vld [vmem:[%s9 + $0xa0] sm:$0xff]
      %v1619 = vld [vmem:[%s9 + $0xa8] sm:$0xff]
      %v1620 = vld [vmem:[%s9 + $0xb0] sm:$0xff]
      %v1621 = vld [vmem:[%s9 + $0xb8] sm:$0xff]
      %v1622 = vld [vmem:[%s9 + $0xc0] sm:$0xff]
      %v1623 = vld [vmem:[%s9 + $0xc8] sm:$0xff]
      %v1624 = vld [vmem:[%s9 + $0xd0] sm:$0xff]
      %v1625 = vld [vmem:[%s9 + $0xd8] sm:$0xff]
      %v1626 = vld [vmem:[%s9 + $0xe0] sm:$0xff]
      %v1627 = vld [vmem:[%s9 + $0xe8] sm:$0xff]
      %v1628 = vld [vmem:[%s9 + $0xf0] sm:$0xff]
      %v1629 = vld [vmem:[%s9 + $0xf8] sm:$0xff]
      %v1630 = vld [vmem:[%s9 + $0x100] sm:$0xff]
      %v1631 = vld [vmem:[%s9 + $0x108] sm:$0xff]
      %v1632 = vld [vmem:[%s9 + $0x110] sm:$0xff]
      %v1633 = vld [vmem:[%s9 + $0x118] sm:$0xff]
      %v1634 = vld [vmem:[%s9 + $0x120] sm:$0xff]
      %v1635 = vld [vmem:[%s9 + $0x128] sm:$0xff]
      %v1636 = vld [vmem:[%s9 + $0x130] sm:$0xff]
      %v1637 = vld [vmem:[%s9 + $0x138] sm:$0xff]
      %v1638 = vld [vmem:[%s9 + $0x140] sm:$0xff]
      %v1639 = vld [vmem:[%s9 + $0x148] sm:$0xff]
      %v1640 = vld [vmem:[%s9 + $0x150] sm:$0xff]
      %v1641 = vld [vmem:[%s9 + $0x158] sm:$0xff]
      %v1642 = vld [vmem:[%s9 + $0x160] sm:$0xff]
      %v1643 = vld [vmem:[%s9 + $0x168] sm:$0xff]
      %v1644 = vld [vmem:[%s9 + $0x170] sm:$0xff]
      %v1645 = vld [vmem:[%s9 + $0x178] sm:$0xff]
      %v1646 = vld [vmem:[%s9 + $0x180] sm:$0xff]
      %v1647 = vld [vmem:[%s9 + $0x188] sm:$0xff]
      %v1648 = vld [vmem:[%s9 + $0x190] sm:$0xff]
      %v1649 = vld [vmem:[%s9 + $0x198] sm:$0xff]
      %v1650 = vld [vmem:[%s9 + $0x1a0] sm:$0xff]
      %v1651 = vld [vmem:[%s9 + $0x1a8] sm:$0xff]
      %v1652 = vld [vmem:[%s9 + $0x1b0] sm:$0xff]
      %v1653 = vld [vmem:[%s9 + $0x1b8] sm:$0xff]
      %v1654 = vld [vmem:[%s9 + $0x1c0] sm:$0xff]
      %v1655 = vld [vmem:[%s9 + $0x1c8] sm:$0xff]
      %v1656 = vld [vmem:[%s9 + $0x1d0] sm:$0xff]
      %v1657 = vld [vmem:[%s9 + $0x1d8] sm:$0xff]
      %v1658 = vld [vmem:[%s9 + $0x1e0] sm:$0xff]
      %v1659 = vld [vmem:[%s9 + $0x1e8] sm:$0xff]
      %v1660 = vld [vmem:[%s9 + $0x1f0] sm:$0xff]
      %v1661 = vld [vmem:[%s9 + $0x1f8] sm:$0xff]
      %v1662 = vld [vmem:[%s10] sm:$0x3]
      %v1664 = vlaneseq
      %v1665 = vshrl.u32 %v1664, 7
      %v1666 = vsub.s32 0, %v1665
      %v1667 = vrot.slane %v1662, %v1666
      %v1668 = vlaneseq
      %v1669 = vshrl.u32 %v1668, 7
      %v1670 = vsub.s32 1, %v1669
      %v1671 = vrot.slane %v1662, %v1670
      %1674 = vmatprep.subr.mxu0 %v1599
      %1675 = vmatpush1.msra.mxu0 %v1598
      %1676 = vmatprep.subr.mxu0 %v1601
      %1677 = vmatpush1.msra.mxu0 %v1600
      %1678 = vmatprep.subr.mxu0 %v1603
      %1679 = vmatpush1.msra.mxu0 %v1602
      %1680 = vmatprep.subr.mxu0 %v1605
      %1681 = vmatpush1.msra.mxu0 %v1604
      %1682 = vmatprep.subr.mxu0 %v1607
      %1683 = vmatpush1.msra.mxu0 %v1606
      %1684 = vmatprep.subr.mxu0 %v1609
      %1685 = vmatpush1.msra.mxu0 %v1608
      %1686 = vmatprep.subr.mxu0 %v1611
      %1687 = vmatpush1.msra.mxu0 %v1610
      %1688 = vmatprep.subr.mxu0 %v1613
      %1689 = vmatpush1.msra.mxu0 %v1612
      %1690 = vmatprep.subr.mxu0 %v1615
      %1691 = vmatpush1.msra.mxu0 %v1614
      %1692 = vmatprep.subr.mxu0 %v1617
      %1693 = vmatpush1.msra.mxu0 %v1616
      %1694 = vmatprep.subr.mxu0 %v1619
      %1695 = vmatpush1.msra.mxu0 %v1618
      %1696 = vmatprep.subr.mxu0 %v1621
      %1697 = vmatpush1.msra.mxu0 %v1620
      %1698 = vmatprep.subr.mxu0 %v1623
      %1699 = vmatpush1.msra.mxu0 %v1622
      %1700 = vmatprep.subr.mxu0 %v1625
      %1701 = vmatpush1.msra.mxu0 %v1624
      %1702 = vmatprep.subr.mxu0 %v1627
      %1703 = vmatpush1.msra.mxu0 %v1626
      %1704 = vmatprep.subr.mxu0 %v1629
      %1705 = vmatpush1.msra.mxu0 %v1628
      %1706 = vmatprep.subr.mxu0 %v1631
      %1707 = vmatpush1.msra.mxu0 %v1630
      %1708 = vmatprep.subr.mxu0 %v1633
      %1709 = vmatpush1.msra.mxu0 %v1632
      %1710 = vmatprep.subr.mxu0 %v1635
      %1711 = vmatpush1.msra.mxu0 %v1634
      %1712 = vmatprep.subr.mxu0 %v1637
      %1713 = vmatpush1.msra.mxu0 %v1636
      %1714 = vmatprep.subr.mxu0 %v1639
      %1715 = vmatpush1.msra.mxu0 %v1638
      %1716 = vmatprep.subr.mxu0 %v1641
      %1717 = vmatpush1.msra.mxu0 %v1640
      %1718 = vmatprep.subr.mxu0 %v1643
      %1719 = vmatpush1.msra.mxu0 %v1642
      %1720 = vmatprep.subr.mxu0 %v1645
      %1721 = vmatpush1.msra.mxu0 %v1644
      %1722 = vmatprep.subr.mxu0 %v1647
      %1723 = vmatpush1.msra.mxu0 %v1646
      %1724 = vmatprep.subr.mxu0 %v1649
      %1725 = vmatpush1.msra.mxu0 %v1648
      %1726 = vmatprep.subr.mxu0 %v1651
      %1727 = vmatpush1.msra.mxu0 %v1650
      %1728 = vmatprep.subr.mxu0 %v1653
      %1729 = vmatpush1.msra.mxu0 %v1652
      %1730 = vmatprep.subr.mxu0 %v1655
      %1731 = vmatpush1.msra.mxu0 %v1654
      %1732 = vmatprep.subr.mxu0 %v1657
      %1733 = vmatpush1.msra.mxu0 %v1656
      %1734 = vmatprep.subr.mxu0 %v1659
      %1735 = vmatpush1.msra.mxu0 %v1658
      %1736 = vmatprep.subr.mxu0 %v1661
      %1737 = vmatpush1.msra.mxu0 %v1660
      %1738 = vmatprep.mubr.f32.mxu0 %v1597
      %1739 = vmatmul.mubr.f32.gmra.mrb[0].mxu0 %v1596
      %v1740 = vpop.f32.mrb[0].mxu0
      %v1741 = vadd.f32 %v1667, %v1740
      %v1742 = vpop.f32.mrb[0].mxu0
      %v1743 = vadd.f32 %v1671, %v1742
      %1744 = vdwg.mxu0
      %v1745 = vmul.f32 %v1741, 0.5
      %v1746 = vmul.f32 %v1743, 0.5
      %v1747 = vtanh.pop %v1745
      %v1748 = vtanh.pop %v1746
      %v1749 = vadd.f32 %v1747, 1.0
      %v1750 = vadd.f32 %v1748, 1.0
      %v1751 = vmul.f32 %v1749, 0.5
      %v1752 = vmul.f32 %v1750, 0.5
      %v1753 = vtanh.pop %v1741
      %v1754 = vld [vmem:[#allocation6] sm:$0xff]
      %1756 = vrot.lane.b32.xlu0 %v1751, 96
      %v1757 = vpop.permute.xlu0 %1756
      %v1759 = vmul.f32 %v1753, %v1757
      %1761 = vrot.lane.b32.xlu0 %v1754, 32
      %v1762 = vpop.permute.xlu0 %1761
      %v1764 = vmul.f32 %v1751, %v1762
      %1766 = vrot.lane.b32.xlu0 %v1764, 64
      %v1767 = vpop.permute.xlu0 %1766
      %v1769 = vadd.f32 %v1759, %v1767
      %v1770 = vmul.f32 %v1751, %v1754
      %1772 = vrot.lane.b32.xlu0 %v1770, 32
      %v1773 = vpop.permute.xlu0 %1772
      %v1775 = vadd.f32 %v1769, %v1773
      %v1776 = vtanh.pop %v1775
      %v1777 = vmul.f32 %v1752, %v1776
      %1779 = vrot.lane.b32.xlu0 %v1775, 32
      %v1780 = vpop.permute.xlu0 %1779
      %v1782 = vsel %vm162, %v1777, %v1780
      %s1783 = sld [smem:[#allocation8 + $0x29]]
      %s1784 = scalar_lea.vmem [#allocation2], %s1783
      %1785 = vst.msk [vmem:[%s1784] sm:$0x1] %vm1572, %v1782
      %s1786 = sld [smem:[#allocation8 + $0x2f]]
      %s1787 = scalar_lea.vmem [#allocation2], %s1786
      %vm1788 = vcmask 517121
      %1789 = vst.msk [vmem:[%s1787 - $0x1] sm:$0x2] %vm1788, %v1782
    $region53: #{tpu_custom_call.1} parent=1 // pred_fallthru
      _
    %s1790 = sld [smem:[#allocation8 + $0x30]]
    %s1791 = scalar_lea.vmem [#allocation2], %s1790
    %v1792 = vld [vmem:[%s1791] sm:$0x1]
    %1793 = vst.msk [vmem:[#allocation5] sm:$0x1] %vm177, %v1792
    %s1794 = sld [smem:[#allocation8 + $0x31]]
    %s1795 = scalar_lea.vmem [#allocation2], %s1794
    %v1796 = vld [vmem:[%s1795] sm:$0x1]
    %1798 = vrot.lane.b32.xlu0 %v1796, 32
    %v1799 = vpop.permute.xlu0 %1798
    %1801 = vst.msk [vmem:[#allocation5] sm:$0x1] %vm186, %v1799
    %s1802 = sld [smem:[#allocation8 + $0x32]]
    %s1803 = scalar_lea.vmem [#allocation2], %s1802
    %v1804 = vld [vmem:[%s1803] sm:$0x1]
    %1806 = vrot.lane.b32.xlu0 %v1804, 64
    %v1807 = vpop.permute.xlu0 %1806
    %1809 = vst.msk [vmem:[#allocation5] sm:$0x1] %vm195, %v1807
    %s1810 = sld [smem:[#allocation8 + $0x36]]
    %s1811 = scalar_lea.vmem [#allocation2], %s1810
    %v1812 = vld [vmem:[%s1811] sm:$0x1]
    %1813 = vst.msk [vmem:[#allocation5 + $0x1] sm:$0x1] %vm177, %v1812
    %s1814 = sld [smem:[#allocation8 + $0x37]]
    %s1815 = scalar_lea.vmem [#allocation2], %s1814
    %v1816 = vld [vmem:[%s1815] sm:$0x1]
    %1818 = vrot.lane.b32.xlu0 %v1816, 32
    %v1819 = vpop.permute.xlu0 %1818
    %1821 = vst.msk [vmem:[#allocation5 + $0x1] sm:$0x1] %vm186, %v1819
    %s1822 = sld [smem:[#allocation8 + $0x38]]
    %s1823 = scalar_lea.vmem [#allocation2], %s1822
    %v1824 = vld [vmem:[%s1823] sm:$0x1]
    %1826 = vrot.lane.b32.xlu0 %v1824, 64
    %v1827 = vpop.permute.xlu0 %1826
    %1829 = vst.msk [vmem:[#allocation5 + $0x1] sm:$0x1] %vm195, %v1827
    %v1830 = vld [vmem:[#allocation3] sm:$0xff]
    %1832 = vrot.lane.b32.xlu0 %v1830, 96
    %v1833 = vpop.permute.xlu0 %1832
    %1835 = vst.msk [vmem:[#allocation5] sm:$0xff] %vm222, %v1833
    %v1836 = vld [vmem:[#allocation5] sm:$0xff]
    %v1837 = vld [vmem:[%s7] sm:$0xff]
    %v1838 = vld [vmem:[%s7 + $0x8] sm:$0xff]
    %v1839 = vld [vmem:[%s7 + $0x10] sm:$0xff]
    %v1840 = vld [vmem:[%s7 + $0x18] sm:$0xff]
    %v1841 = vld [vmem:[%s7 + $0x20] sm:$0xff]
    %v1842 = vld [vmem:[%s7 + $0x28] sm:$0xff]
    %v1843 = vld [vmem:[%s7 + $0x30] sm:$0xff]
    %v1844 = vld [vmem:[%s7 + $0x38] sm:$0xff]
    %v1845 = vld [vmem:[%s7 + $0x40] sm:$0xff]
    %v1846 = vld [vmem:[%s7 + $0x48] sm:$0xff]
    %v1847 = vld [vmem:[%s7 + $0x50] sm:$0xff]
    %v1848 = vld [vmem:[%s7 + $0x58] sm:$0xff]
    %v1849 = vld [vmem:[%s7 + $0x60] sm:$0xff]
    %v1850 = vld [vmem:[%s7 + $0x68] sm:$0xff]
    %v1851 = vld [vmem:[%s7 + $0x70] sm:$0xff]
    %v1852 = vld [vmem:[%s7 + $0x78] sm:$0xff]
    %v1853 = vld [vmem:[%s8] sm:$0x1]
    %v1855 = vlaneseq
    %v1856 = vshrl.u32 %v1855, 7
    %v1857 = vsub.s32 0, %v1856
    %v1858 = vrot.slane %v1853, %v1857
    %1860 = vmatprep.subr.mxu0 0.0
    %1861 = vmatpush1.msra.mxu0 %v1837
    %1862 = vmatprep.subr.mxu0 0.0
    %1863 = vmatpush1.msra.mxu0 %v1838
    %1864 = vmatprep.subr.mxu0 0.0
    %1865 = vmatpush1.msra.mxu0 %v1839
    %1866 = vmatprep.subr.mxu0 0.0
    %1867 = vmatpush1.msra.mxu0 %v1840
    %1868 = vmatprep.subr.mxu0 0.0
    %1869 = vmatpush1.msra.mxu0 %v1841
    %1870 = vmatprep.subr.mxu0 0.0
    %1871 = vmatpush1.msra.mxu0 %v1842
    %1872 = vmatprep.subr.mxu0 0.0
    %1873 = vmatpush1.msra.mxu0 %v1843
    %1874 = vmatprep.subr.mxu0 0.0
    %1875 = vmatpush1.msra.mxu0 %v1844
    %1876 = vmatprep.subr.mxu0 0.0
    %1877 = vmatpush1.msra.mxu0 %v1845
    %1878 = vmatprep.subr.mxu0 0.0
    %1879 = vmatpush1.msra.mxu0 %v1846
    %1880 = vmatprep.subr.mxu0 0.0
    %1881 = vmatpush1.msra.mxu0 %v1847
    %1882 = vmatprep.subr.mxu0 0.0
    %1883 = vmatpush1.msra.mxu0 %v1848
    %1884 = vmatprep.subr.mxu0 0.0
    %1885 = vmatpush1.msra.mxu0 %v1849
    %1886 = vmatprep.subr.mxu0 0.0
    %1887 = vmatpush1.msra.mxu0 %v1850
    %1888 = vmatprep.subr.mxu0 0.0
    %1889 = vmatpush1.msra.mxu0 %v1851
    %1890 = vmatprep.subr.mxu0 0.0
    %1891 = vmatpush1.msra.mxu0 %v1852
    %1892 = vmatprep.subr.mxu0 0.0
    %1893 = vmatpush1.msra.mxu0 0.0
    %1894 = vmatprep.subr.mxu0 0.0
    %1895 = vmatpush1.msra.mxu0 0.0
    %1896 = vmatprep.subr.mxu0 0.0
    %1897 = vmatpush1.msra.mxu0 0.0
    %1898 = vmatprep.subr.mxu0 0.0
    %1899 = vmatpush1.msra.mxu0 0.0
    %1900 = vmatprep.subr.mxu0 0.0
    %1901 = vmatpush1.msra.mxu0 0.0
    %1902 = vmatprep.subr.mxu0 0.0
    %1903 = vmatpush1.msra.mxu0 0.0
    %1904 = vmatprep.subr.mxu0 0.0
    %1905 = vmatpush1.msra.mxu0 0.0
    %1906 = vmatprep.subr.mxu0 0.0
    %1907 = vmatpush1.msra.mxu0 0.0
    %1908 = vmatprep.subr.mxu0 0.0
    %1909 = vmatpush1.msra.mxu0 0.0
    %1910 = vmatprep.subr.mxu0 0.0
    %1911 = vmatpush1.msra.mxu0 0.0
    %1912 = vmatprep.subr.mxu0 0.0
    %1913 = vmatpush1.msra.mxu0 0.0
    %1914 = vmatprep.subr.mxu0 0.0
    %1915 = vmatpush1.msra.mxu0 0.0
    %1916 = vmatprep.subr.mxu0 0.0
    %1917 = vmatpush1.msra.mxu0 0.0
    %1918 = vmatprep.subr.mxu0 0.0
    %1919 = vmatpush1.msra.mxu0 0.0
    %1920 = vmatprep.subr.mxu0 0.0
    %1921 = vmatpush1.msra.mxu0 0.0
    %1922 = vmatprep.subr.mxu0 0.0
    %1923 = vmatpush1.msra.mxu0 0.0
    %1924 = vmatprep.mubr.f32.mxu0 0.0
    %1925 = vmatmul.mubr.f32.gmra.mrb[0].mxu0 %v1836
    %v1926 = vpop.f32.mrb[0].mxu0
    %v1927 = vadd.f32 %v1858, %v1926
    %v1928 = vpop.f32.mrb[0].mxu0
    %1929 = vdwg.mxu0
    %v1930 = vmul.f32 %v1927, 0.5
    %v1931 = vtanh.pop %v1930
    %v1932 = vadd.f32 %v1931, 1.0
    %v1933 = vmul.f32 %v1932, 0.5
    %v1934 = vtanh.pop %v1927
    %v1935 = vld [vmem:[#allocation4] sm:$0xff]
    %1937 = vrot.lane.b32.xlu0 %v1935, 16
    %v1938 = vpop.permute.xlu0 %1937
    %v1940 = vmul.f32 %v1933, %v1938
    %1942 = vrot.lane.b32.xlu0 %v1934, 96
    %v1943 = vpop.permute.xlu0 %1942
    %v1945 = vmul.f32 %v1933, %v1943
    %1947 = vrot.lane.b32.xlu0 %v1945, 16
    %v1948 = vpop.permute.xlu0 %1947
    %v1950 = vadd.f32 %v1940, %v1948
    %v1951 = vtanh.pop %v1950
    %1953 = vrot.lane.b32.xlu0 %v1951, 32
    %v1954 = vpop.permute.xlu0 %1953
    %v1956 = vmul.f32 %v1933, %v1954
    %1958 = vrot.lane.b32.xlu0 %v1956, 80
    %v1959 = vpop.permute.xlu0 %1958
    %1961 = vst.msk [vmem:[#allocation3] sm:$0xff] %vm56, %v1959
    %1963 = vrot.lane.b32.xlu0 %v1950, 112
    %v1964 = vpop.permute.xlu0 %1963
    %1966 = vst.msk [vmem:[#allocation4] sm:$0xff] %vm56, %v1964
    %s1967 = sld [smem:[#allocation9 + $0x4]]
    %p1968 = scmp.gt.s32.totalorder %s1967, 0
    // Predicated region
    $region54: #{tpu_custom_call.1} parent=1 // pred_check
      %p1969 = pneg %p1968
    $region55: #{tpu_custom_call.1} parent=1 // pred_check_branch
      %1971 = sbr.rel (%p1969) target = $region57
    $region56: #{tpu_custom_call.1} parent=1 // pred_region
      %s1972 = sld [smem:[#allocation8 + $0x33]]
      %s1973 = scalar_lea.vmem [#allocation2], %s1972
      %v1974 = vld [vmem:[%s1973] sm:$0x1]
      %vm1975 = vcmask 516096
      %1976 = vst.msk [vmem:[#allocation6] sm:$0x1] %vm1975, %v1974
      %s1977 = sld [smem:[#allocation8 + $0x34]]
      %s1978 = scalar_lea.vmem [#allocation2], %s1977
      %v1979 = vld [vmem:[%s1978] sm:$0x1]
      %1981 = vrot.lane.b32.xlu0 %v1979, 64
      %v1982 = vpop.permute.xlu0 %1981
      %vm1984 = vcmask 1040896
      %1985 = vst.msk [vmem:[#allocation6] sm:$0x1] %vm1984, %v1982
      %s1986 = sld [smem:[#allocation8 + $0x39]]
      %s1987 = scalar_lea.vmem [#allocation2], %s1986
      %v1988 = vld [vmem:[%s1987] sm:$0x1]
      %1989 = vst.msk [vmem:[#allocation6 + $0x1] sm:$0x1] %vm1975, %v1988
      %s1990 = sld [smem:[#allocation8 + $0x3a]]
      %s1991 = scalar_lea.vmem [#allocation2], %s1990
      %v1992 = vld [vmem:[%s1991] sm:$0x1]
      %1994 = vrot.lane.b32.xlu0 %v1992, 64
      %v1995 = vpop.permute.xlu0 %1994
      %1997 = vst.msk [vmem:[#allocation6 + $0x1] sm:$0x1] %vm1984, %v1995
      %1998 = vst.msk [vmem:[#allocation6 + $0x8] sm:$0xff] %vm56, %v1959
      %v1999 = vld [vmem:[#allocation6] sm:$0xff]
      %v2000 = vld [vmem:[#allocation6 + $0x8] sm:$0xff]
      %v2001 = vld [vmem:[%s9] sm:$0xff]
      %v2002 = vld [vmem:[%s9 + $0x8] sm:$0xff]
      %v2003 = vld [vmem:[%s9 + $0x10] sm:$0xff]
      %v2004 = vld [vmem:[%s9 + $0x18] sm:$0xff]
      %v2005 = vld [vmem:[%s9 + $0x20] sm:$0xff]
      %v2006 = vld [vmem:[%s9 + $0x28] sm:$0xff]
      %v2007 = vld [vmem:[%s9 + $0x30] sm:$0xff]
      %v2008 = vld [vmem:[%s9 + $0x38] sm:$0xff]
      %v2009 = vld [vmem:[%s9 + $0x40] sm:$0xff]
      %v2010 = vld [vmem:[%s9 + $0x48] sm:$0xff]
      %v2011 = vld [vmem:[%s9 + $0x50] sm:$0xff]
      %v2012 = vld [vmem:[%s9 + $0x58] sm:$0xff]
      %v2013 = vld [vmem:[%s9 + $0x60] sm:$0xff]
      %v2014 = vld [vmem:[%s9 + $0x68] sm:$0xff]
      %v2015 = vld [vmem:[%s9 + $0x70] sm:$0xff]
      %v2016 = vld [vmem:[%s9 + $0x78] sm:$0xff]
      %v2017 = vld [vmem:[%s9 + $0x80] sm:$0xff]
      %v2018 = vld [vmem:[%s9 + $0x88] sm:$0xff]
      %v2019 = vld [vmem:[%s9 + $0x90] sm:$0xff]
      %v2020 = vld [vmem:[%s9 + $0x98] sm:$0xff]
      %v2021 = vld [vmem:[%s9 + $0xa0] sm:$0xff]
      %v2022 = vld [vmem:[%s9 + $0xa8] sm:$0xff]
      %v2023 = vld [vmem:[%s9 + $0xb0] sm:$0xff]
      %v2024 = vld [vmem:[%s9 + $0xb8] sm:$0xff]
      %v2025 = vld [vmem:[%s9 + $0xc0] sm:$0xff]
      %v2026 = vld [vmem:[%s9 + $0xc8] sm:$0xff]
      %v2027 = vld [vmem:[%s9 + $0xd0] sm:$0xff]
      %v2028 = vld [vmem:[%s9 + $0xd8] sm:$0xff]
      %v2029 = vld [vmem:[%s9 + $0xe0] sm:$0xff]
      %v2030 = vld [vmem:[%s9 + $0xe8] sm:$0xff]
      %v2031 = vld [vmem:[%s9 + $0xf0] sm:$0xff]
      %v2032 = vld [vmem:[%s9 + $0xf8] sm:$0xff]
      %v2033 = vld [vmem:[%s9 + $0x100] sm:$0xff]
      %v2034 = vld [vmem:[%s9 + $0x108] sm:$0xff]
      %v2035 = vld [vmem:[%s9 + $0x110] sm:$0xff]
      %v2036 = vld [vmem:[%s9 + $0x118] sm:$0xff]
      %v2037 = vld [vmem:[%s9 + $0x120] sm:$0xff]
      %v2038 = vld [vmem:[%s9 + $0x128] sm:$0xff]
      %v2039 = vld [vmem:[%s9 + $0x130] sm:$0xff]
      %v2040 = vld [vmem:[%s9 + $0x138] sm:$0xff]
      %v2041 = vld [vmem:[%s9 + $0x140] sm:$0xff]
      %v2042 = vld [vmem:[%s9 + $0x148] sm:$0xff]
      %v2043 = vld [vmem:[%s9 + $0x150] sm:$0xff]
      %v2044 = vld [vmem:[%s9 + $0x158] sm:$0xff]
      %v2045 = vld [vmem:[%s9 + $0x160] sm:$0xff]
      %v2046 = vld [vmem:[%s9 + $0x168] sm:$0xff]
      %v2047 = vld [vmem:[%s9 + $0x170] sm:$0xff]
      %v2048 = vld [vmem:[%s9 + $0x178] sm:$0xff]
      %v2049 = vld [vmem:[%s9 + $0x180] sm:$0xff]
      %v2050 = vld [vmem:[%s9 + $0x188] sm:$0xff]
      %v2051 = vld [vmem:[%s9 + $0x190] sm:$0xff]
      %v2052 = vld [vmem:[%s9 + $0x198] sm:$0xff]
      %v2053 = vld [vmem:[%s9 + $0x1a0] sm:$0xff]
      %v2054 = vld [vmem:[%s9 + $0x1a8] sm:$0xff]
      %v2055 = vld [vmem:[%s9 + $0x1b0] sm:$0xff]
      %v2056 = vld [vmem:[%s9 + $0x1b8] sm:$0xff]
      %v2057 = vld [vmem:[%s9 + $0x1c0] sm:$0xff]
      %v2058 = vld [vmem:[%s9 + $0x1c8] sm:$0xff]
      %v2059 = vld [vmem:[%s9 + $0x1d0] sm:$0xff]
      %v2060 = vld [vmem:[%s9 + $0x1d8] sm:$0xff]
      %v2061 = vld [vmem:[%s9 + $0x1e0] sm:$0xff]
      %v2062 = vld [vmem:[%s9 + $0x1e8] sm:$0xff]
      %v2063 = vld [vmem:[%s9 + $0x1f0] sm:$0xff]
      %v2064 = vld [vmem:[%s9 + $0x1f8] sm:$0xff]
      %v2065 = vld [vmem:[%s10] sm:$0x3]
      %v2067 = vlaneseq
      %v2068 = vshrl.u32 %v2067, 7
      %v2069 = vsub.s32 0, %v2068
      %v2070 = vrot.slane %v2065, %v2069
      %v2071 = vlaneseq
      %v2072 = vshrl.u32 %v2071, 7
      %v2073 = vsub.s32 1, %v2072
      %v2074 = vrot.slane %v2065, %v2073
      %2077 = vmatprep.subr.mxu0 %v2002
      %2078 = vmatpush1.msra.mxu0 %v2001
      %2079 = vmatprep.subr.mxu0 %v2004
      %2080 = vmatpush1.msra.mxu0 %v2003
      %2081 = vmatprep.subr.mxu0 %v2006
      %2082 = vmatpush1.msra.mxu0 %v2005
      %2083 = vmatprep.subr.mxu0 %v2008
      %2084 = vmatpush1.msra.mxu0 %v2007
      %2085 = vmatprep.subr.mxu0 %v2010
      %2086 = vmatpush1.msra.mxu0 %v2009
      %2087 = vmatprep.subr.mxu0 %v2012
      %2088 = vmatpush1.msra.mxu0 %v2011
      %2089 = vmatprep.subr.mxu0 %v2014
      %2090 = vmatpush1.msra.mxu0 %v2013
      %2091 = vmatprep.subr.mxu0 %v2016
      %2092 = vmatpush1.msra.mxu0 %v2015
      %2093 = vmatprep.subr.mxu0 %v2018
      %2094 = vmatpush1.msra.mxu0 %v2017
      %2095 = vmatprep.subr.mxu0 %v2020
      %2096 = vmatpush1.msra.mxu0 %v2019
      %2097 = vmatprep.subr.mxu0 %v2022
      %2098 = vmatpush1.msra.mxu0 %v2021
      %2099 = vmatprep.subr.mxu0 %v2024
      %2100 = vmatpush1.msra.mxu0 %v2023
      %2101 = vmatprep.subr.mxu0 %v2026
      %2102 = vmatpush1.msra.mxu0 %v2025
      %2103 = vmatprep.subr.mxu0 %v2028
      %2104 = vmatpush1.msra.mxu0 %v2027
      %2105 = vmatprep.subr.mxu0 %v2030
      %2106 = vmatpush1.msra.mxu0 %v2029
      %2107 = vmatprep.subr.mxu0 %v2032
      %2108 = vmatpush1.msra.mxu0 %v2031
      %2109 = vmatprep.subr.mxu0 %v2034
      %2110 = vmatpush1.msra.mxu0 %v2033
      %2111 = vmatprep.subr.mxu0 %v2036
      %2112 = vmatpush1.msra.mxu0 %v2035
      %2113 = vmatprep.subr.mxu0 %v2038
      %2114 = vmatpush1.msra.mxu0 %v2037
      %2115 = vmatprep.subr.mxu0 %v2040
      %2116 = vmatpush1.msra.mxu0 %v2039
      %2117 = vmatprep.subr.mxu0 %v2042
      %2118 = vmatpush1.msra.mxu0 %v2041
      %2119 = vmatprep.subr.mxu0 %v2044
      %2120 = vmatpush1.msra.mxu0 %v2043
      %2121 = vmatprep.subr.mxu0 %v2046
      %2122 = vmatpush1.msra.mxu0 %v2045
      %2123 = vmatprep.subr.mxu0 %v2048
      %2124 = vmatpush1.msra.mxu0 %v2047
      %2125 = vmatprep.subr.mxu0 %v2050
      %2126 = vmatpush1.msra.mxu0 %v2049
      %2127 = vmatprep.subr.mxu0 %v2052
      %2128 = vmatpush1.msra.mxu0 %v2051
      %2129 = vmatprep.subr.mxu0 %v2054
      %2130 = vmatpush1.msra.mxu0 %v2053
      %2131 = vmatprep.subr.mxu0 %v2056
      %2132 = vmatpush1.msra.mxu0 %v2055
      %2133 = vmatprep.subr.mxu0 %v2058
      %2134 = vmatpush1.msra.mxu0 %v2057
      %2135 = vmatprep.subr.mxu0 %v2060
      %2136 = vmatpush1.msra.mxu0 %v2059
      %2137 = vmatprep.subr.mxu0 %v2062
      %2138 = vmatpush1.msra.mxu0 %v2061
      %2139 = vmatprep.subr.mxu0 %v2064
      %2140 = vmatpush1.msra.mxu0 %v2063
      %2141 = vmatprep.mubr.f32.mxu0 %v2000
      %2142 = vmatmul.mubr.f32.gmra.mrb[0].mxu0 %v1999
      %v2143 = vpop.f32.mrb[0].mxu0
      %v2144 = vadd.f32 %v2070, %v2143
      %v2145 = vpop.f32.mrb[0].mxu0
      %v2146 = vadd.f32 %v2074, %v2145
      %2147 = vdwg.mxu0
      %v2148 = vmul.f32 %v2144, 0.5
      %v2149 = vmul.f32 %v2146, 0.5
      %v2150 = vtanh.pop %v2148
      %v2151 = vtanh.pop %v2149
      %v2152 = vadd.f32 %v2150, 1.0
      %v2153 = vadd.f32 %v2151, 1.0
      %v2154 = vmul.f32 %v2152, 0.5
      %v2155 = vmul.f32 %v2153, 0.5
      %v2156 = vtanh.pop %v2144
      %v2157 = vld [vmem:[#allocation6] sm:$0xff]
      %2159 = vrot.lane.b32.xlu0 %v2154, 96
      %v2160 = vpop.permute.xlu0 %2159
      %v2162 = vmul.f32 %v2156, %v2160
      %2164 = vrot.lane.b32.xlu0 %v2157, 32
      %v2165 = vpop.permute.xlu0 %2164
      %v2167 = vmul.f32 %v2154, %v2165
      %2169 = vrot.lane.b32.xlu0 %v2167, 64
      %v2170 = vpop.permute.xlu0 %2169
      %v2172 = vadd.f32 %v2162, %v2170
      %v2173 = vmul.f32 %v2154, %v2157
      %2175 = vrot.lane.b32.xlu0 %v2173, 32
      %v2176 = vpop.permute.xlu0 %2175
      %v2178 = vadd.f32 %v2172, %v2176
      %v2179 = vtanh.pop %v2178
      %v2180 = vmul.f32 %v2155, %v2179
      %2182 = vrot.lane.b32.xlu0 %v2178, 32
      %v2183 = vpop.permute.xlu0 %2182
      %v2185 = vsel %vm162, %v2180, %v2183
      %s2186 = sld [smem:[#allocation8 + $0x35]]
      %s2187 = scalar_lea.vmem [#allocation2], %s2186
      %2188 = vst.msk [vmem:[%s2187] sm:$0x1] %vm1975, %v2185
      %s2189 = sld [smem:[#allocation8 + $0x3b]]
      %s2190 = scalar_lea.vmem [#allocation2], %s2189
      %vm2191 = vcmask 517121
      %2192 = vst.msk [vmem:[%s2190 - $0x1] sm:$0x2] %vm2191, %v2185
    $region57: #{tpu_custom_call.1} parent=1 // pred_fallthru
      _
    %s2193 = sld [smem:[#allocation8 + $0x3c]]
    %s2194 = scalar_lea.vmem [#allocation2], %s2193
    %v2195 = vld [vmem:[%s2194] sm:$0x1]
    %2196 = vst.msk [vmem:[#allocation5] sm:$0x1] %vm177, %v2195
    %s2197 = sld [smem:[#allocation8 + $0x3d]]
    %s2198 = scalar_lea.vmem [#allocation2], %s2197
    %v2199 = vld [vmem:[%s2198] sm:$0x1]
    %2201 = vrot.lane.b32.xlu0 %v2199, 32
    %v2202 = vpop.permute.xlu0 %2201
    %2204 = vst.msk [vmem:[#allocation5] sm:$0x1] %vm186, %v2202
    %s2205 = sld [smem:[#allocation8 + $0x3e]]
    %s2206 = scalar_lea.vmem [#allocation2], %s2205
    %v2207 = vld [vmem:[%s2206] sm:$0x1]
    %2209 = vrot.lane.b32.xlu0 %v2207, 64
    %v2210 = vpop.permute.xlu0 %2209
    %2212 = vst.msk [vmem:[#allocation5] sm:$0x1] %vm195, %v2210
    %s2213 = sld [smem:[#allocation8 + $0x42]]
    %s2214 = scalar_lea.vmem [#allocation2], %s2213
    %v2215 = vld [vmem:[%s2214] sm:$0x1]
    %2216 = vst.msk [vmem:[#allocation5 + $0x1] sm:$0x1] %vm177, %v2215
    %s2217 = sld [smem:[#allocation8 + $0x43]]
    %s2218 = scalar_lea.vmem [#allocation2], %s2217
    %v2219 = vld [vmem:[%s2218] sm:$0x1]
    %2221 = vrot.lane.b32.xlu0 %v2219, 32
    %v2222 = vpop.permute.xlu0 %2221
    %2224 = vst.msk [vmem:[#allocation5 + $0x1] sm:$0x1] %vm186, %v2222
    %s2225 = sld [smem:[#allocation8 + $0x44]]
    %s2226 = scalar_lea.vmem [#allocation2], %s2225
    %v2227 = vld [vmem:[%s2226] sm:$0x1]
    %2229 = vrot.lane.b32.xlu0 %v2227, 64
    %v2230 = vpop.permute.xlu0 %2229
    %2232 = vst.msk [vmem:[#allocation5 + $0x1] sm:$0x1] %vm195, %v2230
    %v2233 = vld [vmem:[#allocation3] sm:$0xff]
    %2235 = vrot.lane.b32.xlu0 %v2233, 96
    %v2236 = vpop.permute.xlu0 %2235
    %2238 = vst.msk [vmem:[#allocation5] sm:$0xff] %vm222, %v2236
    %v2239 = vld [vmem:[#allocation5] sm:$0xff]
    %v2240 = vld [vmem:[%s7] sm:$0xff]
    %v2241 = vld [vmem:[%s7 + $0x8] sm:$0xff]
    %v2242 = vld [vmem:[%s7 + $0x10] sm:$0xff]
    %v2243 = vld [vmem:[%s7 + $0x18] sm:$0xff]
    %v2244 = vld [vmem:[%s7 + $0x20] sm:$0xff]
    %v2245 = vld [vmem:[%s7 + $0x28] sm:$0xff]
    %v2246 = vld [vmem:[%s7 + $0x30] sm:$0xff]
    %v2247 = vld [vmem:[%s7 + $0x38] sm:$0xff]
    %v2248 = vld [vmem:[%s7 + $0x40] sm:$0xff]
    %v2249 = vld [vmem:[%s7 + $0x48] sm:$0xff]
    %v2250 = vld [vmem:[%s7 + $0x50] sm:$0xff]
    %v2251 = vld [vmem:[%s7 + $0x58] sm:$0xff]
    %v2252 = vld [vmem:[%s7 + $0x60] sm:$0xff]
    %v2253 = vld [vmem:[%s7 + $0x68] sm:$0xff]
    %v2254 = vld [vmem:[%s7 + $0x70] sm:$0xff]
    %v2255 = vld [vmem:[%s7 + $0x78] sm:$0xff]
    %v2256 = vld [vmem:[%s8] sm:$0x1]
    %v2258 = vlaneseq
    %v2259 = vshrl.u32 %v2258, 7
    %v2260 = vsub.s32 0, %v2259
    %v2261 = vrot.slane %v2256, %v2260
    %2263 = vmatprep.subr.mxu0 0.0
    %2264 = vmatpush1.msra.mxu0 %v2240
    %2265 = vmatprep.subr.mxu0 0.0
    %2266 = vmatpush1.msra.mxu0 %v2241
    %2267 = vmatprep.subr.mxu0 0.0
    %2268 = vmatpush1.msra.mxu0 %v2242
    %2269 = vmatprep.subr.mxu0 0.0
    %2270 = vmatpush1.msra.mxu0 %v2243
    %2271 = vmatprep.subr.mxu0 0.0
    %2272 = vmatpush1.msra.mxu0 %v2244
    %2273 = vmatprep.subr.mxu0 0.0
    %2274 = vmatpush1.msra.mxu0 %v2245
    %2275 = vmatprep.subr.mxu0 0.0
    %2276 = vmatpush1.msra.mxu0 %v2246
    %2277 = vmatprep.subr.mxu0 0.0
    %2278 = vmatpush1.msra.mxu0 %v2247
    %2279 = vmatprep.subr.mxu0 0.0
    %2280 = vmatpush1.msra.mxu0 %v2248
    %2281 = vmatprep.subr.mxu0 0.0
    %2282 = vmatpush1.msra.mxu0 %v2249
    %2283 = vmatprep.subr.mxu0 0.0
    %2284 = vmatpush1.msra.mxu0 %v2250
    %2285 = vmatprep.subr.mxu0 0.0
    %2286 = vmatpush1.msra.mxu0 %v2251
    %2287 = vmatprep.subr.mxu0 0.0
    %2288 = vmatpush1.msra.mxu0 %v2252
    %2289 = vmatprep.subr.mxu0 0.0
    %2290 = vmatpush1.msra.mxu0 %v2253
    %2291 = vmatprep.subr.mxu0 0.0
    %2292 = vmatpush1.msra.mxu0 %v2254
    %2293 = vmatprep.subr.mxu0 0.0
    %2294 = vmatpush1.msra.mxu0 %v2255
    %2295 = vmatprep.subr.mxu0 0.0
    %2296 = vmatpush1.msra.mxu0 0.0
    %2297 = vmatprep.subr.mxu0 0.0
    %2298 = vmatpush1.msra.mxu0 0.0
    %2299 = vmatprep.subr.mxu0 0.0
    %2300 = vmatpush1.msra.mxu0 0.0
    %2301 = vmatprep.subr.mxu0 0.0
    %2302 = vmatpush1.msra.mxu0 0.0
    %2303 = vmatprep.subr.mxu0 0.0
    %2304 = vmatpush1.msra.mxu0 0.0
    %2305 = vmatprep.subr.mxu0 0.0
    %2306 = vmatpush1.msra.mxu0 0.0
    %2307 = vmatprep.subr.mxu0 0.0
    %2308 = vmatpush1.msra.mxu0 0.0
    %2309 = vmatprep.subr.mxu0 0.0
    %2310 = vmatpush1.msra.mxu0 0.0
    %2311 = vmatprep.subr.mxu0 0.0
    %2312 = vmatpush1.msra.mxu0 0.0
    %2313 = vmatprep.subr.mxu0 0.0
    %2314 = vmatpush1.msra.mxu0 0.0
    %2315 = vmatprep.subr.mxu0 0.0
    %2316 = vmatpush1.msra.mxu0 0.0
    %2317 = vmatprep.subr.mxu0 0.0
    %2318 = vmatpush1.msra.mxu0 0.0
    %2319 = vmatprep.subr.mxu0 0.0
    %2320 = vmatpush1.msra.mxu0 0.0
    %2321 = vmatprep.subr.mxu0 0.0
    %2322 = vmatpush1.msra.mxu0 0.0
    %2323 = vmatprep.subr.mxu0 0.0
    %2324 = vmatpush1.msra.mxu0 0.0
    %2325 = vmatprep.subr.mxu0 0.0
    %2326 = vmatpush1.msra.mxu0 0.0
    %2327 = vmatprep.mubr.f32.mxu0 0.0
    %2328 = vmatmul.mubr.f32.gmra.mrb[0].mxu0 %v2239
    %v2329 = vpop.f32.mrb[0].mxu0
    %v2330 = vadd.f32 %v2261, %v2329
    %v2331 = vpop.f32.mrb[0].mxu0
    %2332 = vdwg.mxu0
    %v2333 = vmul.f32 %v2330, 0.5
    %v2334 = vtanh.pop %v2333
    %v2335 = vadd.f32 %v2334, 1.0
    %v2336 = vmul.f32 %v2335, 0.5
    %v2337 = vtanh.pop %v2330
    %v2338 = vld [vmem:[#allocation4] sm:$0xff]
    %2340 = vrot.lane.b32.xlu0 %v2338, 16
    %v2341 = vpop.permute.xlu0 %2340
    %v2343 = vmul.f32 %v2336, %v2341
    %2345 = vrot.lane.b32.xlu0 %v2337, 96
    %v2346 = vpop.permute.xlu0 %2345
    %v2348 = vmul.f32 %v2336, %v2346
    %2350 = vrot.lane.b32.xlu0 %v2348, 16
    %v2351 = vpop.permute.xlu0 %2350
    %v2353 = vadd.f32 %v2343, %v2351
    %v2354 = vtanh.pop %v2353
    %2356 = vrot.lane.b32.xlu0 %v2354, 32
    %v2357 = vpop.permute.xlu0 %2356
    %v2359 = vmul.f32 %v2336, %v2357
    %2361 = vrot.lane.b32.xlu0 %v2359, 80
    %v2362 = vpop.permute.xlu0 %2361
    %2364 = vst.msk [vmem:[#allocation3] sm:$0xff] %vm56, %v2362
    %2366 = vrot.lane.b32.xlu0 %v2353, 112
    %v2367 = vpop.permute.xlu0 %2366
    %2369 = vst.msk [vmem:[#allocation4] sm:$0xff] %vm56, %v2367
    %s2370 = sld [smem:[#allocation9 + $0x5]]
    %p2371 = scmp.gt.s32.totalorder %s2370, 0
    // Predicated region
    $region58: #{tpu_custom_call.1} parent=1 // pred_check
      %p2372 = pneg %p2371
    $region59: #{tpu_custom_call.1} parent=1 // pred_check_branch
      %2374 = sbr.rel (%p2372) target = $region61
    $region60: #{tpu_custom_call.1} parent=1 // pred_region
      %s2375 = sld [smem:[#allocation8 + $0x3f]]
      %s2376 = scalar_lea.vmem [#allocation2], %s2375
      %v2377 = vld [vmem:[%s2376] sm:$0x1]
      %vm2378 = vcmask 516096
      %2379 = vst.msk [vmem:[#allocation6] sm:$0x1] %vm2378, %v2377
      %s2380 = sld [smem:[#allocation8 + $0x40]]
      %s2381 = scalar_lea.vmem [#allocation2], %s2380
      %v2382 = vld [vmem:[%s2381] sm:$0x1]
      %2384 = vrot.lane.b32.xlu0 %v2382, 64
      %v2385 = vpop.permute.xlu0 %2384
      %vm2387 = vcmask 1040896
      %2388 = vst.msk [vmem:[#allocation6] sm:$0x1] %vm2387, %v2385
      %s2389 = sld [smem:[#allocation8 + $0x45]]
      %s2390 = scalar_lea.vmem [#allocation2], %s2389
      %v2391 = vld [vmem:[%s2390] sm:$0x1]
      %2392 = vst.msk [vmem:[#allocation6 + $0x1] sm:$0x1] %vm2378, %v2391
      %s2393 = sld [smem:[#allocation8 + $0x46]]
      %s2394 = scalar_lea.vmem [#allocation2], %s2393
      %v2395 = vld [vmem:[%s2394] sm:$0x1]
      %2397 = vrot.lane.b32.xlu0 %v2395, 64
      %v2398 = vpop.permute.xlu0 %2397
      %2400 = vst.msk [vmem:[#allocation6 + $0x1] sm:$0x1] %vm2387, %v2398
      %2401 = vst.msk [vmem:[#allocation6 + $0x8] sm:$0xff] %vm56, %v2362
      %v2402 = vld [vmem:[#allocation6] sm:$0xff]
      %v2403 = vld [vmem:[#allocation6 + $0x8] sm:$0xff]
      %v2404 = vld [vmem:[%s9] sm:$0xff]
      %v2405 = vld [vmem:[%s9 + $0x8] sm:$0xff]
      %v2406 = vld [vmem:[%s9 + $0x10] sm:$0xff]
      %v2407 = vld [vmem:[%s9 + $0x18] sm:$0xff]
      %v2408 = vld [vmem:[%s9 + $0x20] sm:$0xff]
      %v2409 = vld [vmem:[%s9 + $0x28] sm:$0xff]
      %v2410 = vld [vmem:[%s9 + $0x30] sm:$0xff]
      %v2411 = vld [vmem:[%s9 + $0x38] sm:$0xff]
      %v2412 = vld [vmem:[%s9 + $0x40] sm:$0xff]
      %v2413 = vld [vmem:[%s9 + $0x48] sm:$0xff]
      %v2414 = vld [vmem:[%s9 + $0x50] sm:$0xff]
      %v2415 = vld [vmem:[%s9 + $0x58] sm:$0xff]
      %v2416 = vld [vmem:[%s9 + $0x60] sm:$0xff]
      %v2417 = vld [vmem:[%s9 + $0x68] sm:$0xff]
      %v2418 = vld [vmem:[%s9 + $0x70] sm:$0xff]
      %v2419 = vld [vmem:[%s9 + $0x78] sm:$0xff]
      %v2420 = vld [vmem:[%s9 + $0x80] sm:$0xff]
      %v2421 = vld [vmem:[%s9 + $0x88] sm:$0xff]
      %v2422 = vld [vmem:[%s9 + $0x90] sm:$0xff]
      %v2423 = vld [vmem:[%s9 + $0x98] sm:$0xff]
      %v2424 = vld [vmem:[%s9 + $0xa0] sm:$0xff]
      %v2425 = vld [vmem:[%s9 + $0xa8] sm:$0xff]
      %v2426 = vld [vmem:[%s9 + $0xb0] sm:$0xff]
      %v2427 = vld [vmem:[%s9 + $0xb8] sm:$0xff]
      %v2428 = vld [vmem:[%s9 + $0xc0] sm:$0xff]
      %v2429 = vld [vmem:[%s9 + $0xc8] sm:$0xff]
      %v2430 = vld [vmem:[%s9 + $0xd0] sm:$0xff]
      %v2431 = vld [vmem:[%s9 + $0xd8] sm:$0xff]
      %v2432 = vld [vmem:[%s9 + $0xe0] sm:$0xff]
      %v2433 = vld [vmem:[%s9 + $0xe8] sm:$0xff]
      %v2434 = vld [vmem:[%s9 + $0xf0] sm:$0xff]
      %v2435 = vld [vmem:[%s9 + $0xf8] sm:$0xff]
      %v2436 = vld [vmem:[%s9 + $0x100] sm:$0xff]
      %v2437 = vld [vmem:[%s9 + $0x108] sm:$0xff]
      %v2438 = vld [vmem:[%s9 + $0x110] sm:$0xff]
      %v2439 = vld [vmem:[%s9 + $0x118] sm:$0xff]
      %v2440 = vld [vmem:[%s9 + $0x120] sm:$0xff]
      %v2441 = vld [vmem:[%s9 + $0x128] sm:$0xff]
      %v2442 = vld [vmem:[%s9 + $0x130] sm:$0xff]
      %v2443 = vld [vmem:[%s9 + $0x138] sm:$0xff]
      %v2444 = vld [vmem:[%s9 + $0x140] sm:$0xff]
      %v2445 = vld [vmem:[%s9 + $0x148] sm:$0xff]
      %v2446 = vld [vmem:[%s9 + $0x150] sm:$0xff]
      %v2447 = vld [vmem:[%s9 + $0x158] sm:$0xff]
      %v2448 = vld [vmem:[%s9 + $0x160] sm:$0xff]
      %v2449 = vld [vmem:[%s9 + $0x168] sm:$0xff]
      %v2450 = vld [vmem:[%s9 + $0x170] sm:$0xff]
      %v2451 = vld [vmem:[%s9 + $0x178] sm:$0xff]
      %v2452 = vld [vmem:[%s9 + $0x180] sm:$0xff]
      %v2453 = vld [vmem:[%s9 + $0x188] sm:$0xff]
      %v2454 = vld [vmem:[%s9 + $0x190] sm:$0xff]
      %v2455 = vld [vmem:[%s9 + $0x198] sm:$0xff]
      %v2456 = vld [vmem:[%s9 + $0x1a0] sm:$0xff]
      %v2457 = vld [vmem:[%s9 + $0x1a8] sm:$0xff]
      %v2458 = vld [vmem:[%s9 + $0x1b0] sm:$0xff]
      %v2459 = vld [vmem:[%s9 + $0x1b8] sm:$0xff]
      %v2460 = vld [vmem:[%s9 + $0x1c0] sm:$0xff]
      %v2461 = vld [vmem:[%s9 + $0x1c8] sm:$0xff]
      %v2462 = vld [vmem:[%s9 + $0x1d0] sm:$0xff]
      %v2463 = vld [vmem:[%s9 + $0x1d8] sm:$0xff]
      %v2464 = vld [vmem:[%s9 + $0x1e0] sm:$0xff]
      %v2465 = vld [vmem:[%s9 + $0x1e8] sm:$0xff]
      %v2466 = vld [vmem:[%s9 + $0x1f0] sm:$0xff]
      %v2467 = vld [vmem:[%s9 + $0x1f8] sm:$0xff]
      %v2468 = vld [vmem:[%s10] sm:$0x3]
      %v2470 = vlaneseq
      %v2471 = vshrl.u32 %v2470, 7
      %v2472 = vsub.s32 0, %v2471
      %v2473 = vrot.slane %v2468, %v2472
      %v2474 = vlaneseq
      %v2475 = vshrl.u32 %v2474, 7
      %v2476 = vsub.s32 1, %v2475
      %v2477 = vrot.slane %v2468, %v2476
      %2480 = vmatprep.subr.mxu0 %v2405
      %2481 = vmatpush1.msra.mxu0 %v2404
      %2482 = vmatprep.subr.mxu0 %v2407
      %2483 = vmatpush1.msra.mxu0 %v2406
      %2484 = vmatprep.subr.mxu0 %v2409
      %2485 = vmatpush1.msra.mxu0 %v2408
      %2486 = vmatprep.subr.mxu0 %v2411
      %2487 = vmatpush1.msra.mxu0 %v2410
      %2488 = vmatprep.subr.mxu0 %v2413
      %2489 = vmatpush1.msra.mxu0 %v2412
      %2490 = vmatprep.subr.mxu0 %v2415
      %2491 = vmatpush1.msra.mxu0 %v2414
      %2492 = vmatprep.subr.mxu0 %v2417
      %2493 = vmatpush1.msra.mxu0 %v2416
      %2494 = vmatprep.subr.mxu0 %v2419
      %2495 = vmatpush1.msra.mxu0 %v2418
      %2496 = vmatprep.subr.mxu0 %v2421
      %2497 = vmatpush1.msra.mxu0 %v2420
      %2498 = vmatprep.subr.mxu0 %v2423
      %2499 = vmatpush1.msra.mxu0 %v2422
      %2500 = vmatprep.subr.mxu0 %v2425
      %2501 = vmatpush1.msra.mxu0 %v2424
      %2502 = vmatprep.subr.mxu0 %v2427
      %2503 = vmatpush1.msra.mxu0 %v2426
      %2504 = vmatprep.subr.mxu0 %v2429
      %2505 = vmatpush1.msra.mxu0 %v2428
      %2506 = vmatprep.subr.mxu0 %v2431
      %2507 = vmatpush1.msra.mxu0 %v2430
      %2508 = vmatprep.subr.mxu0 %v2433
      %2509 = vmatpush1.msra.mxu0 %v2432
      %2510 = vmatprep.subr.mxu0 %v2435
      %2511 = vmatpush1.msra.mxu0 %v2434
      %2512 = vmatprep.subr.mxu0 %v2437
      %2513 = vmatpush1.msra.mxu0 %v2436
      %2514 = vmatprep.subr.mxu0 %v2439
      %2515 = vmatpush1.msra.mxu0 %v2438
      %2516 = vmatprep.subr.mxu0 %v2441
      %2517 = vmatpush1.msra.mxu0 %v2440
      %2518 = vmatprep.subr.mxu0 %v2443
      %2519 = vmatpush1.msra.mxu0 %v2442
      %2520 = vmatprep.subr.mxu0 %v2445
      %2521 = vmatpush1.msra.mxu0 %v2444
      %2522 = vmatprep.subr.mxu0 %v2447
      %2523 = vmatpush1.msra.mxu0 %v2446
      %2524 = vmatprep.subr.mxu0 %v2449
      %2525 = vmatpush1.msra.mxu0 %v2448
      %2526 = vmatprep.subr.mxu0 %v2451
      %2527 = vmatpush1.msra.mxu0 %v2450
      %2528 = vmatprep.subr.mxu0 %v2453
      %2529 = vmatpush1.msra.mxu0 %v2452
      %2530 = vmatprep.subr.mxu0 %v2455
      %2531 = vmatpush1.msra.mxu0 %v2454
      %2532 = vmatprep.subr.mxu0 %v2457
      %2533 = vmatpush1.msra.mxu0 %v2456
      %2534 = vmatprep.subr.mxu0 %v2459
      %2535 = vmatpush1.msra.mxu0 %v2458
      %2536 = vmatprep.subr.mxu0 %v2461
      %2537 = vmatpush1.msra.mxu0 %v2460
      %2538 = vmatprep.subr.mxu0 %v2463
      %2539 = vmatpush1.msra.mxu0 %v2462
      %2540 = vmatprep.subr.mxu0 %v2465
      %2541 = vmatpush1.msra.mxu0 %v2464
      %2542 = vmatprep.subr.mxu0 %v2467
      %2543 = vmatpush1.msra.mxu0 %v2466
      %2544 = vmatprep.mubr.f32.mxu0 %v2403
      %2545 = vmatmul.mubr.f32.gmra.mrb[0].mxu0 %v2402
      %v2546 = vpop.f32.mrb[0].mxu0
      %v2547 = vadd.f32 %v2473, %v2546
      %v2548 = vpop.f32.mrb[0].mxu0
      %v2549 = vadd.f32 %v2477, %v2548
      %2550 = vdwg.mxu0
      %v2551 = vmul.f32 %v2547, 0.5
      %v2552 = vmul.f32 %v2549, 0.5
      %v2553 = vtanh.pop %v2551
      %v2554 = vtanh.pop %v2552
      %v2555 = vadd.f32 %v2553, 1.0
      %v2556 = vadd.f32 %v2554, 1.0
      %v2557 = vmul.f32 %v2555, 0.5
      %v2558 = vmul.f32 %v2556, 0.5
      %v2559 = vtanh.pop %v2547
      %v2560 = vld [vmem:[#allocation6] sm:$0xff]
      %2562 = vrot.lane.b32.xlu0 %v2557, 96
      %v2563 = vpop.permute.xlu0 %2562
      %v2565 = vmul.f32 %v2559, %v2563
      %2567 = vrot.lane.b32.xlu0 %v2560, 32
      %v2568 = vpop.permute.xlu0 %2567
      %v2570 = vmul.f32 %v2557, %v2568
      %2572 = vrot.lane.b32.xlu0 %v2570, 64
      %v2573 = vpop.permute.xlu0 %2572
      %v2575 = vadd.f32 %v2565, %v2573
      %v2576 = vmul.f32 %v2557, %v2560
      %2578 = vrot.lane.b32.xlu0 %v2576, 32
      %v2579 = vpop.permute.xlu0 %2578
      %v2581 = vadd.f32 %v2575, %v2579
      %v2582 = vtanh.pop %v2581
      %v2583 = vmul.f32 %v2558, %v2582
      %2585 = vrot.lane.b32.xlu0 %v2581, 32
      %v2586 = vpop.permute.xlu0 %2585
      %v2588 = vsel %vm162, %v2583, %v2586
      %s2589 = sld [smem:[#allocation8 + $0x41]]
      %s2590 = scalar_lea.vmem [#allocation2], %s2589
      %2591 = vst.msk [vmem:[%s2590] sm:$0x1] %vm2378, %v2588
      %s2592 = sld [smem:[#allocation8 + $0x47]]
      %s2593 = scalar_lea.vmem [#allocation2], %s2592
      %vm2594 = vcmask 517121
      %2595 = vst.msk [vmem:[%s2593 - $0x1] sm:$0x2] %vm2594, %v2588
    $region61: #{tpu_custom_call.1} parent=1 // pred_fallthru
      _
    %s2596 = sld [smem:[#allocation8 + $0x48]]
    %s2597 = scalar_lea.vmem [#allocation2], %s2596
    %v2598 = vld [vmem:[%s2597] sm:$0x1]
    %2599 = vst.msk [vmem:[#allocation5] sm:$0x1] %vm177, %v2598
    %s2600 = sld [smem:[#allocation8 + $0x49]]
    %s2601 = scalar_lea.vmem [#allocation2], %s2600
    %v2602 = vld [vmem:[%s2601] sm:$0x1]
    %2604 = vrot.lane.b32.xlu0 %v2602, 32
    %v2605 = vpop.permute.xlu0 %2604
    %2607 = vst.msk [vmem:[#allocation5] sm:$0x1] %vm186, %v2605
    %s2608 = sld [smem:[#allocation8 + $0x4a]]
    %s2609 = scalar_lea.vmem [#allocation2], %s2608
    %v2610 = vld [vmem:[%s2609] sm:$0x1]
    %2612 = vrot.lane.b32.xlu0 %v2610, 64
    %v2613 = vpop.permute.xlu0 %2612
    %2615 = vst.msk [vmem:[#allocation5] sm:$0x1] %vm195, %v2613
    %s2616 = sld [smem:[#allocation8 + $0x4e]]
    %s2617 = scalar_lea.vmem [#allocation2], %s2616
    %v2618 = vld [vmem:[%s2617] sm:$0x1]
    %2619 = vst.msk [vmem:[#allocation5 + $0x1] sm:$0x1] %vm177, %v2618
    %s2620 = sld [smem:[#allocation8 + $0x4f]]
    %s2621 = scalar_lea.vmem [#allocation2], %s2620
    %v2622 = vld [vmem:[%s2621] sm:$0x1]
    %2624 = vrot.lane.b32.xlu0 %v2622, 32
    %v2625 = vpop.permute.xlu0 %2624
    %2627 = vst.msk [vmem:[#allocation5 + $0x1] sm:$0x1] %vm186, %v2625
    %s2628 = sld [smem:[#allocation8 + $0x50]]
    %s2629 = scalar_lea.vmem [#allocation2], %s2628
    %v2630 = vld [vmem:[%s2629] sm:$0x1]
    %2632 = vrot.lane.b32.xlu0 %v2630, 64
    %v2633 = vpop.permute.xlu0 %2632
    %2635 = vst.msk [vmem:[#allocation5 + $0x1] sm:$0x1] %vm195, %v2633
    %v2636 = vld [vmem:[#allocation3] sm:$0xff]
    %2638 = vrot.lane.b32.xlu0 %v2636, 96
    %v2639 = vpop.permute.xlu0 %2638
    %2641 = vst.msk [vmem:[#allocation5] sm:$0xff] %vm222, %v2639
    %v2642 = vld [vmem:[#allocation5] sm:$0xff]
    %v2643 = vld [vmem:[%s7] sm:$0xff]
    %v2644 = vld [vmem:[%s7 + $0x8] sm:$0xff]
    %v2645 = vld [vmem:[%s7 + $0x10] sm:$0xff]
    %v2646 = vld [vmem:[%s7 + $0x18] sm:$0xff]
    %v2647 = vld [vmem:[%s7 + $0x20] sm:$0xff]
    %v2648 = vld [vmem:[%s7 + $0x28] sm:$0xff]
    %v2649 = vld [vmem:[%s7 + $0x30] sm:$0xff]
    %v2650 = vld [vmem:[%s7 + $0x38] sm:$0xff]
    %v2651 = vld [vmem:[%s7 + $0x40] sm:$0xff]
    %v2652 = vld [vmem:[%s7 + $0x48] sm:$0xff]
    %v2653 = vld [vmem:[%s7 + $0x50] sm:$0xff]
    %v2654 = vld [vmem:[%s7 + $0x58] sm:$0xff]
    %v2655 = vld [vmem:[%s7 + $0x60] sm:$0xff]
    %v2656 = vld [vmem:[%s7 + $0x68] sm:$0xff]
    %v2657 = vld [vmem:[%s7 + $0x70] sm:$0xff]
    %v2658 = vld [vmem:[%s7 + $0x78] sm:$0xff]
    %v2659 = vld [vmem:[%s8] sm:$0x1]
    %v2661 = vlaneseq
    %v2662 = vshrl.u32 %v2661, 7
    %v2663 = vsub.s32 0, %v2662
    %v2664 = vrot.slane %v2659, %v2663
    %2666 = vmatprep.subr.mxu0 0.0
    %2667 = vmatpush1.msra.mxu0 %v2643
    %2668 = vmatprep.subr.mxu0 0.0
    %2669 = vmatpush1.msra.mxu0 %v2644
    %2670 = vmatprep.subr.mxu0 0.0
    %2671 = vmatpush1.msra.mxu0 %v2645
    %2672 = vmatprep.subr.mxu0 0.0
    %2673 = vmatpush1.msra.mxu0 %v2646
    %2674 = vmatprep.subr.mxu0 0.0
    %2675 = vmatpush1.msra.mxu0 %v2647
    %2676 = vmatprep.subr.mxu0 0.0
    %2677 = vmatpush1.msra.mxu0 %v2648
    %2678 = vmatprep.subr.mxu0 0.0
    %2679 = vmatpush1.msra.mxu0 %v2649
    %2680 = vmatprep.subr.mxu0 0.0
    %2681 = vmatpush1.msra.mxu0 %v2650
    %2682 = vmatprep.subr.mxu0 0.0
    %2683 = vmatpush1.msra.mxu0 %v2651
    %2684 = vmatprep.subr.mxu0 0.0
    %2685 = vmatpush1.msra.mxu0 %v2652
    %2686 = vmatprep.subr.mxu0 0.0
    %2687 = vmatpush1.msra.mxu0 %v2653
    %2688 = vmatprep.subr.mxu0 0.0
    %2689 = vmatpush1.msra.mxu0 %v2654
    %2690 = vmatprep.subr.mxu0 0.0
    %2691 = vmatpush1.msra.mxu0 %v2655
    %2692 = vmatprep.subr.mxu0 0.0
    %2693 = vmatpush1.msra.mxu0 %v2656
    %2694 = vmatprep.subr.mxu0 0.0
    %2695 = vmatpush1.msra.mxu0 %v2657
    %2696 = vmatprep.subr.mxu0 0.0
    %2697 = vmatpush1.msra.mxu0 %v2658
    %2698 = vmatprep.subr.mxu0 0.0
    %2699 = vmatpush1.msra.mxu0 0.0
    %2700 = vmatprep.subr.mxu0 0.0
    %2701 = vmatpush1.msra.mxu0 0.0
    %2702 = vmatprep.subr.mxu0 0.0
    %2703 = vmatpush1.msra.mxu0 0.0
    %2704 = vmatprep.subr.mxu0 0.0
    %2705 = vmatpush1.msra.mxu0 0.0
    %2706 = vmatprep.subr.mxu0 0.0
    %2707 = vmatpush1.msra.mxu0 0.0
    %2708 = vmatprep.subr.mxu0 0.0
    %2709 = vmatpush1.msra.mxu0 0.0
    %2710 = vmatprep.subr.mxu0 0.0
    %2711 = vmatpush1.msra.mxu0 0.0
    %2712 = vmatprep.subr.mxu0 0.0
    %2713 = vmatpush1.msra.mxu0 0.0
    %2714 = vmatprep.subr.mxu0 0.0
    %2715 = vmatpush1.msra.mxu0 0.0
    %2716 = vmatprep.subr.mxu0 0.0
    %2717 = vmatpush1.msra.mxu0 0.0
    %2718 = vmatprep.subr.mxu0 0.0
    %2719 = vmatpush1.msra.mxu0 0.0
    %2720 = vmatprep.subr.mxu0 0.0
    %2721 = vmatpush1.msra.mxu0 0.0
    %2722 = vmatprep.subr.mxu0 0.0
    %2723 = vmatpush1.msra.mxu0 0.0
    %2724 = vmatprep.subr.mxu0 0.0
    %2725 = vmatpush1.msra.mxu0 0.0
    %2726 = vmatprep.subr.mxu0 0.0
    %2727 = vmatpush1.msra.mxu0 0.0
    %2728 = vmatprep.subr.mxu0 0.0
    %2729 = vmatpush1.msra.mxu0 0.0
    %2730 = vmatprep.mubr.f32.mxu0 0.0
    %2731 = vmatmul.mubr.f32.gmra.mrb[0].mxu0 %v2642
    %v2732 = vpop.f32.mrb[0].mxu0
    %v2733 = vadd.f32 %v2664, %v2732
    %v2734 = vpop.f32.mrb[0].mxu0
    %2735 = vdwg.mxu0
    %v2736 = vmul.f32 %v2733, 0.5
    %v2737 = vtanh.pop %v2736
    %v2738 = vadd.f32 %v2737, 1.0
    %v2739 = vmul.f32 %v2738, 0.5
    %v2740 = vtanh.pop %v2733
    %v2741 = vld [vmem:[#allocation4] sm:$0xff]
    %2743 = vrot.lane.b32.xlu0 %v2741, 16
    %v2744 = vpop.permute.xlu0 %2743
    %v2746 = vmul.f32 %v2739, %v2744
    %2748 = vrot.lane.b32.xlu0 %v2740, 96
    %v2749 = vpop.permute.xlu0 %2748
    %v2751 = vmul.f32 %v2739, %v2749
    %2753 = vrot.lane.b32.xlu0 %v2751, 16
    %v2754 = vpop.permute.xlu0 %2753
    %v2756 = vadd.f32 %v2746, %v2754
    %v2757 = vtanh.pop %v2756
    %2759 = vrot.lane.b32.xlu0 %v2757, 32
    %v2760 = vpop.permute.xlu0 %2759
    %v2762 = vmul.f32 %v2739, %v2760
    %2764 = vrot.lane.b32.xlu0 %v2762, 80
    %v2765 = vpop.permute.xlu0 %2764
    %2767 = vst.msk [vmem:[#allocation3] sm:$0xff] %vm56, %v2765
    %2769 = vrot.lane.b32.xlu0 %v2756, 112
    %v2770 = vpop.permute.xlu0 %2769
    %2772 = vst.msk [vmem:[#allocation4] sm:$0xff] %vm56, %v2770
    %s2773 = sld [smem:[#allocation9 + $0x6]]
    %p2774 = scmp.gt.s32.totalorder %s2773, 0
    // Predicated region
    $region62: #{tpu_custom_call.1} parent=1 // pred_check
      %p2775 = pneg %p2774
    $region63: #{tpu_custom_call.1} parent=1 // pred_check_branch
      %2777 = sbr.rel (%p2775) target = $region65
    $region64: #{tpu_custom_call.1} parent=1 // pred_region
      %s2778 = sld [smem:[#allocation8 + $0x4b]]
      %s2779 = scalar_lea.vmem [#allocation2], %s2778
      %v2780 = vld [vmem:[%s2779] sm:$0x1]
      %vm2781 = vcmask 516096
      %2782 = vst.msk [vmem:[#allocation6] sm:$0x1] %vm2781, %v2780
      %s2783 = sld [smem:[#allocation8 + $0x4c]]
      %s2784 = scalar_lea.vmem [#allocation2], %s2783
      %v2785 = vld [vmem:[%s2784] sm:$0x1]
      %2787 = vrot.lane.b32.xlu0 %v2785, 64
      %v2788 = vpop.permute.xlu0 %2787
      %vm2790 = vcmask 1040896
      %2791 = vst.msk [vmem:[#allocation6] sm:$0x1] %vm2790, %v2788
      %s2792 = sld [smem:[#allocation8 + $0x51]]
      %s2793 = scalar_lea.vmem [#allocation2], %s2792
      %v2794 = vld [vmem:[%s2793] sm:$0x1]
      %2795 = vst.msk [vmem:[#allocation6 + $0x1] sm:$0x1] %vm2781, %v2794
      %s2796 = sld [smem:[#allocation8 + $0x52]]
      %s2797 = scalar_lea.vmem [#allocation2], %s2796
      %v2798 = vld [vmem:[%s2797] sm:$0x1]
      %2800 = vrot.lane.b32.xlu0 %v2798, 64
      %v2801 = vpop.permute.xlu0 %2800
      %2803 = vst.msk [vmem:[#allocation6 + $0x1] sm:$0x1] %vm2790, %v2801
      %2804 = vst.msk [vmem:[#allocation6 + $0x8] sm:$0xff] %vm56, %v2765
      %v2805 = vld [vmem:[#allocation6] sm:$0xff]
      %v2806 = vld [vmem:[#allocation6 + $0x8] sm:$0xff]
      %v2807 = vld [vmem:[%s9] sm:$0xff]
      %v2808 = vld [vmem:[%s9 + $0x8] sm:$0xff]
      %v2809 = vld [vmem:[%s9 + $0x10] sm:$0xff]
      %v2810 = vld [vmem:[%s9 + $0x18] sm:$0xff]
      %v2811 = vld [vmem:[%s9 + $0x20] sm:$0xff]
      %v2812 = vld [vmem:[%s9 + $0x28] sm:$0xff]
      %v2813 = vld [vmem:[%s9 + $0x30] sm:$0xff]
      %v2814 = vld [vmem:[%s9 + $0x38] sm:$0xff]
      %v2815 = vld [vmem:[%s9 + $0x40] sm:$0xff]
      %v2816 = vld [vmem:[%s9 + $0x48] sm:$0xff]
      %v2817 = vld [vmem:[%s9 + $0x50] sm:$0xff]
      %v2818 = vld [vmem:[%s9 + $0x58] sm:$0xff]
      %v2819 = vld [vmem:[%s9 + $0x60] sm:$0xff]
      %v2820 = vld [vmem:[%s9 + $0x68] sm:$0xff]
      %v2821 = vld [vmem:[%s9 + $0x70] sm:$0xff]
      %v2822 = vld [vmem:[%s9 + $0x78] sm:$0xff]
      %v2823 = vld [vmem:[%s9 + $0x80] sm:$0xff]
      %v2824 = vld [vmem:[%s9 + $0x88] sm:$0xff]
      %v2825 = vld [vmem:[%s9 + $0x90] sm:$0xff]
      %v2826 = vld [vmem:[%s9 + $0x98] sm:$0xff]
      %v2827 = vld [vmem:[%s9 + $0xa0] sm:$0xff]
      %v2828 = vld [vmem:[%s9 + $0xa8] sm:$0xff]
      %v2829 = vld [vmem:[%s9 + $0xb0] sm:$0xff]
      %v2830 = vld [vmem:[%s9 + $0xb8] sm:$0xff]
      %v2831 = vld [vmem:[%s9 + $0xc0] sm:$0xff]
      %v2832 = vld [vmem:[%s9 + $0xc8] sm:$0xff]
      %v2833 = vld [vmem:[%s9 + $0xd0] sm:$0xff]
      %v2834 = vld [vmem:[%s9 + $0xd8] sm:$0xff]
      %v2835 = vld [vmem:[%s9 + $0xe0] sm:$0xff]
      %v2836 = vld [vmem:[%s9 + $0xe8] sm:$0xff]
      %v2837 = vld [vmem:[%s9 + $0xf0] sm:$0xff]
      %v2838 = vld [vmem:[%s9 + $0xf8] sm:$0xff]
      %v2839 = vld [vmem:[%s9 + $0x100] sm:$0xff]
      %v2840 = vld [vmem:[%s9 + $0x108] sm:$0xff]
      %v2841 = vld [vmem:[%s9 + $0x110] sm:$0xff]
      %v2842 = vld [vmem:[%s9 + $0x118] sm:$0xff]
      %v2843 = vld [vmem:[%s9 + $0x120] sm:$0xff]
      %v2844 = vld [vmem:[%s9 + $0x128] sm:$0xff]
      %v2845 = vld [vmem:[%s9 + $0x130] sm:$0xff]
      %v2846 = vld [vmem:[%s9 + $0x138] sm:$0xff]
      %v2847 = vld [vmem:[%s9 + $0x140] sm:$0xff]
      %v2848 = vld [vmem:[%s9 + $0x148] sm:$0xff]
      %v2849 = vld [vmem:[%s9 + $0x150] sm:$0xff]
      %v2850 = vld [vmem:[%s9 + $0x158] sm:$0xff]
      %v2851 = vld [vmem:[%s9 + $0x160] sm:$0xff]
      %v2852 = vld [vmem:[%s9 + $0x168] sm:$0xff]
      %v2853 = vld [vmem:[%s9 + $0x170] sm:$0xff]
      %v2854 = vld [vmem:[%s9 + $0x178] sm:$0xff]
      %v2855 = vld [vmem:[%s9 + $0x180] sm:$0xff]
      %v2856 = vld [vmem:[%s9 + $0x188] sm:$0xff]
      %v2857 = vld [vmem:[%s9 + $0x190] sm:$0xff]
      %v2858 = vld [vmem:[%s9 + $0x198] sm:$0xff]
      %v2859 = vld [vmem:[%s9 + $0x1a0] sm:$0xff]
      %v2860 = vld [vmem:[%s9 + $0x1a8] sm:$0xff]
      %v2861 = vld [vmem:[%s9 + $0x1b0] sm:$0xff]
      %v2862 = vld [vmem:[%s9 + $0x1b8] sm:$0xff]
      %v2863 = vld [vmem:[%s9 + $0x1c0] sm:$0xff]
      %v2864 = vld [vmem:[%s9 + $0x1c8] sm:$0xff]
      %v2865 = vld [vmem:[%s9 + $0x1d0] sm:$0xff]
      %v2866 = vld [vmem:[%s9 + $0x1d8] sm:$0xff]
      %v2867 = vld [vmem:[%s9 + $0x1e0] sm:$0xff]
      %v2868 = vld [vmem:[%s9 + $0x1e8] sm:$0xff]
      %v2869 = vld [vmem:[%s9 + $0x1f0] sm:$0xff]
      %v2870 = vld [vmem:[%s9 + $0x1f8] sm:$0xff]
      %v2871 = vld [vmem:[%s10] sm:$0x3]
      %v2873 = vlaneseq
      %v2874 = vshrl.u32 %v2873, 7
      %v2875 = vsub.s32 0, %v2874
      %v2876 = vrot.slane %v2871, %v2875
      %v2877 = vlaneseq
      %v2878 = vshrl.u32 %v2877, 7
      %v2879 = vsub.s32 1, %v2878
      %v2880 = vrot.slane %v2871, %v2879
      %2883 = vmatprep.subr.mxu0 %v2808
      %2884 = vmatpush1.msra.mxu0 %v2807
      %2885 = vmatprep.subr.mxu0 %v2810
      %2886 = vmatpush1.msra.mxu0 %v2809
      %2887 = vmatprep.subr.mxu0 %v2812
      %2888 = vmatpush1.msra.mxu0 %v2811
      %2889 = vmatprep.subr.mxu0 %v2814
      %2890 = vmatpush1.msra.mxu0 %v2813
      %2891 = vmatprep.subr.mxu0 %v2816
      %2892 = vmatpush1.msra.mxu0 %v2815
      %2893 = vmatprep.subr.mxu0 %v2818
      %2894 = vmatpush1.msra.mxu0 %v2817
      %2895 = vmatprep.subr.mxu0 %v2820
      %2896 = vmatpush1.msra.mxu0 %v2819
      %2897 = vmatprep.subr.mxu0 %v2822
      %2898 = vmatpush1.msra.mxu0 %v2821
      %2899 = vmatprep.subr.mxu0 %v2824
      %2900 = vmatpush1.msra.mxu0 %v2823
      %2901 = vmatprep.subr.mxu0 %v2826
      %2902 = vmatpush1.msra.mxu0 %v2825
      %2903 = vmatprep.subr.mxu0 %v2828
      %2904 = vmatpush1.msra.mxu0 %v2827
      %2905 = vmatprep.subr.mxu0 %v2830
      %2906 = vmatpush1.msra.mxu0 %v2829
      %2907 = vmatprep.subr.mxu0 %v2832
      %2908 = vmatpush1.msra.mxu0 %v2831
      %2909 = vmatprep.subr.mxu0 %v2834
      %2910 = vmatpush1.msra.mxu0 %v2833
      %2911 = vmatprep.subr.mxu0 %v2836
      %2912 = vmatpush1.msra.mxu0 %v2835
      %2913 = vmatprep.subr.mxu0 %v2838
      %2914 = vmatpush1.msra.mxu0 %v2837
      %2915 = vmatprep.subr.mxu0 %v2840
      %2916 = vmatpush1.msra.mxu0 %v2839
      %2917 = vmatprep.subr.mxu0 %v2842
      %2918 = vmatpush1.msra.mxu0 %v2841
      %2919 = vmatprep.subr.mxu0 %v2844
      %2920 = vmatpush1.msra.mxu0 %v2843
      %2921 = vmatprep.subr.mxu0 %v2846
      %2922 = vmatpush1.msra.mxu0 %v2845
      %2923 = vmatprep.subr.mxu0 %v2848
      %2924 = vmatpush1.msra.mxu0 %v2847
      %2925 = vmatprep.subr.mxu0 %v2850
      %2926 = vmatpush1.msra.mxu0 %v2849
      %2927 = vmatprep.subr.mxu0 %v2852
      %2928 = vmatpush1.msra.mxu0 %v2851
      %2929 = vmatprep.subr.mxu0 %v2854
      %2930 = vmatpush1.msra.mxu0 %v2853
      %2931 = vmatprep.subr.mxu0 %v2856
      %2932 = vmatpush1.msra.mxu0 %v2855
      %2933 = vmatprep.subr.mxu0 %v2858
      %2934 = vmatpush1.msra.mxu0 %v2857
      %2935 = vmatprep.subr.mxu0 %v2860
      %2936 = vmatpush1.msra.mxu0 %v2859
      %2937 = vmatprep.subr.mxu0 %v2862
      %2938 = vmatpush1.msra.mxu0 %v2861
      %2939 = vmatprep.subr.mxu0 %v2864
      %2940 = vmatpush1.msra.mxu0 %v2863
      %2941 = vmatprep.subr.mxu0 %v2866
      %2942 = vmatpush1.msra.mxu0 %v2865
      %2943 = vmatprep.subr.mxu0 %v2868
      %2944 = vmatpush1.msra.mxu0 %v2867
      %2945 = vmatprep.subr.mxu0 %v2870
      %2946 = vmatpush1.msra.mxu0 %v2869
      %2947 = vmatprep.mubr.f32.mxu0 %v2806
      %2948 = vmatmul.mubr.f32.gmra.mrb[0].mxu0 %v2805
      %v2949 = vpop.f32.mrb[0].mxu0
      %v2950 = vadd.f32 %v2876, %v2949
      %v2951 = vpop.f32.mrb[0].mxu0
      %v2952 = vadd.f32 %v2880, %v2951
      %2953 = vdwg.mxu0
      %v2954 = vmul.f32 %v2950, 0.5
      %v2955 = vmul.f32 %v2952, 0.5
      %v2956 = vtanh.pop %v2954
      %v2957 = vtanh.pop %v2955
      %v2958 = vadd.f32 %v2956, 1.0
      %v2959 = vadd.f32 %v2957, 1.0
      %v2960 = vmul.f32 %v2958, 0.5
      %v2961 = vmul.f32 %v2959, 0.5
      %v2962 = vtanh.pop %v2950
      %v2963 = vld [vmem:[#allocation6] sm:$0xff]
      %2965 = vrot.lane.b32.xlu0 %v2960, 96
      %v2966 = vpop.permute.xlu0 %2965
      %v2968 = vmul.f32 %v2962, %v2966
      %2970 = vrot.lane.b32.xlu0 %v2963, 32
      %v2971 = vpop.permute.xlu0 %2970
      %v2973 = vmul.f32 %v2960, %v2971
      %2975 = vrot.lane.b32.xlu0 %v2973, 64
      %v2976 = vpop.permute.xlu0 %2975
      %v2978 = vadd.f32 %v2968, %v2976
      %v2979 = vmul.f32 %v2960, %v2963
      %2981 = vrot.lane.b32.xlu0 %v2979, 32
      %v2982 = vpop.permute.xlu0 %2981
      %v2984 = vadd.f32 %v2978, %v2982
      %v2985 = vtanh.pop %v2984
      %v2986 = vmul.f32 %v2961, %v2985
      %2988 = vrot.lane.b32.xlu0 %v2984, 32
      %v2989 = vpop.permute.xlu0 %2988
      %v2991 = vsel %vm162, %v2986, %v2989
      %s2992 = sld [smem:[#allocation8 + $0x4d]]
      %s2993 = scalar_lea.vmem [#allocation2], %s2992
      %2994 = vst.msk [vmem:[%s2993] sm:$0x1] %vm2781, %v2991
      %s2995 = sld [smem:[#allocation8 + $0x53]]
      %s2996 = scalar_lea.vmem [#allocation2], %s2995
      %vm2997 = vcmask 517121
      %2998 = vst.msk [vmem:[%s2996 - $0x1] sm:$0x2] %vm2997, %v2991
    $region65: #{tpu_custom_call.1} parent=1 // pred_fallthru
      _
    %v2999 = vld [vmem:[#allocation2] sm:$0xff]
    %v3000 = vld [vmem:[#allocation2 + $0x8] sm:$0xff]
    %v3001 = vld [vmem:[#allocation2 + $0x10] sm:$0xff]
    %v3002 = vld [vmem:[%s5] sm:$0xff]
    %v3003 = vld [vmem:[%s5 + $0x8] sm:$0xff]
    %v3004 = vld [vmem:[%s5 + $0x10] sm:$0xff]
    %v3005 = vld [vmem:[%s5 + $0x18] sm:$0xff]
    %v3006 = vld [vmem:[%s6] sm:$0x1]
    %v3008 = vlaneseq
    %v3009 = vshrl.u32 %v3008, 7
    %v3010 = vsub.s32 0, %v3009
    %v3011 = vrot.slane %v3006, %v3010
    %v3014 = vsel %vm162, %v2999, 0
    %v3017 = vsel %vm162, %v3000, 0
    %v3020 = vsel %vm162, %v3001, 0
    %3022 = vmatprep.subr.mxu0 0.0
    %3023 = vmatpush1.msra.mxu0 %v3002
    %3024 = vmatprep.subr.mxu0 0.0
    %3025 = vmatpush1.msra.mxu0 %v3003
    %3026 = vmatprep.subr.mxu0 0.0
    %3027 = vmatpush1.msra.mxu0 %v3004
    %3028 = vmatprep.subr.mxu0 0.0
    %3029 = vmatpush1.msra.mxu0 %v3005
    %3030 = vmatprep.subr.mxu0 0.0
    %3031 = vmatpush1.msra.mxu0 0.0
    %3032 = vmatprep.subr.mxu0 0.0
    %3033 = vmatpush1.msra.mxu0 0.0
    %3034 = vmatprep.subr.mxu0 0.0
    %3035 = vmatpush1.msra.mxu0 0.0
    %3036 = vmatprep.subr.mxu0 0.0
    %3037 = vmatpush1.msra.mxu0 0.0
    %3038 = vmatprep.subr.mxu0 0.0
    %3039 = vmatpush1.msra.mxu0 0.0
    %3040 = vmatprep.subr.mxu0 0.0
    %3041 = vmatpush1.msra.mxu0 0.0
    %3042 = vmatprep.subr.mxu0 0.0
    %3043 = vmatpush1.msra.mxu0 0.0
    %3044 = vmatprep.subr.mxu0 0.0
    %3045 = vmatpush1.msra.mxu0 0.0
    %3046 = vmatprep.subr.mxu0 0.0
    %3047 = vmatpush1.msra.mxu0 0.0
    %3048 = vmatprep.subr.mxu0 0.0
    %3049 = vmatpush1.msra.mxu0 0.0
    %3050 = vmatprep.subr.mxu0 0.0
    %3051 = vmatpush1.msra.mxu0 0.0
    %3052 = vmatprep.subr.mxu0 0.0
    %3053 = vmatpush1.msra.mxu0 0.0
    %3054 = vmatprep.subr.mxu0 0.0
    %3055 = vmatpush1.msra.mxu0 0.0
    %3056 = vmatprep.subr.mxu0 0.0
    %3057 = vmatpush1.msra.mxu0 0.0
    %3058 = vmatprep.subr.mxu0 0.0
    %3059 = vmatpush1.msra.mxu0 0.0
    %3060 = vmatprep.subr.mxu0 0.0
    %3061 = vmatpush1.msra.mxu0 0.0
    %3062 = vmatprep.subr.mxu0 0.0
    %3063 = vmatpush1.msra.mxu0 0.0
    %3064 = vmatprep.subr.mxu0 0.0
    %3065 = vmatpush1.msra.mxu0 0.0
    %3066 = vmatprep.subr.mxu0 0.0
    %3067 = vmatpush1.msra.mxu0 0.0
    %3068 = vmatprep.subr.mxu0 0.0
    %3069 = vmatpush1.msra.mxu0 0.0
    %3070 = vmatprep.subr.mxu0 0.0
    %3071 = vmatpush1.msra.mxu0 0.0
    %3072 = vmatprep.subr.mxu0 0.0
    %3073 = vmatpush1.msra.mxu0 0.0
    %3074 = vmatprep.subr.mxu0 0.0
    %3075 = vmatpush1.msra.mxu0 0.0
    %3076 = vmatprep.subr.mxu0 0.0
    %3077 = vmatpush1.msra.mxu0 0.0
    %3078 = vmatprep.subr.mxu0 0.0
    %3079 = vmatpush1.msra.mxu0 0.0
    %3080 = vmatprep.subr.mxu0 0.0
    %3081 = vmatpush1.msra.mxu0 0.0
    %3082 = vmatprep.subr.mxu0 0.0
    %3083 = vmatpush1.msra.mxu0 0.0
    %3084 = vmatprep.subr.mxu0 0.0
    %3085 = vmatpush1.msra.mxu0 0.0
    %3086 = vmatprep.mubr.f32.mxu0 0.0
    %3087 = vmatmul.mubr.f32.gmra.mrb[0].mxu0 %v3014
    %v3088 = vpop.f32.mrb[0].mxu0
    %v3089 = vadd.f32 %v3011, %v3088
    %v3090 = vpop.f32.mrb[0].mxu0
    %3091 = vmatprep.mubr.f32.mxu0 0.0
    %3092 = vmatmul.mubr.f32.gmra.mrb[0].mxu0 %v3017
    %v3093 = vpop.f32.mrb[0].mxu0
    %v3094 = vadd.f32 %v3011, %v3093
    %v3095 = vpop.f32.mrb[0].mxu0
    %3096 = vmatprep.mubr.f32.mxu0 0.0
    %3097 = vmatmul.mubr.f32.gmra.mrb[0].mxu0 %v3020
    %v3098 = vpop.f32.mrb[0].mxu0
    %v3099 = vadd.f32 %v3011, %v3098
    %v3100 = vpop.f32.mrb[0].mxu0
    %3101 = vdwg.mxu0
    %3102 = vmax.xlane.f32.xlu0 %v3089
    %v3103 = vpop.xlane.xlu0 %3102
    %3104 = vmax.xlane.f32.xlu0 %v3094
    %v3105 = vpop.xlane.xlu0 %3104
    %3106 = vmax.xlane.f32.xlu0 %v3099
    %v3107 = vpop.xlane.xlu0 %3106
    %v3108 = vsub.f32 %v3089, %v3103
    %v3109 = vsub.f32 %v3094, %v3105
    %v3110 = vsub.f32 %v3099, %v3107
    %v3111 = vmul.f32 %v3108, 1.442695
    %v3112 = vpow.pop %v3111
    %v3113 = vmul.f32 %v3109, 1.442695
    %v3114 = vpow.pop %v3113
    %v3115 = vmul.f32 %v3110, 1.442695
    %v3116 = vpow.pop %v3115
    %3117 = vadd.xlane.f32.xlu0 %v3112
    %v3118 = vpop.xlane.xlu0 %3117
    %3119 = vadd.xlane.f32.xlu0 %v3114
    %v3120 = vpop.xlane.xlu0 %3119
    %3121 = vadd.xlane.f32.xlu0 %v3116
    %v3122 = vpop.xlane.xlu0 %3121
    %v3123 = vlog2.pop %v3118
    %v3124 = vmul.f32 %v3123, 0.6931472
    %v3125 = vlog2.pop %v3120
    %v3126 = vmul.f32 %v3125, 0.6931472
    %v3127 = vlog2.pop %v3122
    %v3128 = vmul.f32 %v3127, 0.6931472
    %v3129 = vadd.f32 %v3124, %v3103
    %v3130 = vadd.f32 %v3126, %v3105
    %v3131 = vadd.f32 %v3128, %v3107
    %v3132 = vsub.f32 %v3089, %v3129
    %v3133 = vsub.f32 %v3094, %v3130
    %v3134 = vsub.f32 %v3099, %v3131
    %3135 = vst [vmem:[#allocation10] sm:$0xff] %v3132
    %3136 = vst [vmem:[#allocation10 + $0x8] sm:$0xff] %v3133
    %3137 = vst [vmem:[#allocation10 + $0x10] sm:$0xff] %v3134
    // Predicated region
    $region66: #{tpu_custom_call.1} parent=1 // pred_check
      _
    $region67: #{tpu_custom_call.1} parent=1 // pred_check_branch
      %3139 = sbr.rel (0) target = $region69
    $region68: #{tpu_custom_call.1} parent=1 // pred_region
      %s3141 = ssub.s32 384, 384
      %3142 = vsyncadd [#allocation11], %s3141
      %s3143 = sshll.u32 [#allocation10], 4
      %s3144 = int_to_ptr.vmem [resolvable:$true] %s3143
      %3149 = dma.vmem_to_hbm [thread:$0]  %s3144, 384, %s11, [#allocation11], 128, 128, 8
    $region69: #{tpu_custom_call.1} parent=1 // pred_fallthru
      _
    // Predicated region
    $region70: #{tpu_custom_call.1} parent=1 // pred_check
      _
    $region71: #{tpu_custom_call.1} parent=1 // pred_check_branch
      %3151 = sbr.rel (0) target = $region73
    $region72: #{tpu_custom_call.1} parent=1 // pred_region
      %3152 = dma.done [#allocation11], 384
    $region73: #{tpu_custom_call.1} parent=1 // pred_fallthru
      _
    %3153 = vsyncpa [#allocation11], 1

</llo_original>
